<compile_context>
chip_gen: v5e
topology: v5e:2x2
jax: 0.10.0
libtpu: 0.0.40
codegen_flags: <defaults>
</compile_context>

<pallas_src>
import numpy as np
import jax
import jax.numpy as jnp
from jax.experimental import pallas as pl
from jax.experimental.pallas import tpu as pltpu


H1, H2, OUT = 512, 256, 1
OUT_PAD = 128  # lane-dense output block width (avoids masked partial stores)


def _round_up(n, m):
    return ((n + m - 1) // m) * m


def disc_mlp_kernel(x_ref, w1_ref, b1_ref, w2_ref, b2_ref, w3_ref, b3_ref, o_ref):
    """Fused 3-layer MLP on one batch tile. f32 accumulation throughout."""
    # In-kernel cast to the (bf16) weight dtype -- x arrives straight from HBM
    # as f32, so its only HBM traffic is this single read.
    x = x_ref[...].astype(w1_ref.dtype)

    h1 = jnp.dot(x, w1_ref[...], preferred_element_type=jnp.float32) + b1_ref[...]
    h1 = jnp.maximum(h1, 0.2 * h1)                      # LeakyReLU(0.2)

    h2 = jnp.dot(h1.astype(w2_ref.dtype), w2_ref[...],
                 preferred_element_type=jnp.float32) + b2_ref[...]
    h2 = jnp.maximum(h2, 0.2 * h2)                      # LeakyReLU(0.2)

    o = jnp.dot(h2.astype(w3_ref.dtype), w3_ref[...],
                preferred_element_type=jnp.float32) + b3_ref[...]
    o_ref[...] = o.astype(o_ref.dtype)


def prepare_params(params, weight_dtype=jnp.bfloat16):
    """One-time packing of (w1,b1,w2,b2,w3,b3) for the kernel.

    - weights stored (in_features, out_features), cast to `weight_dtype`
      (bf16 default; pass jnp.float32 for full precision)
    - w3 / b3 zero-padded to a 128-wide (lane-dense) output -> mathematically inert
    - biases kept as f32 (1, out) rows
    Call ONCE at init; do NOT rebuild per forward call.
    """
    w1, b1, w2, b2, w3, b3 = params
    w3_p = jnp.zeros((H2, OUT_PAD), jnp.float32).at[:, :OUT].set(w3)
    b3_p = jnp.zeros((1, OUT_PAD), jnp.float32).at[:, :OUT].set(b3.reshape(1, OUT))
    return dict(
        w1=w1.astype(weight_dtype),
        b1=b1.reshape(1, H1).astype(jnp.float32),
        w2=w2.astype(weight_dtype),
        b2=b2.reshape(1, H2).astype(jnp.float32),
        w3=w3_p.astype(weight_dtype),
        b3=b3_p,
    )


def discriminator_forward(img, prep, *, block_rows=1024, vmem_limit_bytes=40 << 20):
    """img: (B, C, H, W) float32. Returns validity of shape (B, 1) in f32.

    Defaults (block_rows=1024, 40 MiB) are safe on v5e/v6e/v7x; on v5e/v6e
    (128 MiB VMEM) block_rows=2048 with vmem_limit_bytes≈56<<20 is a bit faster.
    """
    w1, b1, w2, b2, w3, b3 = (prep["w1"], prep["b1"], prep["w2"],
                              prep["b2"], prep["w3"], prep["b3"])
    B = img.shape[0]
    D = w1.shape[0]

    # Flatten exactly like PyTorch's img.view(B, -1) (NCHW row-major).
    # NO dtype cast and NO padding here: both would add a full HBM pass.
    x = img.reshape(B, D)

    # Batch tile: multiple of 16 (bf16 sublane packing); sized so the grid has
    # >= 2 steps whenever B allows (both v7x TensorCores get work); capped at
    # block_rows. Full-extent last dim (D) is a legal block shape.
    tm = min(block_rows, _round_up(pl.cdiv(B, 2), 16))
    grid = (pl.cdiv(B, tm),)

    # VMEM-resident, single-buffered weights/biases (block index never changes).
    resident = lambda shape: pl.BlockSpec(shape, lambda i: (0, 0),
                                          pipeline_mode=pl.Buffered(1))

    out = pl.pallas_call(
        disc_mlp_kernel,
        out_shape=jax.ShapeDtypeStruct((B, OUT_PAD), jnp.bfloat16),
        grid=grid,
        in_specs=[
            pl.BlockSpec((tm, D), lambda i: (i, 0)),  # x: pipelined batch tiles
            resident((D, H1)),                        # w1
            resident((1, H1)),                        # b1
            resident((H1, H2)),                       # w2
            resident((1, H2)),                        # b2
            resident((H2, OUT_PAD)),                  # w3 (zero-padded cols)
            resident((1, OUT_PAD)),                   # b3 (zero-padded cols)
        ],
        out_specs=pl.BlockSpec((tm, OUT_PAD), lambda i: (i, 0)),
        compiler_params=pltpu.CompilerParams(
            dimension_semantics=("parallel",),
            vmem_limit_bytes=vmem_limit_bytes,
        ),
    )(x, w1, b1, w2, b2, w3, b3)

    # Drop the inert padded columns; return f32 logits like the torch module.
    return out[:, :OUT].astype(jnp.float32)


def init_params(key, in_dim, h1=H1, h2=H2, out=OUT):
    """PyTorch nn.Linear default init: U(-1/sqrt(fan_in), 1/sqrt(fan_in))."""
    ks = jax.random.split(key, 6)

    def lin(kw, kb, fan_in, fan_out):
        bound = 1.0 / np.sqrt(fan_in)
        w = jax.random.uniform(kw, (fan_in, fan_out), jnp.float32, -bound, bound)
        b = jax.random.uniform(kb, (fan_out,), jnp.float32, -bound, bound)
        return w, b

    w1, b1 = lin(ks[0], ks[1], in_dim, h1)
    w2, b2 = lin(ks[2], ks[3], h1, h2)
    w3, b3 = lin(ks[4], ks[5], h2, out)
    return (w1, b1, w2, b2, w3, b3)


if __name__ == "__main__":
    key = jax.random.PRNGKey(0)
    k_img, k_par = jax.random.split(key)

    # Module default img_shape=(3, 25, 25) -> flattened dim 1875; small batch.
    img_shape = (3, 25, 25)
    B = 16
    img = jax.random.normal(k_img, (B,) + img_shape, jnp.float32)

    params = init_params(k_par, int(np.prod(img_shape)))
    prep = prepare_params(params)            # one-time bf16 cast / padding

    validity = discriminator_forward(img, prep)
    jax.block_until_ready(validity)

    # Pure-JAX f32 reference of the original module math.
    w1, b1, w2, b2, w3, b3 = params
    xf = img.reshape(B, -1)
    r = xf @ w1 + b1
    r = jnp.where(r > 0, r, 0.2 * r)
    r = r @ w2 + b2
    r = jnp.where(r > 0, r, 0.2 * r)
    ref = r @ w3 + b3

    assert validity.shape == (B, 1)
    # Tolerance covers bf16 weight/activation streaming (accumulation is f32).
    np.testing.assert_allclose(np.asarray(validity), np.asarray(ref),
                               rtol=2e-2, atol=2e-2)

    print("KERNEL_OK")
</pallas_src>

<mosaic_0001>
module attributes {stable_mosaic.version = 11 : i64} {
  func.func @disc_mlp_kernel(%arg0: i32, %arg1: memref<16x1875xf32, #tpu.memory_space<vmem>>, %arg2: memref<1875x512xbf16, #tpu.memory_space<vmem>>, %arg3: memref<1x512xf32, #tpu.memory_space<vmem>>, %arg4: memref<512x256xbf16, #tpu.memory_space<vmem>>, %arg5: memref<1x256xf32, #tpu.memory_space<vmem>>, %arg6: memref<256x128xbf16, #tpu.memory_space<vmem>>, %arg7: memref<1x128xf32, #tpu.memory_space<vmem>>, %arg8: memref<16x128xbf16, #tpu.memory_space<vmem>>) attributes {dimension_semantics = [#tpu.dimension_semantics<parallel>], iteration_bounds = array<i64: 1>, scalar_prefetch = 0 : i64, scratch_operands = 0 : i64, tpu.core_type = #tpu.core_type<tc>, window_params = [{transform_indices = @transform_0, window_bounds = array<i64: 16, 1875>}, {pipeline_mode = #tpu.pipeline_mode<synchronous>, transform_indices = @transform_1, window_bounds = array<i64: 1875, 512>}, {pipeline_mode = #tpu.pipeline_mode<synchronous>, transform_indices = @transform_2, window_bounds = array<i64: 1, 512>}, {pipeline_mode = #tpu.pipeline_mode<synchronous>, transform_indices = @transform_3, window_bounds = array<i64: 512, 256>}, {pipeline_mode = #tpu.pipeline_mode<synchronous>, transform_indices = @transform_4, window_bounds = array<i64: 1, 256>}, {pipeline_mode = #tpu.pipeline_mode<synchronous>, transform_indices = @transform_5, window_bounds = array<i64: 256, 128>}, {pipeline_mode = #tpu.pipeline_mode<synchronous>, transform_indices = @transform_6, window_bounds = array<i64: 1, 128>}, {transform_indices = @transform_7, window_bounds = array<i64: 16, 128>}]} {
    %c0 = arith.constant 0 : index
    %c0_0 = arith.constant 0 : index
    %0 = vector.load %arg1[%c0, %c0_0] : memref<16x1875xf32, #tpu.memory_space<vmem>>, vector<16x1875xf32>
    %1 = arith.truncf %0 : vector<16x1875xf32> to vector<16x1875xbf16>
    %c0_1 = arith.constant 0 : index
    %c0_2 = arith.constant 0 : index
    %2 = vector.load %arg2[%c0_1, %c0_2] : memref<1875x512xbf16, #tpu.memory_space<vmem>>, vector<1875x512xbf16>
    %cst = arith.constant dense<0.000000e+00> : vector<16x512xf32>
    %3 = tpu.matmul %1, %2, %cst {dimension_numbers = #tpu.dot_dimension_numbers<[1], [0], [0], [1], [0, 0, 1, 1], [], []>} : vector<16x1875xbf16>, vector<1875x512xbf16>, vector<16x512xf32> -> vector<16x512xf32>
    %c0_3 = arith.constant 0 : index
    %c0_4 = arith.constant 0 : index
    %4 = vector.load %arg3[%c0_3, %c0_4] : memref<1x512xf32, #tpu.memory_space<vmem>>, vector<1x512xf32>
    %5 = vector.broadcast %4 : vector<1x512xf32> to vector<16x512xf32>
    %6 = arith.addf %3, %5 : vector<16x512xf32>
    %cst_5 = arith.constant 2.000000e-01 : f32
    %7 = vector.broadcast %cst_5 : f32 to vector<16x512xf32>
    %8 = arith.mulf %7, %6 : vector<16x512xf32>
    %9 = arith.maximumf %6, %8 : vector<16x512xf32>
    %10 = arith.truncf %9 : vector<16x512xf32> to vector<16x512xbf16>
    %c0_6 = arith.constant 0 : index
    %c0_7 = arith.constant 0 : index
    %11 = vector.load %arg4[%c0_6, %c0_7] : memref<512x256xbf16, #tpu.memory_space<vmem>>, vector<512x256xbf16>
    %cst_8 = arith.constant dense<0.000000e+00> : vector<16x256xf32>
    %12 = tpu.matmul %10, %11, %cst_8 {dimension_numbers = #tpu.dot_dimension_numbers<[1], [0], [0], [1], [0, 0, 1, 1], [], []>} : vector<16x512xbf16>, vector<512x256xbf16>, vector<16x256xf32> -> vector<16x256xf32>
    %c0_9 = arith.constant 0 : index
    %c0_10 = arith.constant 0 : index
    %13 = vector.load %arg5[%c0_9, %c0_10] : memref<1x256xf32, #tpu.memory_space<vmem>>, vector<1x256xf32>
    %14 = vector.broadcast %13 : vector<1x256xf32> to vector<16x256xf32>
    %15 = arith.addf %12, %14 : vector<16x256xf32>
    %cst_11 = arith.constant 2.000000e-01 : f32
    %16 = vector.broadcast %cst_11 : f32 to vector<16x256xf32>
    %17 = arith.mulf %16, %15 : vector<16x256xf32>
    %18 = arith.maximumf %15, %17 : vector<16x256xf32>
    %19 = arith.truncf %18 : vector<16x256xf32> to vector<16x256xbf16>
    %c0_12 = arith.constant 0 : index
    %c0_13 = arith.constant 0 : index
    %20 = vector.load %arg6[%c0_12, %c0_13] : memref<256x128xbf16, #tpu.memory_space<vmem>>, vector<256x128xbf16>
    %cst_14 = arith.constant dense<0.000000e+00> : vector<16x128xf32>
    %21 = tpu.matmul %19, %20, %cst_14 {dimension_numbers = #tpu.dot_dimension_numbers<[1], [0], [0], [1], [0, 0, 1, 1], [], []>} : vector<16x256xbf16>, vector<256x128xbf16>, vector<16x128xf32> -> vector<16x128xf32>
    %c0_15 = arith.constant 0 : index
    %c0_16 = arith.constant 0 : index
    %22 = vector.load %arg7[%c0_15, %c0_16] : memref<1x128xf32, #tpu.memory_space<vmem>>, vector<1x128xf32>
    %23 = vector.broadcast %22 : vector<1x128xf32> to vector<16x128xf32>
    %24 = arith.addf %21, %23 : vector<16x128xf32>
    %25 = arith.truncf %24 : vector<16x128xf32> to vector<16x128xbf16>
    %c0_17 = arith.constant 0 : index
    %c0_18 = arith.constant 0 : index
    %26 = vector.load %arg8[%c0_17, %c0_18] : memref<16x128xbf16, #tpu.memory_space<vmem>>, vector<16x128xbf16>
    tpu.vector_store %arg8[%c0_17, %c0_18], %25 {strides = array<i32>} : memref<16x128xbf16, #tpu.memory_space<vmem>>, vector<16x128xbf16>,
    return
  }
  func.func @transform_0(%arg0: i32) -> (i32, i32) {
    %c0_i32 = arith.constant 0 : i32
    %c0_i32_0 = arith.constant 0 : i32
    return %arg0, %c0_i32 : i32, i32
  }
  func.func @transform_1(%arg0: i32) -> (i32, i32) {
    %c0_i32 = arith.constant 0 : i32
    %c0_i32_0 = arith.constant 0 : i32
    %c0_i32_1 = arith.constant 0 : i32
    return %c0_i32, %c0_i32_0 : i32, i32
  }
  func.func @transform_2(%arg0: i32) -> (i32, i32) {
    %c0_i32 = arith.constant 0 : i32
    %c0_i32_0 = arith.constant 0 : i32
    %c0_i32_1 = arith.constant 0 : i32
    return %c0_i32, %c0_i32_0 : i32, i32
  }
  func.func @transform_3(%arg0: i32) -> (i32, i32) {
    %c0_i32 = arith.constant 0 : i32
    %c0_i32_0 = arith.constant 0 : i32
    %c0_i32_1 = arith.constant 0 : i32
    return %c0_i32, %c0_i32_0 : i32, i32
  }
  func.func @transform_4(%arg0: i32) -> (i32, i32) {
    %c0_i32 = arith.constant 0 : i32
    %c0_i32_0 = arith.constant 0 : i32
    %c0_i32_1 = arith.constant 0 : i32
    return %c0_i32, %c0_i32_0 : i32, i32
  }
  func.func @transform_5(%arg0: i32) -> (i32, i32) {
    %c0_i32 = arith.constant 0 : i32
    %c0_i32_0 = arith.constant 0 : i32
    %c0_i32_1 = arith.constant 0 : i32
    return %c0_i32, %c0_i32_0 : i32, i32
  }
  func.func @transform_6(%arg0: i32) -> (i32, i32) {
    %c0_i32 = arith.constant 0 : i32
    %c0_i32_0 = arith.constant 0 : i32
    %c0_i32_1 = arith.constant 0 : i32
    return %c0_i32, %c0_i32_0 : i32, i32
  }
  func.func @transform_7(%arg0: i32) -> (i32, i32) {
    %c0_i32 = arith.constant 0 : i32
    %c0_i32_0 = arith.constant 0 : i32
    return %arg0, %c0_i32 : i32, i32
  }
}

</mosaic_0001>

<llo_original>
// kernel: tpu_custom_call.1
$region0: #{tpu_custom_call.1}
  #allocation0 [shape = 'u32[]', space=smem, size = 0x4, offset = 0x4, fixed_abs, tag = 'smem constant byte address 0x4 - core index']
  #allocation1 [shape = 'u32[72,128]{1,0:T(1,128)}', space=vmem, size = 0x9000, scoped, tag = 'internal scratch']
  %s0 = inlined_call_operand.hbm [shape: f32[16,1875], index: 0, kind: input, shape index: {}]
  %s1 = inlined_call_operand.hbm [shape: bf16[1875,512], index: 1, kind: input, shape index: {}]
  %s2 = inlined_call_operand.hbm [shape: f32[1,512], index: 2, kind: input, shape index: {}]
  %s3 = inlined_call_operand.hbm [shape: bf16[512,256], index: 3, kind: input, shape index: {}]
  %s4 = inlined_call_operand.hbm [shape: f32[1,256], index: 4, kind: input, shape index: {}]
  %s5 = inlined_call_operand.hbm [shape: bf16[256,128], index: 5, kind: input, shape index: {}]
  %s6 = inlined_call_operand.hbm [shape: f32[1,128], index: 6, kind: input, shape index: {}]
  %s7 = inlined_call_operand.hbm [shape: bf16[16,128], index: 7, kind: output, shape index: {}]
  %s8 = sld [smem:[#allocation0]]
  $region66: #{tpu_custom_call.1} parent=0
    _
  %s10 = ssub.s32 1, %s8
  %s11 = scalar_select 0, %s10, %s8
  $region1: #{tpu_custom_call.1} parent=0
    #allocation2 [shape = 'u8[122880]{0}', space=vmem, size = 0x1e000, scoped, tag = 'input window, operand 0, single buffered']
    #allocation3 [shape = 's32[1]{0}', space=sflag, size = 0x4, scoped, tag = 'scoped memory for tpu_custom_call.1']
    #allocation4 [shape = 's32[1]{0}', space=sflag, size = 0x4, scoped, tag = 'scoped memory for tpu_custom_call.1']
    #allocation5 [shape = 'u8[1925120]{0}', space=vmem, size = 0x1d6000, scoped, tag = 'input window, operand 1, single buffered']
    #allocation6 [shape = 's32[1]{0}', space=sflag, size = 0x4, scoped, tag = 'scoped memory for tpu_custom_call.1']
    #allocation7 [shape = 'u8[2048]{0}', space=vmem, size = 0x800, scoped, tag = 'input window, operand 2, single buffered']
    #allocation8 [shape = 'u8[262144]{0}', space=vmem, size = 0x40000, scoped, tag = 'input window, operand 3, single buffered']
    #allocation9 [shape = 's32[1]{0}', space=sflag, size = 0x4, scoped, tag = 'scoped memory for tpu_custom_call.1']
    #allocation10 [shape = 'u8[1024]{0}', space=vmem, size = 0x400, scoped, tag = 'input window, operand 4, single buffered']
    #allocation11 [shape = 'u8[65536]{0}', space=vmem, size = 0x10000, scoped, tag = 'input window, operand 5, single buffered']
    #allocation12 [shape = 's32[1]{0}', space=sflag, size = 0x4, scoped, tag = 'scoped memory for tpu_custom_call.1']
    #allocation13 [shape = 'u8[512]{0}', space=vmem, size = 0x400, scoped, tag = 'input window, operand 6, single buffered']
    #allocation14 [shape = 'u8[4096]{0}', space=vmem, size = 0x1000, scoped, tag = 'output window, operand 0, single buffered']
    %12 = vsyncpa [#allocation3], 0
    %13 = vsyncpa [#allocation6], 0
    %14 = vsyncpa [#allocation9], 0
    %15 = vsyncpa [#allocation12], 0
    %16 = vsyncpa [#allocation4], 0
    // Predicated region
    $region2: #{tpu_custom_call.1} parent=1 // pred_check
      _
    $region3: #{tpu_custom_call.1} parent=1 // pred_check_branch
      %18 = sbr.rel (0) target = $region5
    $region4: #{tpu_custom_call.1} parent=1 // pred_region
      %20 = vsyncadd [#allocation3], 0
      %s21 = sshll.u32 %s0, 4
      %s22 = int_to_ptr.hbm [resolvable:$true] %s21
      %s23 = sshll.u32 [#allocation2], 4
      %s24 = int_to_ptr.vmem [resolvable:$true] %s23
      %29 = dma.hbm_to_vmem [thread:$0]  %s22, 3840, %s24, [#allocation3], 1920, 1920, 120
    $region5: #{tpu_custom_call.1} parent=1 // pred_fallthru
      _
    // Predicated region
    $region6: #{tpu_custom_call.1} parent=1 // pred_check
      _
    $region7: #{tpu_custom_call.1} parent=1 // pred_check_branch
      %31 = sbr.rel (0) target = $region9
    $region8: #{tpu_custom_call.1} parent=1 // pred_region
      %33 = vsyncadd [#allocation6], 0
      %s34 = sshll.u32 %s1, 4
      %s35 = int_to_ptr.hbm [resolvable:$true] %s34
      %s36 = sshll.u32 [#allocation5], 4
      %s37 = int_to_ptr.vmem [resolvable:$true] %s36
      %42 = dma.hbm_to_vmem [thread:$0]  %s35, 60160, %s37, [#allocation6], 256, 256, 16
    $region9: #{tpu_custom_call.1} parent=1 // pred_fallthru
      _
    // Predicated region
    $region10: #{tpu_custom_call.1} parent=1 // pred_check
      _
    $region11: #{tpu_custom_call.1} parent=1 // pred_check_branch
      %44 = sbr.rel (0) target = $region13
    $region12: #{tpu_custom_call.1} parent=1 // pred_region
      %46 = vsyncadd [#allocation6], 0
      %s48 = sshll.u32 %s2, 4
      %s49 = int_to_ptr.hbm [resolvable:$true] %s48
      %s50 = sshll.u32 [#allocation7], 4
      %s51 = int_to_ptr.vmem [resolvable:$true] %s50
      %53 = dma.hbm_to_vmem [thread:$0]  %s49, 64, %s51, [#allocation6]
    $region13: #{tpu_custom_call.1} parent=1 // pred_fallthru
      _
    // Predicated region
    $region14: #{tpu_custom_call.1} parent=1 // pred_check
      _
    $region15: #{tpu_custom_call.1} parent=1 // pred_check_branch
      %55 = sbr.rel (0) target = $region17
    $region16: #{tpu_custom_call.1} parent=1 // pred_region
      %57 = vsyncadd [#allocation9], 0
      %s58 = sshll.u32 %s3, 4
      %s59 = int_to_ptr.hbm [resolvable:$true] %s58
      %s60 = sshll.u32 [#allocation8], 4
      %s61 = int_to_ptr.vmem [resolvable:$true] %s60
      %66 = dma.hbm_to_vmem [thread:$0]  %s59, 8192, %s61, [#allocation9], 128, 128, 8
    $region17: #{tpu_custom_call.1} parent=1 // pred_fallthru
      _
    // Predicated region
    $region18: #{tpu_custom_call.1} parent=1 // pred_check
      _
    $region19: #{tpu_custom_call.1} parent=1 // pred_check_branch
      %68 = sbr.rel (0) target = $region21
    $region20: #{tpu_custom_call.1} parent=1 // pred_region
      %70 = vsyncadd [#allocation9], 0
      %s72 = sshll.u32 %s4, 4
      %s73 = int_to_ptr.hbm [resolvable:$true] %s72
      %s74 = sshll.u32 [#allocation10], 4
      %s75 = int_to_ptr.vmem [resolvable:$true] %s74
      %77 = dma.hbm_to_vmem [thread:$0]  %s73, 32, %s75, [#allocation9]
    $region21: #{tpu_custom_call.1} parent=1 // pred_fallthru
      _
    // Predicated region
    $region22: #{tpu_custom_call.1} parent=1 // pred_check
      _
    $region23: #{tpu_custom_call.1} parent=1 // pred_check_branch
      %79 = sbr.rel (0) target = $region25
    $region24: #{tpu_custom_call.1} parent=1 // pred_region
      %81 = vsyncadd [#allocation12], 0
      %s82 = sshll.u32 %s5, 4
      %s83 = int_to_ptr.hbm [resolvable:$true] %s82
      %s84 = sshll.u32 [#allocation11], 4
      %s85 = int_to_ptr.vmem [resolvable:$true] %s84
      %90 = dma.hbm_to_vmem [thread:$0]  %s83, 2048, %s85, [#allocation12], 64, 64, 4
    $region25: #{tpu_custom_call.1} parent=1 // pred_fallthru
      _
    // Predicated region
    $region26: #{tpu_custom_call.1} parent=1 // pred_check
      _
    $region27: #{tpu_custom_call.1} parent=1 // pred_check_branch
      %92 = sbr.rel (0) target = $region29
    $region28: #{tpu_custom_call.1} parent=1 // pred_region
      %94 = vsyncadd [#allocation12], 0
      %s96 = sshll.u32 %s6, 4
      %s97 = int_to_ptr.hbm [resolvable:$true] %s96
      %s98 = sshll.u32 [#allocation13], 4
      %s99 = int_to_ptr.vmem [resolvable:$true] %s98
      %101 = dma.hbm_to_vmem [thread:$0]  %s97, 16, %s99, [#allocation12]
    $region29: #{tpu_custom_call.1} parent=1 // pred_fallthru
      _
    // Predicated region
    $region30: #{tpu_custom_call.1} parent=1 // pred_check
      _
    $region31: #{tpu_custom_call.1} parent=1 // pred_check_branch
      %103 = sbr.rel (0) target = $region33
    $region32: #{tpu_custom_call.1} parent=1 // pred_region
      %105 = dma.done [#allocation3], 3840
    $region33: #{tpu_custom_call.1} parent=1 // pred_fallthru
      _
    // Predicated region
    $region34: #{tpu_custom_call.1} parent=1 // pred_check
      _
    $region35: #{tpu_custom_call.1} parent=1 // pred_check_branch
      %107 = sbr.rel (0) target = $region37
    $region36: #{tpu_custom_call.1} parent=1 // pred_region
      %109 = dma.done [#allocation6], 60160
    $region37: #{tpu_custom_call.1} parent=1 // pred_fallthru
      _
    // Predicated region
    $region38: #{tpu_custom_call.1} parent=1 // pred_check
      _
    $region39: #{tpu_custom_call.1} parent=1 // pred_check_branch
      %111 = sbr.rel (0) target = $region41
    $region40: #{tpu_custom_call.1} parent=1 // pred_region
      %113 = dma.done [#allocation6], 64
    $region41: #{tpu_custom_call.1} parent=1 // pred_fallthru
      _
    // Predicated region
    $region42: #{tpu_custom_call.1} parent=1 // pred_check
      _
    $region43: #{tpu_custom_call.1} parent=1 // pred_check_branch
      %115 = sbr.rel (0) target = $region45
    $region44: #{tpu_custom_call.1} parent=1 // pred_region
      %117 = dma.done [#allocation9], 8192
    $region45: #{tpu_custom_call.1} parent=1 // pred_fallthru
      _
    // Predicated region
    $region46: #{tpu_custom_call.1} parent=1 // pred_check
      _
    $region47: #{tpu_custom_call.1} parent=1 // pred_check_branch
      %119 = sbr.rel (0) target = $region49
    $region48: #{tpu_custom_call.1} parent=1 // pred_region
      %121 = dma.done [#allocation9], 32
    $region49: #{tpu_custom_call.1} parent=1 // pred_fallthru
      _
    // Predicated region
    $region50: #{tpu_custom_call.1} parent=1 // pred_check
      _
    $region51: #{tpu_custom_call.1} parent=1 // pred_check_branch
      %123 = sbr.rel (0) target = $region53
    $region52: #{tpu_custom_call.1} parent=1 // pred_region
      %125 = dma.done [#allocation12], 2048
    $region53: #{tpu_custom_call.1} parent=1 // pred_fallthru
      _
    // Predicated region
    $region54: #{tpu_custom_call.1} parent=1 // pred_check
      _
    $region55: #{tpu_custom_call.1} parent=1 // pred_check_branch
      %127 = sbr.rel (0) target = $region57
    $region56: #{tpu_custom_call.1} parent=1 // pred_region
      %129 = dma.done [#allocation12], 16
    $region57: #{tpu_custom_call.1} parent=1 // pred_fallthru
      _
    %v131 = vld [vmem:[#allocation2] sm:$0xff]
    %v132 = vld [vmem:[#allocation2 + $0x8] sm:$0xff]
    %v133 = vld [vmem:[#allocation2 + $0x10] sm:$0xff]
    %v134 = vld [vmem:[#allocation2 + $0x18] sm:$0xff]
    %v135 = vld [vmem:[#allocation2 + $0x20] sm:$0xff]
    %v136 = vld [vmem:[#allocation2 + $0x28] sm:$0xff]
    %v137 = vld [vmem:[#allocation2 + $0x30] sm:$0xff]
    %v138 = vld [vmem:[#allocation2 + $0x38] sm:$0xff]
    %v139 = vld [vmem:[#allocation2 + $0x40] sm:$0xff]
    %v140 = vld [vmem:[#allocation2 + $0x48] sm:$0xff]
    %v141 = vld [vmem:[#allocation2 + $0x50] sm:$0xff]
    %v142 = vld [vmem:[#allocation2 + $0x58] sm:$0xff]
    %v143 = vld [vmem:[#allocation2 + $0x60] sm:$0xff]
    %v144 = vld [vmem:[#allocation2 + $0x68] sm:$0xff]
    %v145 = vld [vmem:[#allocation2 + $0x70] sm:$0xff]
    %v146 = vld [vmem:[#allocation2 + $0x78] sm:$0xff]
    %v147 = vld [vmem:[#allocation2 + $0x80] sm:$0xff]
    %v148 = vld [vmem:[#allocation2 + $0x88] sm:$0xff]
    %v149 = vld [vmem:[#allocation2 + $0x90] sm:$0xff]
    %v150 = vld [vmem:[#allocation2 + $0x98] sm:$0xff]
    %v151 = vld [vmem:[#allocation2 + $0xa0] sm:$0xff]
    %v152 = vld [vmem:[#allocation2 + $0xa8] sm:$0xff]
    %v153 = vld [vmem:[#allocation2 + $0xb0] sm:$0xff]
    %v154 = vld [vmem:[#allocation2 + $0xb8] sm:$0xff]
    %v155 = vld [vmem:[#allocation2 + $0xc0] sm:$0xff]
    %v156 = vld [vmem:[#allocation2 + $0xc8] sm:$0xff]
    %v157 = vld [vmem:[#allocation2 + $0xd0] sm:$0xff]
    %v158 = vld [vmem:[#allocation2 + $0xd8] sm:$0xff]
    %v159 = vld [vmem:[#allocation2 + $0xe0] sm:$0xff]
    %v160 = vld [vmem:[#allocation2 + $0xe8] sm:$0xff]
    %v161 = vpack.c.bf16 %v146, %v131
    %v162 = vpack.c.bf16 %v147, %v132
    %v163 = vpack.c.bf16 %v148, %v133
    %v164 = vpack.c.bf16 %v149, %v134
    %v165 = vpack.c.bf16 %v150, %v135
    %v166 = vpack.c.bf16 %v151, %v136
    %v167 = vpack.c.bf16 %v152, %v137
    %v168 = vpack.c.bf16 %v153, %v138
    %v169 = vpack.c.bf16 %v154, %v139
    %v170 = vpack.c.bf16 %v155, %v140
    %v171 = vpack.c.bf16 %v156, %v141
    %v172 = vpack.c.bf16 %v157, %v142
    %v173 = vpack.c.bf16 %v158, %v143
    %v174 = vpack.c.bf16 %v159, %v144
    %v175 = vpack.c.bf16 %v160, %v145
    %v176 = vld [vmem:[#allocation5] sm:$0xff]
    %v177 = vld [vmem:[#allocation5 + $0x8] sm:$0xff]
    %v178 = vld [vmem:[#allocation5 + $0x10] sm:$0xff]
    %v179 = vld [vmem:[#allocation5 + $0x18] sm:$0xff]
    %v180 = vld [vmem:[#allocation5 + $0x20] sm:$0xff]
    %v181 = vld [vmem:[#allocation5 + $0x28] sm:$0xff]
    %v182 = vld [vmem:[#allocation5 + $0x30] sm:$0xff]
    %v183 = vld [vmem:[#allocation5 + $0x38] sm:$0xff]
    %v184 = vld [vmem:[#allocation5 + $0x40] sm:$0xff]
    %v185 = vld [vmem:[#allocation5 + $0x48] sm:$0xff]
    %v186 = vld [vmem:[#allocation5 + $0x50] sm:$0xff]
    %v187 = vld [vmem:[#allocation5 + $0x58] sm:$0xff]
    %v188 = vld [vmem:[#allocation5 + $0x60] sm:$0xff]
    %v189 = vld [vmem:[#allocation5 + $0x68] sm:$0xff]
    %v190 = vld [vmem:[#allocation5 + $0x70] sm:$0xff]
    %v191 = vld [vmem:[#allocation5 + $0x78] sm:$0xff]
    %v192 = vld [vmem:[#allocation5 + $0x80] sm:$0xff]
    %v193 = vld [vmem:[#allocation5 + $0x88] sm:$0xff]
    %v194 = vld [vmem:[#allocation5 + $0x90] sm:$0xff]
    %v195 = vld [vmem:[#allocation5 + $0x98] sm:$0xff]
    %v196 = vld [vmem:[#allocation5 + $0xa0] sm:$0xff]
    %v197 = vld [vmem:[#allocation5 + $0xa8] sm:$0xff]
    %v198 = vld [vmem:[#allocation5 + $0xb0] sm:$0xff]
    %v199 = vld [vmem:[#allocation5 + $0xb8] sm:$0xff]
    %v200 = vld [vmem:[#allocation5 + $0xc0] sm:$0xff]
    %v201 = vld [vmem:[#allocation5 + $0xc8] sm:$0xff]
    %v202 = vld [vmem:[#allocation5 + $0xd0] sm:$0xff]
    %v203 = vld [vmem:[#allocation5 + $0xd8] sm:$0xff]
    %v204 = vld [vmem:[#allocation5 + $0xe0] sm:$0xff]
    %v205 = vld [vmem:[#allocation5 + $0xe8] sm:$0xff]
    %v206 = vld [vmem:[#allocation5 + $0xf0] sm:$0xff]
    %v207 = vld [vmem:[#allocation5 + $0xf8] sm:$0xff]
    %v208 = vld [vmem:[#allocation5 + $0x100] sm:$0xff]
    %v209 = vld [vmem:[#allocation5 + $0x108] sm:$0xff]
    %v210 = vld [vmem:[#allocation5 + $0x110] sm:$0xff]
    %v211 = vld [vmem:[#allocation5 + $0x118] sm:$0xff]
    %v212 = vld [vmem:[#allocation5 + $0x120] sm:$0xff]
    %v213 = vld [vmem:[#allocation5 + $0x128] sm:$0xff]
    %v214 = vld [vmem:[#allocation5 + $0x130] sm:$0xff]
    %v215 = vld [vmem:[#allocation5 + $0x138] sm:$0xff]
    %v216 = vld [vmem:[#allocation5 + $0x140] sm:$0xff]
    %v217 = vld [vmem:[#allocation5 + $0x148] sm:$0xff]
    %v218 = vld [vmem:[#allocation5 + $0x150] sm:$0xff]
    %v219 = vld [vmem:[#allocation5 + $0x158] sm:$0xff]
    %v220 = vld [vmem:[#allocation5 + $0x160] sm:$0xff]
    %v221 = vld [vmem:[#allocation5 + $0x168] sm:$0xff]
    %v222 = vld [vmem:[#allocation5 + $0x170] sm:$0xff]
    %v223 = vld [vmem:[#allocation5 + $0x178] sm:$0xff]
    %v224 = vld [vmem:[#allocation5 + $0x180] sm:$0xff]
    %v225 = vld [vmem:[#allocation5 + $0x188] sm:$0xff]
    %v226 = vld [vmem:[#allocation5 + $0x190] sm:$0xff]
    %v227 = vld [vmem:[#allocation5 + $0x198] sm:$0xff]
    %v228 = vld [vmem:[#allocation5 + $0x1a0] sm:$0xff]
    %v229 = vld [vmem:[#allocation5 + $0x1a8] sm:$0xff]
    %v230 = vld [vmem:[#allocation5 + $0x1b0] sm:$0xff]
    %v231 = vld [vmem:[#allocation5 + $0x1b8] sm:$0xff]
    %v232 = vld [vmem:[#allocation5 + $0x1c0] sm:$0xff]
    %v233 = vld [vmem:[#allocation5 + $0x1c8] sm:$0xff]
    %v234 = vld [vmem:[#allocation5 + $0x1d0] sm:$0xff]
    %v235 = vld [vmem:[#allocation5 + $0x1d8] sm:$0xff]
    %v236 = vld [vmem:[#allocation5 + $0x1e0] sm:$0xff]
    %v237 = vld [vmem:[#allocation5 + $0x1e8] sm:$0xff]
    %v238 = vld [vmem:[#allocation5 + $0x1f0] sm:$0xff]
    %v239 = vld [vmem:[#allocation5 + $0x1f8] sm:$0xff]
    %v240 = vld [vmem:[#allocation5 + $0x200] sm:$0xff]
    %v241 = vld [vmem:[#allocation5 + $0x208] sm:$0xff]
    %v242 = vld [vmem:[#allocation5 + $0x210] sm:$0xff]
    %v243 = vld [vmem:[#allocation5 + $0x218] sm:$0xff]
    %v244 = vld [vmem:[#allocation5 + $0x220] sm:$0xff]
    %v245 = vld [vmem:[#allocation5 + $0x228] sm:$0xff]
    %v246 = vld [vmem:[#allocation5 + $0x230] sm:$0xff]
    %v247 = vld [vmem:[#allocation5 + $0x238] sm:$0xff]
    %v248 = vld [vmem:[#allocation5 + $0x240] sm:$0xff]
    %v249 = vld [vmem:[#allocation5 + $0x248] sm:$0xff]
    %v250 = vld [vmem:[#allocation5 + $0x250] sm:$0xff]
    %v251 = vld [vmem:[#allocation5 + $0x258] sm:$0xff]
    %v252 = vld [vmem:[#allocation5 + $0x260] sm:$0xff]
    %v253 = vld [vmem:[#allocation5 + $0x268] sm:$0xff]
    %v254 = vld [vmem:[#allocation5 + $0x270] sm:$0xff]
    %v255 = vld [vmem:[#allocation5 + $0x278] sm:$0xff]
    %v256 = vld [vmem:[#allocation5 + $0x280] sm:$0xff]
    %v257 = vld [vmem:[#allocation5 + $0x288] sm:$0xff]
    %v258 = vld [vmem:[#allocation5 + $0x290] sm:$0xff]
    %v259 = vld [vmem:[#allocation5 + $0x298] sm:$0xff]
    %v260 = vld [vmem:[#allocation5 + $0x2a0] sm:$0xff]
    %v261 = vld [vmem:[#allocation5 + $0x2a8] sm:$0xff]
    %v262 = vld [vmem:[#allocation5 + $0x2b0] sm:$0xff]
    %v263 = vld [vmem:[#allocation5 + $0x2b8] sm:$0xff]
    %v264 = vld [vmem:[#allocation5 + $0x2c0] sm:$0xff]
    %v265 = vld [vmem:[#allocation5 + $0x2c8] sm:$0xff]
    %v266 = vld [vmem:[#allocation5 + $0x2d0] sm:$0xff]
    %v267 = vld [vmem:[#allocation5 + $0x2d8] sm:$0xff]
    %v268 = vld [vmem:[#allocation5 + $0x2e0] sm:$0xff]
    %v269 = vld [vmem:[#allocation5 + $0x2e8] sm:$0xff]
    %v270 = vld [vmem:[#allocation5 + $0x2f0] sm:$0xff]
    %v271 = vld [vmem:[#allocation5 + $0x2f8] sm:$0xff]
    %v272 = vld [vmem:[#allocation5 + $0x300] sm:$0xff]
    %v273 = vld [vmem:[#allocation5 + $0x308] sm:$0xff]
    %v274 = vld [vmem:[#allocation5 + $0x310] sm:$0xff]
    %v275 = vld [vmem:[#allocation5 + $0x318] sm:$0xff]
    %v276 = vld [vmem:[#allocation5 + $0x320] sm:$0xff]
    %v277 = vld [vmem:[#allocation5 + $0x328] sm:$0xff]
    %v278 = vld [vmem:[#allocation5 + $0x330] sm:$0xff]
    %v279 = vld [vmem:[#allocation5 + $0x338] sm:$0xff]
    %v280 = vld [vmem:[#allocation5 + $0x340] sm:$0xff]
    %v281 = vld [vmem:[#allocation5 + $0x348] sm:$0xff]
    %v282 = vld [vmem:[#allocation5 + $0x350] sm:$0xff]
    %v283 = vld [vmem:[#allocation5 + $0x358] sm:$0xff]
    %v284 = vld [vmem:[#allocation5 + $0x360] sm:$0xff]
    %v285 = vld [vmem:[#allocation5 + $0x368] sm:$0xff]
    %v286 = vld [vmem:[#allocation5 + $0x370] sm:$0xff]
    %v287 = vld [vmem:[#allocation5 + $0x378] sm:$0xff]
    %v288 = vld [vmem:[#allocation5 + $0x380] sm:$0xff]
    %v289 = vld [vmem:[#allocation5 + $0x388] sm:$0xff]
    %v290 = vld [vmem:[#allocation5 + $0x390] sm:$0xff]
    %v291 = vld [vmem:[#allocation5 + $0x398] sm:$0xff]
    %v292 = vld [vmem:[#allocation5 + $0x3a0] sm:$0xff]
    %v293 = vld [vmem:[#allocation5 + $0x3a8] sm:$0xff]
    %v294 = vld [vmem:[#allocation5 + $0x3b0] sm:$0xff]
    %v295 = vld [vmem:[#allocation5 + $0x3b8] sm:$0xff]
    %v296 = vld [vmem:[#allocation5 + $0x3c0] sm:$0xff]
    %v297 = vld [vmem:[#allocation5 + $0x3c8] sm:$0xff]
    %v298 = vld [vmem:[#allocation5 + $0x3d0] sm:$0xff]
    %v299 = vld [vmem:[#allocation5 + $0x3d8] sm:$0xff]
    %v300 = vld [vmem:[#allocation5 + $0x3e0] sm:$0xff]
    %v301 = vld [vmem:[#allocation5 + $0x3e8] sm:$0xff]
    %v302 = vld [vmem:[#allocation5 + $0x3f0] sm:$0xff]
    %v303 = vld [vmem:[#allocation5 + $0x3f8] sm:$0xff]
    %v304 = vld [vmem:[#allocation5 + $0x400] sm:$0xff]
    %v305 = vld [vmem:[#allocation5 + $0x408] sm:$0xff]
    %v306 = vld [vmem:[#allocation5 + $0x410] sm:$0xff]
    %v307 = vld [vmem:[#allocation5 + $0x418] sm:$0xff]
    %v308 = vld [vmem:[#allocation5 + $0x420] sm:$0xff]
    %v309 = vld [vmem:[#allocation5 + $0x428] sm:$0xff]
    %v310 = vld [vmem:[#allocation5 + $0x430] sm:$0xff]
    %v311 = vld [vmem:[#allocation5 + $0x438] sm:$0xff]
    %v312 = vld [vmem:[#allocation5 + $0x440] sm:$0xff]
    %v313 = vld [vmem:[#allocation5 + $0x448] sm:$0xff]
    %v314 = vld [vmem:[#allocation5 + $0x450] sm:$0xff]
    %v315 = vld [vmem:[#allocation5 + $0x458] sm:$0xff]
    %v316 = vld [vmem:[#allocation5 + $0x460] sm:$0xff]
    %v317 = vld [vmem:[#allocation5 + $0x468] sm:$0xff]
    %v318 = vld [vmem:[#allocation5 + $0x470] sm:$0xff]
    %v319 = vld [vmem:[#allocation5 + $0x478] sm:$0xff]
    %v320 = vld [vmem:[#allocation5 + $0x480] sm:$0xff]
    %v321 = vld [vmem:[#allocation5 + $0x488] sm:$0xff]
    %v322 = vld [vmem:[#allocation5 + $0x490] sm:$0xff]
    %v323 = vld [vmem:[#allocation5 + $0x498] sm:$0xff]
    %v324 = vld [vmem:[#allocation5 + $0x4a0] sm:$0xff]
    %v325 = vld [vmem:[#allocation5 + $0x4a8] sm:$0xff]
    %v326 = vld [vmem:[#allocation5 + $0x4b0] sm:$0xff]
    %v327 = vld [vmem:[#allocation5 + $0x4b8] sm:$0xff]
    %v328 = vld [vmem:[#allocation5 + $0x4c0] sm:$0xff]
    %v329 = vld [vmem:[#allocation5 + $0x4c8] sm:$0xff]
    %v330 = vld [vmem:[#allocation5 + $0x4d0] sm:$0xff]
    %v331 = vld [vmem:[#allocation5 + $0x4d8] sm:$0xff]
    %v332 = vld [vmem:[#allocation5 + $0x4e0] sm:$0xff]
    %v333 = vld [vmem:[#allocation5 + $0x4e8] sm:$0xff]
    %v334 = vld [vmem:[#allocation5 + $0x4f0] sm:$0xff]
    %v335 = vld [vmem:[#allocation5 + $0x4f8] sm:$0xff]
    %v336 = vld [vmem:[#allocation5 + $0x500] sm:$0xff]
    %v337 = vld [vmem:[#allocation5 + $0x508] sm:$0xff]
    %v338 = vld [vmem:[#allocation5 + $0x510] sm:$0xff]
    %v339 = vld [vmem:[#allocation5 + $0x518] sm:$0xff]
    %v340 = vld [vmem:[#allocation5 + $0x520] sm:$0xff]
    %v341 = vld [vmem:[#allocation5 + $0x528] sm:$0xff]
    %v342 = vld [vmem:[#allocation5 + $0x530] sm:$0xff]
    %v343 = vld [vmem:[#allocation5 + $0x538] sm:$0xff]
    %v344 = vld [vmem:[#allocation5 + $0x540] sm:$0xff]
    %v345 = vld [vmem:[#allocation5 + $0x548] sm:$0xff]
    %v346 = vld [vmem:[#allocation5 + $0x550] sm:$0xff]
    %v347 = vld [vmem:[#allocation5 + $0x558] sm:$0xff]
    %v348 = vld [vmem:[#allocation5 + $0x560] sm:$0xff]
    %v349 = vld [vmem:[#allocation5 + $0x568] sm:$0xff]
    %v350 = vld [vmem:[#allocation5 + $0x570] sm:$0xff]
    %v351 = vld [vmem:[#allocation5 + $0x578] sm:$0xff]
    %v352 = vld [vmem:[#allocation5 + $0x580] sm:$0xff]
    %v353 = vld [vmem:[#allocation5 + $0x588] sm:$0xff]
    %v354 = vld [vmem:[#allocation5 + $0x590] sm:$0xff]
    %v355 = vld [vmem:[#allocation5 + $0x598] sm:$0xff]
    %v356 = vld [vmem:[#allocation5 + $0x5a0] sm:$0xff]
    %v357 = vld [vmem:[#allocation5 + $0x5a8] sm:$0xff]
    %v358 = vld [vmem:[#allocation5 + $0x5b0] sm:$0xff]
    %v359 = vld [vmem:[#allocation5 + $0x5b8] sm:$0xff]
    %v360 = vld [vmem:[#allocation5 + $0x5c0] sm:$0xff]
    %v361 = vld [vmem:[#allocation5 + $0x5c8] sm:$0xff]
    %v362 = vld [vmem:[#allocation5 + $0x5d0] sm:$0xff]
    %v363 = vld [vmem:[#allocation5 + $0x5d8] sm:$0xff]
    %v364 = vld [vmem:[#allocation5 + $0x5e0] sm:$0xff]
    %v365 = vld [vmem:[#allocation5 + $0x5e8] sm:$0xff]
    %v366 = vld [vmem:[#allocation5 + $0x5f0] sm:$0xff]
    %v367 = vld [vmem:[#allocation5 + $0x5f8] sm:$0xff]
    %v368 = vld [vmem:[#allocation5 + $0x600] sm:$0xff]
    %v369 = vld [vmem:[#allocation5 + $0x608] sm:$0xff]
    %v370 = vld [vmem:[#allocation5 + $0x610] sm:$0xff]
    %v371 = vld [vmem:[#allocation5 + $0x618] sm:$0xff]
    %v372 = vld [vmem:[#allocation5 + $0x620] sm:$0xff]
    %v373 = vld [vmem:[#allocation5 + $0x628] sm:$0xff]
    %v374 = vld [vmem:[#allocation5 + $0x630] sm:$0xff]
    %v375 = vld [vmem:[#allocation5 + $0x638] sm:$0xff]
    %v376 = vld [vmem:[#allocation5 + $0x640] sm:$0xff]
    %v377 = vld [vmem:[#allocation5 + $0x648] sm:$0xff]
    %v378 = vld [vmem:[#allocation5 + $0x650] sm:$0xff]
    %v379 = vld [vmem:[#allocation5 + $0x658] sm:$0xff]
    %v380 = vld [vmem:[#allocation5 + $0x660] sm:$0xff]
    %v381 = vld [vmem:[#allocation5 + $0x668] sm:$0xff]
    %v382 = vld [vmem:[#allocation5 + $0x670] sm:$0xff]
    %v383 = vld [vmem:[#allocation5 + $0x678] sm:$0xff]
    %v384 = vld [vmem:[#allocation5 + $0x680] sm:$0xff]
    %v385 = vld [vmem:[#allocation5 + $0x688] sm:$0xff]
    %v386 = vld [vmem:[#allocation5 + $0x690] sm:$0xff]
    %v387 = vld [vmem:[#allocation5 + $0x698] sm:$0xff]
    %v388 = vld [vmem:[#allocation5 + $0x6a0] sm:$0xff]
    %v389 = vld [vmem:[#allocation5 + $0x6a8] sm:$0xff]
    %v390 = vld [vmem:[#allocation5 + $0x6b0] sm:$0xff]
    %v391 = vld [vmem:[#allocation5 + $0x6b8] sm:$0xff]
    %v392 = vld [vmem:[#allocation5 + $0x6c0] sm:$0xff]
    %v393 = vld [vmem:[#allocation5 + $0x6c8] sm:$0xff]
    %v394 = vld [vmem:[#allocation5 + $0x6d0] sm:$0xff]
    %v395 = vld [vmem:[#allocation5 + $0x6d8] sm:$0xff]
    %v396 = vld [vmem:[#allocation5 + $0x6e0] sm:$0xff]
    %v397 = vld [vmem:[#allocation5 + $0x6e8] sm:$0xff]
    %v398 = vld [vmem:[#allocation5 + $0x6f0] sm:$0xff]
    %v399 = vld [vmem:[#allocation5 + $0x6f8] sm:$0xff]
    %v400 = vld [vmem:[#allocation5 + $0x700] sm:$0xff]
    %v401 = vld [vmem:[#allocation5 + $0x708] sm:$0xff]
    %v402 = vld [vmem:[#allocation5 + $0x710] sm:$0xff]
    %v403 = vld [vmem:[#allocation5 + $0x718] sm:$0xff]
    %v404 = vld [vmem:[#allocation5 + $0x720] sm:$0xff]
    %v405 = vld [vmem:[#allocation5 + $0x728] sm:$0xff]
    %v406 = vld [vmem:[#allocation5 + $0x730] sm:$0xff]
    %v407 = vld [vmem:[#allocation5 + $0x738] sm:$0xff]
    %v408 = vld [vmem:[#allocation5 + $0x740] sm:$0xff]
    %v409 = vld [vmem:[#allocation5 + $0x748] sm:$0xff]
    %v410 = vld [vmem:[#allocation5 + $0x750] sm:$0xff]
    %v411 = vld [vmem:[#allocation5 + $0x758] sm:$0xff]
    %v412 = vld [vmem:[#allocation5 + $0x760] sm:$0xff]
    %v413 = vld [vmem:[#allocation5 + $0x768] sm:$0xff]
    %v414 = vld [vmem:[#allocation5 + $0x770] sm:$0xff]
    %v415 = vld [vmem:[#allocation5 + $0x778] sm:$0xff]
    %v416 = vld [vmem:[#allocation5 + $0x780] sm:$0xff]
    %v417 = vld [vmem:[#allocation5 + $0x788] sm:$0xff]
    %v418 = vld [vmem:[#allocation5 + $0x790] sm:$0xff]
    %v419 = vld [vmem:[#allocation5 + $0x798] sm:$0xff]
    %v420 = vld [vmem:[#allocation5 + $0x7a0] sm:$0xff]
    %v421 = vld [vmem:[#allocation5 + $0x7a8] sm:$0xff]
    %v422 = vld [vmem:[#allocation5 + $0x7b0] sm:$0xff]
    %v423 = vld [vmem:[#allocation5 + $0x7b8] sm:$0xff]
    %v424 = vld [vmem:[#allocation5 + $0x7c0] sm:$0xff]
    %v425 = vld [vmem:[#allocation5 + $0x7c8] sm:$0xff]
    %v426 = vld [vmem:[#allocation5 + $0x7d0] sm:$0xff]
    %v427 = vld [vmem:[#allocation5 + $0x7d8] sm:$0xff]
    %v428 = vld [vmem:[#allocation5 + $0x7e0] sm:$0xff]
    %v429 = vld [vmem:[#allocation5 + $0x7e8] sm:$0xff]
    %v430 = vld [vmem:[#allocation5 + $0x7f0] sm:$0xff]
    %v431 = vld [vmem:[#allocation5 + $0x7f8] sm:$0xff]
    %v432 = vld [vmem:[#allocation5 + $0x800] sm:$0xff]
    %v433 = vld [vmem:[#allocation5 + $0x808] sm:$0xff]
    %v434 = vld [vmem:[#allocation5 + $0x810] sm:$0xff]
    %v435 = vld [vmem:[#allocation5 + $0x818] sm:$0xff]
    %v436 = vld [vmem:[#allocation5 + $0x820] sm:$0xff]
    %v437 = vld [vmem:[#allocation5 + $0x828] sm:$0xff]
    %v438 = vld [vmem:[#allocation5 + $0x830] sm:$0xff]
    %v439 = vld [vmem:[#allocation5 + $0x838] sm:$0xff]
    %v440 = vld [vmem:[#allocation5 + $0x840] sm:$0xff]
    %v441 = vld [vmem:[#allocation5 + $0x848] sm:$0xff]
    %v442 = vld [vmem:[#allocation5 + $0x850] sm:$0xff]
    %v443 = vld [vmem:[#allocation5 + $0x858] sm:$0xff]
    %v444 = vld [vmem:[#allocation5 + $0x860] sm:$0xff]
    %v445 = vld [vmem:[#allocation5 + $0x868] sm:$0xff]
    %v446 = vld [vmem:[#allocation5 + $0x870] sm:$0xff]
    %v447 = vld [vmem:[#allocation5 + $0x878] sm:$0xff]
    %v448 = vld [vmem:[#allocation5 + $0x880] sm:$0xff]
    %v449 = vld [vmem:[#allocation5 + $0x888] sm:$0xff]
    %v450 = vld [vmem:[#allocation5 + $0x890] sm:$0xff]
    %v451 = vld [vmem:[#allocation5 + $0x898] sm:$0xff]
    %v452 = vld [vmem:[#allocation5 + $0x8a0] sm:$0xff]
    %v453 = vld [vmem:[#allocation5 + $0x8a8] sm:$0xff]
    %v454 = vld [vmem:[#allocation5 + $0x8b0] sm:$0xff]
    %v455 = vld [vmem:[#allocation5 + $0x8b8] sm:$0xff]
    %v456 = vld [vmem:[#allocation5 + $0x8c0] sm:$0xff]
    %v457 = vld [vmem:[#allocation5 + $0x8c8] sm:$0xff]
    %v458 = vld [vmem:[#allocation5 + $0x8d0] sm:$0xff]
    %v459 = vld [vmem:[#allocation5 + $0x8d8] sm:$0xff]
    %v460 = vld [vmem:[#allocation5 + $0x8e0] sm:$0xff]
    %v461 = vld [vmem:[#allocation5 + $0x8e8] sm:$0xff]
    %v462 = vld [vmem:[#allocation5 + $0x8f0] sm:$0xff]
    %v463 = vld [vmem:[#allocation5 + $0x8f8] sm:$0xff]
    %v464 = vld [vmem:[#allocation5 + $0x900] sm:$0xff]
    %v465 = vld [vmem:[#allocation5 + $0x908] sm:$0xff]
    %v466 = vld [vmem:[#allocation5 + $0x910] sm:$0xff]
    %v467 = vld [vmem:[#allocation5 + $0x918] sm:$0xff]
    %v468 = vld [vmem:[#allocation5 + $0x920] sm:$0xff]
    %v469 = vld [vmem:[#allocation5 + $0x928] sm:$0xff]
    %v470 = vld [vmem:[#allocation5 + $0x930] sm:$0xff]
    %v471 = vld [vmem:[#allocation5 + $0x938] sm:$0xff]
    %v472 = vld [vmem:[#allocation5 + $0x940] sm:$0xff]
    %v473 = vld [vmem:[#allocation5 + $0x948] sm:$0xff]
    %v474 = vld [vmem:[#allocation5 + $0x950] sm:$0xff]
    %v475 = vld [vmem:[#allocation5 + $0x958] sm:$0xff]
    %v476 = vld [vmem:[#allocation5 + $0x960] sm:$0xff]
    %v477 = vld [vmem:[#allocation5 + $0x968] sm:$0xff]
    %v478 = vld [vmem:[#allocation5 + $0x970] sm:$0xff]
    %v479 = vld [vmem:[#allocation5 + $0x978] sm:$0xff]
    %v480 = vld [vmem:[#allocation5 + $0x980] sm:$0xff]
    %v481 = vld [vmem:[#allocation5 + $0x988] sm:$0xff]
    %v482 = vld [vmem:[#allocation5 + $0x990] sm:$0xff]
    %v483 = vld [vmem:[#allocation5 + $0x998] sm:$0xff]
    %v484 = vld [vmem:[#allocation5 + $0x9a0] sm:$0xff]
    %v485 = vld [vmem:[#allocation5 + $0x9a8] sm:$0xff]
    %v486 = vld [vmem:[#allocation5 + $0x9b0] sm:$0xff]
    %v487 = vld [vmem:[#allocation5 + $0x9b8] sm:$0xff]
    %v488 = vld [vmem:[#allocation5 + $0x9c0] sm:$0xff]
    %v489 = vld [vmem:[#allocation5 + $0x9c8] sm:$0xff]
    %v490 = vld [vmem:[#allocation5 + $0x9d0] sm:$0xff]
    %v491 = vld [vmem:[#allocation5 + $0x9d8] sm:$0xff]
    %v492 = vld [vmem:[#allocation5 + $0x9e0] sm:$0xff]
    %v493 = vld [vmem:[#allocation5 + $0x9e8] sm:$0xff]
    %v494 = vld [vmem:[#allocation5 + $0x9f0] sm:$0xff]
    %v495 = vld [vmem:[#allocation5 + $0x9f8] sm:$0xff]
    %v496 = vld [vmem:[#allocation5 + $0xa00] sm:$0xff]
    %v497 = vld [vmem:[#allocation5 + $0xa08] sm:$0xff]
    %v498 = vld [vmem:[#allocation5 + $0xa10] sm:$0xff]
    %v499 = vld [vmem:[#allocation5 + $0xa18] sm:$0xff]
    %v500 = vld [vmem:[#allocation5 + $0xa20] sm:$0xff]
    %v501 = vld [vmem:[#allocation5 + $0xa28] sm:$0xff]
    %v502 = vld [vmem:[#allocation5 + $0xa30] sm:$0xff]
    %v503 = vld [vmem:[#allocation5 + $0xa38] sm:$0xff]
    %v504 = vld [vmem:[#allocation5 + $0xa40] sm:$0xff]
    %v505 = vld [vmem:[#allocation5 + $0xa48] sm:$0xff]
    %v506 = vld [vmem:[#allocation5 + $0xa50] sm:$0xff]
    %v507 = vld [vmem:[#allocation5 + $0xa58] sm:$0xff]
    %v508 = vld [vmem:[#allocation5 + $0xa60] sm:$0xff]
    %v509 = vld [vmem:[#allocation5 + $0xa68] sm:$0xff]
    %v510 = vld [vmem:[#allocation5 + $0xa70] sm:$0xff]
    %v511 = vld [vmem:[#allocation5 + $0xa78] sm:$0xff]
    %v512 = vld [vmem:[#allocation5 + $0xa80] sm:$0xff]
    %v513 = vld [vmem:[#allocation5 + $0xa88] sm:$0xff]
    %v514 = vld [vmem:[#allocation5 + $0xa90] sm:$0xff]
    %v515 = vld [vmem:[#allocation5 + $0xa98] sm:$0xff]
    %v516 = vld [vmem:[#allocation5 + $0xaa0] sm:$0xff]
    %v517 = vld [vmem:[#allocation5 + $0xaa8] sm:$0xff]
    %v518 = vld [vmem:[#allocation5 + $0xab0] sm:$0xff]
    %v519 = vld [vmem:[#allocation5 + $0xab8] sm:$0xff]
    %v520 = vld [vmem:[#allocation5 + $0xac0] sm:$0xff]
    %v521 = vld [vmem:[#allocation5 + $0xac8] sm:$0xff]
    %v522 = vld [vmem:[#allocation5 + $0xad0] sm:$0xff]
    %v523 = vld [vmem:[#allocation5 + $0xad8] sm:$0xff]
    %v524 = vld [vmem:[#allocation5 + $0xae0] sm:$0xff]
    %v525 = vld [vmem:[#allocation5 + $0xae8] sm:$0xff]
    %v526 = vld [vmem:[#allocation5 + $0xaf0] sm:$0xff]
    %v527 = vld [vmem:[#allocation5 + $0xaf8] sm:$0xff]
    %v528 = vld [vmem:[#allocation5 + $0xb00] sm:$0xff]
    %v529 = vld [vmem:[#allocation5 + $0xb08] sm:$0xff]
    %v530 = vld [vmem:[#allocation5 + $0xb10] sm:$0xff]
    %v531 = vld [vmem:[#allocation5 + $0xb18] sm:$0xff]
    %v532 = vld [vmem:[#allocation5 + $0xb20] sm:$0xff]
    %v533 = vld [vmem:[#allocation5 + $0xb28] sm:$0xff]
    %v534 = vld [vmem:[#allocation5 + $0xb30] sm:$0xff]
    %v535 = vld [vmem:[#allocation5 + $0xb38] sm:$0xff]
    %v536 = vld [vmem:[#allocation5 + $0xb40] sm:$0xff]
    %v537 = vld [vmem:[#allocation5 + $0xb48] sm:$0xff]
    %v538 = vld [vmem:[#allocation5 + $0xb50] sm:$0xff]
    %v539 = vld [vmem:[#allocation5 + $0xb58] sm:$0xff]
    %v540 = vld [vmem:[#allocation5 + $0xb60] sm:$0xff]
    %v541 = vld [vmem:[#allocation5 + $0xb68] sm:$0xff]
    %v542 = vld [vmem:[#allocation5 + $0xb70] sm:$0xff]
    %v543 = vld [vmem:[#allocation5 + $0xb78] sm:$0xff]
    %v544 = vld [vmem:[#allocation5 + $0xb80] sm:$0xff]
    %v545 = vld [vmem:[#allocation5 + $0xb88] sm:$0xff]
    %v546 = vld [vmem:[#allocation5 + $0xb90] sm:$0xff]
    %v547 = vld [vmem:[#allocation5 + $0xb98] sm:$0xff]
    %v548 = vld [vmem:[#allocation5 + $0xba0] sm:$0xff]
    %v549 = vld [vmem:[#allocation5 + $0xba8] sm:$0xff]
    %v550 = vld [vmem:[#allocation5 + $0xbb0] sm:$0xff]
    %v551 = vld [vmem:[#allocation5 + $0xbb8] sm:$0xff]
    %v552 = vld [vmem:[#allocation5 + $0xbc0] sm:$0xff]
    %v553 = vld [vmem:[#allocation5 + $0xbc8] sm:$0xff]
    %v554 = vld [vmem:[#allocation5 + $0xbd0] sm:$0xff]
    %v555 = vld [vmem:[#allocation5 + $0xbd8] sm:$0xff]
    %v556 = vld [vmem:[#allocation5 + $0xbe0] sm:$0xff]
    %v557 = vld [vmem:[#allocation5 + $0xbe8] sm:$0xff]
    %v558 = vld [vmem:[#allocation5 + $0xbf0] sm:$0xff]
    %v559 = vld [vmem:[#allocation5 + $0xbf8] sm:$0xff]
    %v560 = vld [vmem:[#allocation5 + $0xc00] sm:$0xff]
    %v561 = vld [vmem:[#allocation5 + $0xc08] sm:$0xff]
    %v562 = vld [vmem:[#allocation5 + $0xc10] sm:$0xff]
    %v563 = vld [vmem:[#allocation5 + $0xc18] sm:$0xff]
    %v564 = vld [vmem:[#allocation5 + $0xc20] sm:$0xff]
    %v565 = vld [vmem:[#allocation5 + $0xc28] sm:$0xff]
    %v566 = vld [vmem:[#allocation5 + $0xc30] sm:$0xff]
    %v567 = vld [vmem:[#allocation5 + $0xc38] sm:$0xff]
    %v568 = vld [vmem:[#allocation5 + $0xc40] sm:$0xff]
    %v569 = vld [vmem:[#allocation5 + $0xc48] sm:$0xff]
    %v570 = vld [vmem:[#allocation5 + $0xc50] sm:$0xff]
    %v571 = vld [vmem:[#allocation5 + $0xc58] sm:$0xff]
    %v572 = vld [vmem:[#allocation5 + $0xc60] sm:$0xff]
    %v573 = vld [vmem:[#allocation5 + $0xc68] sm:$0xff]
    %v574 = vld [vmem:[#allocation5 + $0xc70] sm:$0xff]
    %v575 = vld [vmem:[#allocation5 + $0xc78] sm:$0xff]
    %v576 = vld [vmem:[#allocation5 + $0xc80] sm:$0xff]
    %v577 = vld [vmem:[#allocation5 + $0xc88] sm:$0xff]
    %v578 = vld [vmem:[#allocation5 + $0xc90] sm:$0xff]
    %v579 = vld [vmem:[#allocation5 + $0xc98] sm:$0xff]
    %v580 = vld [vmem:[#allocation5 + $0xca0] sm:$0xff]
    %v581 = vld [vmem:[#allocation5 + $0xca8] sm:$0xff]
    %v582 = vld [vmem:[#allocation5 + $0xcb0] sm:$0xff]
    %v583 = vld [vmem:[#allocation5 + $0xcb8] sm:$0xff]
    %v584 = vld [vmem:[#allocation5 + $0xcc0] sm:$0xff]
    %v585 = vld [vmem:[#allocation5 + $0xcc8] sm:$0xff]
    %v586 = vld [vmem:[#allocation5 + $0xcd0] sm:$0xff]
    %v587 = vld [vmem:[#allocation5 + $0xcd8] sm:$0xff]
    %v588 = vld [vmem:[#allocation5 + $0xce0] sm:$0xff]
    %v589 = vld [vmem:[#allocation5 + $0xce8] sm:$0xff]
    %v590 = vld [vmem:[#allocation5 + $0xcf0] sm:$0xff]
    %v591 = vld [vmem:[#allocation5 + $0xcf8] sm:$0xff]
    %v592 = vld [vmem:[#allocation5 + $0xd00] sm:$0xff]
    %v593 = vld [vmem:[#allocation5 + $0xd08] sm:$0xff]
    %v594 = vld [vmem:[#allocation5 + $0xd10] sm:$0xff]
    %v595 = vld [vmem:[#allocation5 + $0xd18] sm:$0xff]
    %v596 = vld [vmem:[#allocation5 + $0xd20] sm:$0xff]
    %v597 = vld [vmem:[#allocation5 + $0xd28] sm:$0xff]
    %v598 = vld [vmem:[#allocation5 + $0xd30] sm:$0xff]
    %v599 = vld [vmem:[#allocation5 + $0xd38] sm:$0xff]
    %v600 = vld [vmem:[#allocation5 + $0xd40] sm:$0xff]
    %v601 = vld [vmem:[#allocation5 + $0xd48] sm:$0xff]
    %v602 = vld [vmem:[#allocation5 + $0xd50] sm:$0xff]
    %v603 = vld [vmem:[#allocation5 + $0xd58] sm:$0xff]
    %v604 = vld [vmem:[#allocation5 + $0xd60] sm:$0xff]
    %v605 = vld [vmem:[#allocation5 + $0xd68] sm:$0xff]
    %v606 = vld [vmem:[#allocation5 + $0xd70] sm:$0xff]
    %v607 = vld [vmem:[#allocation5 + $0xd78] sm:$0xff]
    %v608 = vld [vmem:[#allocation5 + $0xd80] sm:$0xff]
    %v609 = vld [vmem:[#allocation5 + $0xd88] sm:$0xff]
    %v610 = vld [vmem:[#allocation5 + $0xd90] sm:$0xff]
    %v611 = vld [vmem:[#allocation5 + $0xd98] sm:$0xff]
    %v612 = vld [vmem:[#allocation5 + $0xda0] sm:$0xff]
    %v613 = vld [vmem:[#allocation5 + $0xda8] sm:$0xff]
    %v614 = vld [vmem:[#allocation5 + $0xdb0] sm:$0xff]
    %v615 = vld [vmem:[#allocation5 + $0xdb8] sm:$0xff]
    %v616 = vld [vmem:[#allocation5 + $0xdc0] sm:$0xff]
    %v617 = vld [vmem:[#allocation5 + $0xdc8] sm:$0xff]
    %v618 = vld [vmem:[#allocation5 + $0xdd0] sm:$0xff]
    %v619 = vld [vmem:[#allocation5 + $0xdd8] sm:$0xff]
    %v620 = vld [vmem:[#allocation5 + $0xde0] sm:$0xff]
    %v621 = vld [vmem:[#allocation5 + $0xde8] sm:$0xff]
    %v622 = vld [vmem:[#allocation5 + $0xdf0] sm:$0xff]
    %v623 = vld [vmem:[#allocation5 + $0xdf8] sm:$0xff]
    %v624 = vld [vmem:[#allocation5 + $0xe00] sm:$0xff]
    %v625 = vld [vmem:[#allocation5 + $0xe08] sm:$0xff]
    %v626 = vld [vmem:[#allocation5 + $0xe10] sm:$0xff]
    %v627 = vld [vmem:[#allocation5 + $0xe18] sm:$0xff]
    %v628 = vld [vmem:[#allocation5 + $0xe20] sm:$0xff]
    %v629 = vld [vmem:[#allocation5 + $0xe28] sm:$0xff]
    %v630 = vld [vmem:[#allocation5 + $0xe30] sm:$0xff]
    %v631 = vld [vmem:[#allocation5 + $0xe38] sm:$0xff]
    %v632 = vld [vmem:[#allocation5 + $0xe40] sm:$0xff]
    %v633 = vld [vmem:[#allocation5 + $0xe48] sm:$0xff]
    %v634 = vld [vmem:[#allocation5 + $0xe50] sm:$0xff]
    %v635 = vld [vmem:[#allocation5 + $0xe58] sm:$0xff]
    %v636 = vld [vmem:[#allocation5 + $0xe60] sm:$0xff]
    %v637 = vld [vmem:[#allocation5 + $0xe68] sm:$0xff]
    %v638 = vld [vmem:[#allocation5 + $0xe70] sm:$0xff]
    %v639 = vld [vmem:[#allocation5 + $0xe78] sm:$0xff]
    %v640 = vld [vmem:[#allocation5 + $0xe80] sm:$0xff]
    %v641 = vld [vmem:[#allocation5 + $0xe88] sm:$0xff]
    %v642 = vld [vmem:[#allocation5 + $0xe90] sm:$0xff]
    %v643 = vld [vmem:[#allocation5 + $0xe98] sm:$0xff]
    %v644 = vld [vmem:[#allocation5 + $0xea0] sm:$0x33]
    %v645 = vld [vmem:[#allocation5 + $0xea8] sm:$0x33]
    %v646 = vld [vmem:[#allocation7] sm:$0xf]
    %v648 = vperm.slane %v646, 0
    %v649 = vperm.slane %v646, 1
    %v650 = vperm.slane %v646, 2
    %v651 = vperm.slane %v646, 3
    %v1126 = vunpack.c.l.b16 %v176
    %v1127 = vunpack.c.h.b16 %v176
    %v1128 = vunpack.c.l.b16 %v177
    %v1129 = vunpack.c.h.b16 %v177
    %v1130 = vunpack.c.l.b16 %v178
    %v1131 = vunpack.c.h.b16 %v178
    %v1132 = vunpack.c.l.b16 %v179
    %v1133 = vunpack.c.h.b16 %v179
    %v1134 = vunpack.c.l.b16 %v180
    %v1135 = vunpack.c.h.b16 %v180
    %v1136 = vunpack.c.l.b16 %v181
    %v1137 = vunpack.c.h.b16 %v181
    %v1138 = vunpack.c.l.b16 %v182
    %v1139 = vunpack.c.h.b16 %v182
    %v1140 = vunpack.c.l.b16 %v183
    %v1141 = vunpack.c.h.b16 %v183
    %v1142 = vunpack.c.l.b16 %v184
    %v1143 = vunpack.c.h.b16 %v184
    %v1144 = vunpack.c.l.b16 %v185
    %v1145 = vunpack.c.h.b16 %v185
    %v1146 = vunpack.c.l.b16 %v186
    %v1147 = vunpack.c.h.b16 %v186
    %v1148 = vunpack.c.l.b16 %v187
    %v1149 = vunpack.c.h.b16 %v187
    %v1150 = vunpack.c.l.b16 %v188
    %v1151 = vunpack.c.h.b16 %v188
    %v1152 = vunpack.c.l.b16 %v189
    %v1153 = vunpack.c.h.b16 %v189
    %v1154 = vunpack.c.l.b16 %v190
    %v1155 = vunpack.c.h.b16 %v190
    %v1156 = vunpack.c.l.b16 %v191
    %v1157 = vunpack.c.h.b16 %v191
    %v1158 = vunpack.c.l.b16 %v192
    %v1159 = vunpack.c.h.b16 %v192
    %v1160 = vunpack.c.l.b16 %v193
    %v1161 = vunpack.c.h.b16 %v193
    %v1162 = vunpack.c.l.b16 %v194
    %v1163 = vunpack.c.h.b16 %v194
    %v1164 = vunpack.c.l.b16 %v195
    %v1165 = vunpack.c.h.b16 %v195
    %v1166 = vunpack.c.l.b16 %v196
    %v1167 = vunpack.c.h.b16 %v196
    %v1168 = vunpack.c.l.b16 %v197
    %v1169 = vunpack.c.h.b16 %v197
    %v1170 = vunpack.c.l.b16 %v198
    %v1171 = vunpack.c.h.b16 %v198
    %v1172 = vunpack.c.l.b16 %v199
    %v1173 = vunpack.c.h.b16 %v199
    %v1174 = vunpack.c.l.b16 %v200
    %v1175 = vunpack.c.h.b16 %v200
    %v1176 = vunpack.c.l.b16 %v201
    %v1177 = vunpack.c.h.b16 %v201
    %v1178 = vunpack.c.l.b16 %v202
    %v1179 = vunpack.c.h.b16 %v202
    %v1180 = vunpack.c.l.b16 %v203
    %v1181 = vunpack.c.h.b16 %v203
    %v1182 = vunpack.c.l.b16 %v204
    %v1183 = vunpack.c.h.b16 %v204
    %v1184 = vunpack.c.l.b16 %v205
    %v1185 = vunpack.c.h.b16 %v205
    %v1186 = vunpack.c.l.b16 %v206
    %v1187 = vunpack.c.h.b16 %v206
    %v1188 = vunpack.c.l.b16 %v207
    %v1189 = vunpack.c.h.b16 %v207
    %v1190 = vunpack.c.l.b16 %v208
    %v1191 = vunpack.c.h.b16 %v208
    %v1192 = vunpack.c.l.b16 %v209
    %v1193 = vunpack.c.h.b16 %v209
    %v1194 = vunpack.c.l.b16 %v210
    %v1195 = vunpack.c.h.b16 %v210
    %v1196 = vunpack.c.l.b16 %v211
    %v1197 = vunpack.c.h.b16 %v211
    %v1198 = vunpack.c.l.b16 %v212
    %v1199 = vunpack.c.h.b16 %v212
    %v1200 = vunpack.c.l.b16 %v213
    %v1201 = vunpack.c.h.b16 %v213
    %v1202 = vunpack.c.l.b16 %v214
    %v1203 = vunpack.c.h.b16 %v214
    %v1204 = vunpack.c.l.b16 %v215
    %v1205 = vunpack.c.h.b16 %v215
    %v1206 = vunpack.c.l.b16 %v216
    %v1207 = vunpack.c.h.b16 %v216
    %v1208 = vunpack.c.l.b16 %v217
    %v1209 = vunpack.c.h.b16 %v217
    %v1210 = vunpack.c.l.b16 %v218
    %v1211 = vunpack.c.h.b16 %v218
    %v1212 = vunpack.c.l.b16 %v219
    %v1213 = vunpack.c.h.b16 %v219
    %v1214 = vunpack.c.l.b16 %v220
    %v1215 = vunpack.c.h.b16 %v220
    %v1216 = vunpack.c.l.b16 %v221
    %v1217 = vunpack.c.h.b16 %v221
    %v1218 = vunpack.c.l.b16 %v222
    %v1219 = vunpack.c.h.b16 %v222
    %v1220 = vunpack.c.l.b16 %v223
    %v1221 = vunpack.c.h.b16 %v223
    %v1222 = vunpack.c.l.b16 %v224
    %v1223 = vunpack.c.h.b16 %v224
    %v1224 = vunpack.c.l.b16 %v225
    %v1225 = vunpack.c.h.b16 %v225
    %v1226 = vunpack.c.l.b16 %v226
    %v1227 = vunpack.c.h.b16 %v226
    %v1228 = vunpack.c.l.b16 %v227
    %v1229 = vunpack.c.h.b16 %v227
    %v1230 = vunpack.c.l.b16 %v228
    %v1231 = vunpack.c.h.b16 %v228
    %v1232 = vunpack.c.l.b16 %v229
    %v1233 = vunpack.c.h.b16 %v229
    %v1234 = vunpack.c.l.b16 %v230
    %v1235 = vunpack.c.h.b16 %v230
    %v1236 = vunpack.c.l.b16 %v231
    %v1237 = vunpack.c.h.b16 %v231
    %v1238 = vunpack.c.l.b16 %v232
    %v1239 = vunpack.c.h.b16 %v232
    %v1240 = vunpack.c.l.b16 %v233
    %v1241 = vunpack.c.h.b16 %v233
    %v1242 = vunpack.c.l.b16 %v234
    %v1243 = vunpack.c.h.b16 %v234
    %v1244 = vunpack.c.l.b16 %v235
    %v1245 = vunpack.c.h.b16 %v235
    %v1246 = vunpack.c.l.b16 %v236
    %v1247 = vunpack.c.h.b16 %v236
    %v1248 = vunpack.c.l.b16 %v237
    %v1249 = vunpack.c.h.b16 %v237
    %v1250 = vunpack.c.l.b16 %v238
    %v1251 = vunpack.c.h.b16 %v238
    %v1252 = vunpack.c.l.b16 %v239
    %v1253 = vunpack.c.h.b16 %v239
    %v1254 = vunpack.c.l.b16 %v240
    %v1255 = vunpack.c.h.b16 %v240
    %v1256 = vunpack.c.l.b16 %v241
    %v1257 = vunpack.c.h.b16 %v241
    %v1258 = vunpack.c.l.b16 %v242
    %v1259 = vunpack.c.h.b16 %v242
    %v1260 = vunpack.c.l.b16 %v243
    %v1261 = vunpack.c.h.b16 %v243
    %v1262 = vunpack.c.l.b16 %v244
    %v1263 = vunpack.c.h.b16 %v244
    %v1264 = vunpack.c.l.b16 %v245
    %v1265 = vunpack.c.h.b16 %v245
    %v1266 = vunpack.c.l.b16 %v246
    %v1267 = vunpack.c.h.b16 %v246
    %v1268 = vunpack.c.l.b16 %v247
    %v1269 = vunpack.c.h.b16 %v247
    %v1270 = vunpack.c.l.b16 %v248
    %v1271 = vunpack.c.h.b16 %v248
    %v1272 = vunpack.c.l.b16 %v249
    %v1273 = vunpack.c.h.b16 %v249
    %v1274 = vunpack.c.l.b16 %v250
    %v1275 = vunpack.c.h.b16 %v250
    %v1276 = vunpack.c.l.b16 %v251
    %v1277 = vunpack.c.h.b16 %v251
    %v1278 = vunpack.c.l.b16 %v252
    %v1279 = vunpack.c.h.b16 %v252
    %v1280 = vunpack.c.l.b16 %v253
    %v1281 = vunpack.c.h.b16 %v253
    %v1282 = vunpack.c.l.b16 %v254
    %v1283 = vunpack.c.h.b16 %v254
    %v1284 = vunpack.c.l.b16 %v255
    %v1285 = vunpack.c.h.b16 %v255
    %v1286 = vunpack.c.l.b16 %v256
    %v1287 = vunpack.c.h.b16 %v256
    %v1288 = vunpack.c.l.b16 %v257
    %v1289 = vunpack.c.h.b16 %v257
    %v1290 = vunpack.c.l.b16 %v258
    %v1291 = vunpack.c.h.b16 %v258
    %v1292 = vunpack.c.l.b16 %v259
    %v1293 = vunpack.c.h.b16 %v259
    %v1294 = vunpack.c.l.b16 %v260
    %v1295 = vunpack.c.h.b16 %v260
    %v1296 = vunpack.c.l.b16 %v261
    %v1297 = vunpack.c.h.b16 %v261
    %v1298 = vunpack.c.l.b16 %v262
    %v1299 = vunpack.c.h.b16 %v262
    %v1300 = vunpack.c.l.b16 %v263
    %v1301 = vunpack.c.h.b16 %v263
    %v1302 = vunpack.c.l.b16 %v264
    %v1303 = vunpack.c.h.b16 %v264
    %v1304 = vunpack.c.l.b16 %v265
    %v1305 = vunpack.c.h.b16 %v265
    %v1306 = vunpack.c.l.b16 %v266
    %v1307 = vunpack.c.h.b16 %v266
    %v1308 = vunpack.c.l.b16 %v267
    %v1309 = vunpack.c.h.b16 %v267
    %v1310 = vunpack.c.l.b16 %v268
    %v1311 = vunpack.c.h.b16 %v268
    %v1312 = vunpack.c.l.b16 %v269
    %v1313 = vunpack.c.h.b16 %v269
    %v1314 = vunpack.c.l.b16 %v270
    %v1315 = vunpack.c.h.b16 %v270
    %v1316 = vunpack.c.l.b16 %v271
    %v1317 = vunpack.c.h.b16 %v271
    %v1318 = vunpack.c.l.b16 %v272
    %v1319 = vunpack.c.h.b16 %v272
    %v1320 = vunpack.c.l.b16 %v273
    %v1321 = vunpack.c.h.b16 %v273
    %v1322 = vunpack.c.l.b16 %v274
    %v1323 = vunpack.c.h.b16 %v274
    %v1324 = vunpack.c.l.b16 %v275
    %v1325 = vunpack.c.h.b16 %v275
    %v1326 = vunpack.c.l.b16 %v276
    %v1327 = vunpack.c.h.b16 %v276
    %v1328 = vunpack.c.l.b16 %v277
    %v1329 = vunpack.c.h.b16 %v277
    %v1330 = vunpack.c.l.b16 %v278
    %v1331 = vunpack.c.h.b16 %v278
    %v1332 = vunpack.c.l.b16 %v279
    %v1333 = vunpack.c.h.b16 %v279
    %v1334 = vunpack.c.l.b16 %v280
    %v1335 = vunpack.c.h.b16 %v280
    %v1336 = vunpack.c.l.b16 %v281
    %v1337 = vunpack.c.h.b16 %v281
    %v1338 = vunpack.c.l.b16 %v282
    %v1339 = vunpack.c.h.b16 %v282
    %v1340 = vunpack.c.l.b16 %v283
    %v1341 = vunpack.c.h.b16 %v283
    %v1342 = vunpack.c.l.b16 %v284
    %v1343 = vunpack.c.h.b16 %v284
    %v1344 = vunpack.c.l.b16 %v285
    %v1345 = vunpack.c.h.b16 %v285
    %v1346 = vunpack.c.l.b16 %v286
    %v1347 = vunpack.c.h.b16 %v286
    %v1348 = vunpack.c.l.b16 %v287
    %v1349 = vunpack.c.h.b16 %v287
    %v1350 = vunpack.c.l.b16 %v288
    %v1351 = vunpack.c.h.b16 %v288
    %v1352 = vunpack.c.l.b16 %v289
    %v1353 = vunpack.c.h.b16 %v289
    %v1354 = vunpack.c.l.b16 %v290
    %v1355 = vunpack.c.h.b16 %v290
    %v1356 = vunpack.c.l.b16 %v291
    %v1357 = vunpack.c.h.b16 %v291
    %v1358 = vunpack.c.l.b16 %v292
    %v1359 = vunpack.c.h.b16 %v292
    %v1360 = vunpack.c.l.b16 %v293
    %v1361 = vunpack.c.h.b16 %v293
    %v1362 = vunpack.c.l.b16 %v294
    %v1363 = vunpack.c.h.b16 %v294
    %v1364 = vunpack.c.l.b16 %v295
    %v1365 = vunpack.c.h.b16 %v295
    %v1366 = vunpack.c.l.b16 %v296
    %v1367 = vunpack.c.h.b16 %v296
    %v1368 = vunpack.c.l.b16 %v297
    %v1369 = vunpack.c.h.b16 %v297
    %v1370 = vunpack.c.l.b16 %v298
    %v1371 = vunpack.c.h.b16 %v298
    %v1372 = vunpack.c.l.b16 %v299
    %v1373 = vunpack.c.h.b16 %v299
    %v1374 = vunpack.c.l.b16 %v300
    %v1375 = vunpack.c.h.b16 %v300
    %v1376 = vunpack.c.l.b16 %v301
    %v1377 = vunpack.c.h.b16 %v301
    %v1378 = vunpack.c.l.b16 %v302
    %v1379 = vunpack.c.h.b16 %v302
    %v1380 = vunpack.c.l.b16 %v303
    %v1381 = vunpack.c.h.b16 %v303
    %v1382 = vunpack.c.l.b16 %v304
    %v1383 = vunpack.c.h.b16 %v304
    %v1384 = vunpack.c.l.b16 %v305
    %v1385 = vunpack.c.h.b16 %v305
    %v1386 = vunpack.c.l.b16 %v306
    %v1387 = vunpack.c.h.b16 %v306
    %v1388 = vunpack.c.l.b16 %v307
    %v1389 = vunpack.c.h.b16 %v307
    %v1390 = vunpack.c.l.b16 %v308
    %v1391 = vunpack.c.h.b16 %v308
    %v1392 = vunpack.c.l.b16 %v309
    %v1393 = vunpack.c.h.b16 %v309
    %v1394 = vunpack.c.l.b16 %v310
    %v1395 = vunpack.c.h.b16 %v310
    %v1396 = vunpack.c.l.b16 %v311
    %v1397 = vunpack.c.h.b16 %v311
    %v1398 = vunpack.c.l.b16 %v312
    %v1399 = vunpack.c.h.b16 %v312
    %v1400 = vunpack.c.l.b16 %v313
    %v1401 = vunpack.c.h.b16 %v313
    %v1402 = vunpack.c.l.b16 %v314
    %v1403 = vunpack.c.h.b16 %v314
    %v1404 = vunpack.c.l.b16 %v315
    %v1405 = vunpack.c.h.b16 %v315
    %v1406 = vunpack.c.l.b16 %v316
    %v1407 = vunpack.c.h.b16 %v316
    %v1408 = vunpack.c.l.b16 %v317
    %v1409 = vunpack.c.h.b16 %v317
    %v1410 = vunpack.c.l.b16 %v318
    %v1411 = vunpack.c.h.b16 %v318
    %v1412 = vunpack.c.l.b16 %v319
    %v1413 = vunpack.c.h.b16 %v319
    %v1414 = vunpack.c.l.b16 %v320
    %v1415 = vunpack.c.h.b16 %v320
    %v1416 = vunpack.c.l.b16 %v321
    %v1417 = vunpack.c.h.b16 %v321
    %v1418 = vunpack.c.l.b16 %v322
    %v1419 = vunpack.c.h.b16 %v322
    %v1420 = vunpack.c.l.b16 %v323
    %v1421 = vunpack.c.h.b16 %v323
    %v1422 = vunpack.c.l.b16 %v324
    %v1423 = vunpack.c.h.b16 %v324
    %v1424 = vunpack.c.l.b16 %v325
    %v1425 = vunpack.c.h.b16 %v325
    %v1426 = vunpack.c.l.b16 %v326
    %v1427 = vunpack.c.h.b16 %v326
    %v1428 = vunpack.c.l.b16 %v327
    %v1429 = vunpack.c.h.b16 %v327
    %v1430 = vunpack.c.l.b16 %v328
    %v1431 = vunpack.c.h.b16 %v328
    %v1432 = vunpack.c.l.b16 %v329
    %v1433 = vunpack.c.h.b16 %v329
    %v1434 = vunpack.c.l.b16 %v330
    %v1435 = vunpack.c.h.b16 %v330
    %v1436 = vunpack.c.l.b16 %v331
    %v1437 = vunpack.c.h.b16 %v331
    %v1438 = vunpack.c.l.b16 %v332
    %v1439 = vunpack.c.h.b16 %v332
    %v1440 = vunpack.c.l.b16 %v333
    %v1441 = vunpack.c.h.b16 %v333
    %v1442 = vunpack.c.l.b16 %v334
    %v1443 = vunpack.c.h.b16 %v334
    %v1444 = vunpack.c.l.b16 %v335
    %v1445 = vunpack.c.h.b16 %v335
    %v1446 = vunpack.c.l.b16 %v336
    %v1447 = vunpack.c.h.b16 %v336
    %v1448 = vunpack.c.l.b16 %v337
    %v1449 = vunpack.c.h.b16 %v337
    %v1450 = vunpack.c.l.b16 %v338
    %v1451 = vunpack.c.h.b16 %v338
    %v1452 = vunpack.c.l.b16 %v339
    %v1453 = vunpack.c.h.b16 %v339
    %v1454 = vunpack.c.l.b16 %v340
    %v1455 = vunpack.c.h.b16 %v340
    %v1456 = vunpack.c.l.b16 %v341
    %v1457 = vunpack.c.h.b16 %v341
    %v1458 = vunpack.c.l.b16 %v342
    %v1459 = vunpack.c.h.b16 %v342
    %v1460 = vunpack.c.l.b16 %v343
    %v1461 = vunpack.c.h.b16 %v343
    %v1462 = vunpack.c.l.b16 %v344
    %v1463 = vunpack.c.h.b16 %v344
    %v1464 = vunpack.c.l.b16 %v345
    %v1465 = vunpack.c.h.b16 %v345
    %v1466 = vunpack.c.l.b16 %v346
    %v1467 = vunpack.c.h.b16 %v346
    %v1468 = vunpack.c.l.b16 %v347
    %v1469 = vunpack.c.h.b16 %v347
    %v1470 = vunpack.c.l.b16 %v348
    %v1471 = vunpack.c.h.b16 %v348
    %v1472 = vunpack.c.l.b16 %v349
    %v1473 = vunpack.c.h.b16 %v349
    %v1474 = vunpack.c.l.b16 %v350
    %v1475 = vunpack.c.h.b16 %v350
    %v1476 = vunpack.c.l.b16 %v351
    %v1477 = vunpack.c.h.b16 %v351
    %v1478 = vunpack.c.l.b16 %v352
    %v1479 = vunpack.c.h.b16 %v352
    %v1480 = vunpack.c.l.b16 %v353
    %v1481 = vunpack.c.h.b16 %v353
    %v1482 = vunpack.c.l.b16 %v354
    %v1483 = vunpack.c.h.b16 %v354
    %v1484 = vunpack.c.l.b16 %v355
    %v1485 = vunpack.c.h.b16 %v355
    %v1486 = vunpack.c.l.b16 %v356
    %v1487 = vunpack.c.h.b16 %v356
    %v1488 = vunpack.c.l.b16 %v357
    %v1489 = vunpack.c.h.b16 %v357
    %v1490 = vunpack.c.l.b16 %v358
    %v1491 = vunpack.c.h.b16 %v358
    %v1492 = vunpack.c.l.b16 %v359
    %v1493 = vunpack.c.h.b16 %v359
    %v1494 = vunpack.c.l.b16 %v360
    %v1495 = vunpack.c.h.b16 %v360
    %v1496 = vunpack.c.l.b16 %v361
    %v1497 = vunpack.c.h.b16 %v361
    %v1498 = vunpack.c.l.b16 %v362
    %v1499 = vunpack.c.h.b16 %v362
    %v1500 = vunpack.c.l.b16 %v363
    %v1501 = vunpack.c.h.b16 %v363
    %v1502 = vunpack.c.l.b16 %v364
    %v1503 = vunpack.c.h.b16 %v364
    %v1504 = vunpack.c.l.b16 %v365
    %v1505 = vunpack.c.h.b16 %v365
    %v1506 = vunpack.c.l.b16 %v366
    %v1507 = vunpack.c.h.b16 %v366
    %v1508 = vunpack.c.l.b16 %v367
    %v1509 = vunpack.c.h.b16 %v367
    %v1510 = vunpack.c.l.b16 %v368
    %v1511 = vunpack.c.h.b16 %v368
    %v1512 = vunpack.c.l.b16 %v369
    %v1513 = vunpack.c.h.b16 %v369
    %v1514 = vunpack.c.l.b16 %v370
    %v1515 = vunpack.c.h.b16 %v370
    %v1516 = vunpack.c.l.b16 %v371
    %v1517 = vunpack.c.h.b16 %v371
    %v1518 = vunpack.c.l.b16 %v372
    %v1519 = vunpack.c.h.b16 %v372
    %v1520 = vunpack.c.l.b16 %v373
    %v1521 = vunpack.c.h.b16 %v373
    %v1522 = vunpack.c.l.b16 %v374
    %v1523 = vunpack.c.h.b16 %v374
    %v1524 = vunpack.c.l.b16 %v375
    %v1525 = vunpack.c.h.b16 %v375
    %v1526 = vunpack.c.l.b16 %v376
    %v1527 = vunpack.c.h.b16 %v376
    %v1528 = vunpack.c.l.b16 %v377
    %v1529 = vunpack.c.h.b16 %v377
    %v1530 = vunpack.c.l.b16 %v378
    %v1531 = vunpack.c.h.b16 %v378
    %v1532 = vunpack.c.l.b16 %v379
    %v1533 = vunpack.c.h.b16 %v379
    %v1534 = vunpack.c.l.b16 %v380
    %v1535 = vunpack.c.h.b16 %v380
    %v1536 = vunpack.c.l.b16 %v381
    %v1537 = vunpack.c.h.b16 %v381
    %v1538 = vunpack.c.l.b16 %v382
    %v1539 = vunpack.c.h.b16 %v382
    %v1540 = vunpack.c.l.b16 %v383
    %v1541 = vunpack.c.h.b16 %v383
    %v1542 = vunpack.c.l.b16 %v384
    %v1543 = vunpack.c.h.b16 %v384
    %v1544 = vunpack.c.l.b16 %v385
    %v1545 = vunpack.c.h.b16 %v385
    %v1546 = vunpack.c.l.b16 %v386
    %v1547 = vunpack.c.h.b16 %v386
    %v1548 = vunpack.c.l.b16 %v387
    %v1549 = vunpack.c.h.b16 %v387
    %v1550 = vunpack.c.l.b16 %v388
    %v1551 = vunpack.c.h.b16 %v388
    %v1552 = vunpack.c.l.b16 %v389
    %v1553 = vunpack.c.h.b16 %v389
    %v1554 = vunpack.c.l.b16 %v390
    %v1555 = vunpack.c.h.b16 %v390
    %v1556 = vunpack.c.l.b16 %v391
    %v1557 = vunpack.c.h.b16 %v391
    %v1558 = vunpack.c.l.b16 %v392
    %v1559 = vunpack.c.h.b16 %v392
    %v1560 = vunpack.c.l.b16 %v393
    %v1561 = vunpack.c.h.b16 %v393
    %v1562 = vunpack.c.l.b16 %v394
    %v1563 = vunpack.c.h.b16 %v394
    %v1564 = vunpack.c.l.b16 %v395
    %v1565 = vunpack.c.h.b16 %v395
    %v1566 = vunpack.c.l.b16 %v396
    %v1567 = vunpack.c.h.b16 %v396
    %v1568 = vunpack.c.l.b16 %v397
    %v1569 = vunpack.c.h.b16 %v397
    %v1570 = vunpack.c.l.b16 %v398
    %v1571 = vunpack.c.h.b16 %v398
    %v1572 = vunpack.c.l.b16 %v399
    %v1573 = vunpack.c.h.b16 %v399
    %v1574 = vunpack.c.l.b16 %v400
    %v1575 = vunpack.c.h.b16 %v400
    %v1576 = vunpack.c.l.b16 %v401
    %v1577 = vunpack.c.h.b16 %v401
    %v1578 = vunpack.c.l.b16 %v402
    %v1579 = vunpack.c.h.b16 %v402
    %v1580 = vunpack.c.l.b16 %v403
    %v1581 = vunpack.c.h.b16 %v403
    %v1582 = vunpack.c.l.b16 %v404
    %v1583 = vunpack.c.h.b16 %v404
    %v1584 = vunpack.c.l.b16 %v405
    %v1585 = vunpack.c.h.b16 %v405
    %v1586 = vunpack.c.l.b16 %v406
    %v1587 = vunpack.c.h.b16 %v406
    %v1588 = vunpack.c.l.b16 %v407
    %v1589 = vunpack.c.h.b16 %v407
    %v1590 = vunpack.c.l.b16 %v408
    %v1591 = vunpack.c.h.b16 %v408
    %v1592 = vunpack.c.l.b16 %v409
    %v1593 = vunpack.c.h.b16 %v409
    %v1594 = vunpack.c.l.b16 %v410
    %v1595 = vunpack.c.h.b16 %v410
    %v1596 = vunpack.c.l.b16 %v411
    %v1597 = vunpack.c.h.b16 %v411
    %v1598 = vunpack.c.l.b16 %v412
    %v1599 = vunpack.c.h.b16 %v412
    %v1600 = vunpack.c.l.b16 %v413
    %v1601 = vunpack.c.h.b16 %v413
    %v1602 = vunpack.c.l.b16 %v414
    %v1603 = vunpack.c.h.b16 %v414
    %v1604 = vunpack.c.l.b16 %v415
    %v1605 = vunpack.c.h.b16 %v415
    %v1606 = vunpack.c.l.b16 %v416
    %v1607 = vunpack.c.h.b16 %v416
    %v1608 = vunpack.c.l.b16 %v417
    %v1609 = vunpack.c.h.b16 %v417
    %v1610 = vunpack.c.l.b16 %v418
    %v1611 = vunpack.c.h.b16 %v418
    %v1612 = vunpack.c.l.b16 %v419
    %v1613 = vunpack.c.h.b16 %v419
    %v1614 = vunpack.c.l.b16 %v420
    %v1615 = vunpack.c.h.b16 %v420
    %v1616 = vunpack.c.l.b16 %v421
    %v1617 = vunpack.c.h.b16 %v421
    %v1618 = vunpack.c.l.b16 %v422
    %v1619 = vunpack.c.h.b16 %v422
    %v1620 = vunpack.c.l.b16 %v423
    %v1621 = vunpack.c.h.b16 %v423
    %v1622 = vunpack.c.l.b16 %v424
    %v1623 = vunpack.c.h.b16 %v424
    %v1624 = vunpack.c.l.b16 %v425
    %v1625 = vunpack.c.h.b16 %v425
    %v1626 = vunpack.c.l.b16 %v426
    %v1627 = vunpack.c.h.b16 %v426
    %v1628 = vunpack.c.l.b16 %v427
    %v1629 = vunpack.c.h.b16 %v427
    %v1630 = vunpack.c.l.b16 %v428
    %v1631 = vunpack.c.h.b16 %v428
    %v1632 = vunpack.c.l.b16 %v429
    %v1633 = vunpack.c.h.b16 %v429
    %v1634 = vunpack.c.l.b16 %v430
    %v1635 = vunpack.c.h.b16 %v430
    %v1636 = vunpack.c.l.b16 %v431
    %v1637 = vunpack.c.h.b16 %v431
    %v1638 = vunpack.c.l.b16 %v432
    %v1639 = vunpack.c.h.b16 %v432
    %v1640 = vunpack.c.l.b16 %v433
    %v1641 = vunpack.c.h.b16 %v433
    %v1642 = vunpack.c.l.b16 %v434
    %v1643 = vunpack.c.h.b16 %v434
    %v1644 = vunpack.c.l.b16 %v435
    %v1645 = vunpack.c.h.b16 %v435
    %v1646 = vunpack.c.l.b16 %v436
    %v1647 = vunpack.c.h.b16 %v436
    %v1648 = vunpack.c.l.b16 %v437
    %v1649 = vunpack.c.h.b16 %v437
    %v1650 = vunpack.c.l.b16 %v438
    %v1651 = vunpack.c.h.b16 %v438
    %v1652 = vunpack.c.l.b16 %v439
    %v1653 = vunpack.c.h.b16 %v439
    %v1654 = vunpack.c.l.b16 %v440
    %v1655 = vunpack.c.h.b16 %v440
    %v1656 = vunpack.c.l.b16 %v441
    %v1657 = vunpack.c.h.b16 %v441
    %v1658 = vunpack.c.l.b16 %v442
    %v1659 = vunpack.c.h.b16 %v442
    %v1660 = vunpack.c.l.b16 %v443
    %v1661 = vunpack.c.h.b16 %v443
    %v1662 = vunpack.c.l.b16 %v444
    %v1663 = vunpack.c.h.b16 %v444
    %v1664 = vunpack.c.l.b16 %v445
    %v1665 = vunpack.c.h.b16 %v445
    %v1666 = vunpack.c.l.b16 %v446
    %v1667 = vunpack.c.h.b16 %v446
    %v1668 = vunpack.c.l.b16 %v447
    %v1669 = vunpack.c.h.b16 %v447
    %v1670 = vunpack.c.l.b16 %v448
    %v1671 = vunpack.c.h.b16 %v448
    %v1672 = vunpack.c.l.b16 %v449
    %v1673 = vunpack.c.h.b16 %v449
    %v1674 = vunpack.c.l.b16 %v450
    %v1675 = vunpack.c.h.b16 %v450
    %v1676 = vunpack.c.l.b16 %v451
    %v1677 = vunpack.c.h.b16 %v451
    %v1678 = vunpack.c.l.b16 %v452
    %v1679 = vunpack.c.h.b16 %v452
    %v1680 = vunpack.c.l.b16 %v453
    %v1681 = vunpack.c.h.b16 %v453
    %v1682 = vunpack.c.l.b16 %v454
    %v1683 = vunpack.c.h.b16 %v454
    %v1684 = vunpack.c.l.b16 %v455
    %v1685 = vunpack.c.h.b16 %v455
    %v1686 = vunpack.c.l.b16 %v456
    %v1687 = vunpack.c.h.b16 %v456
    %v1688 = vunpack.c.l.b16 %v457
    %v1689 = vunpack.c.h.b16 %v457
    %v1690 = vunpack.c.l.b16 %v458
    %v1691 = vunpack.c.h.b16 %v458
    %v1692 = vunpack.c.l.b16 %v459
    %v1693 = vunpack.c.h.b16 %v459
    %v1694 = vunpack.c.l.b16 %v460
    %v1695 = vunpack.c.h.b16 %v460
    %v1696 = vunpack.c.l.b16 %v461
    %v1697 = vunpack.c.h.b16 %v461
    %v1698 = vunpack.c.l.b16 %v462
    %v1699 = vunpack.c.h.b16 %v462
    %v1700 = vunpack.c.l.b16 %v463
    %v1701 = vunpack.c.h.b16 %v463
    %v1702 = vunpack.c.l.b16 %v464
    %v1703 = vunpack.c.h.b16 %v464
    %v1704 = vunpack.c.l.b16 %v465
    %v1705 = vunpack.c.h.b16 %v465
    %v1706 = vunpack.c.l.b16 %v466
    %v1707 = vunpack.c.h.b16 %v466
    %v1708 = vunpack.c.l.b16 %v467
    %v1709 = vunpack.c.h.b16 %v467
    %v1710 = vunpack.c.l.b16 %v468
    %v1711 = vunpack.c.h.b16 %v468
    %v1712 = vunpack.c.l.b16 %v469
    %v1713 = vunpack.c.h.b16 %v469
    %v1714 = vunpack.c.l.b16 %v470
    %v1715 = vunpack.c.h.b16 %v470
    %v1716 = vunpack.c.l.b16 %v471
    %v1717 = vunpack.c.h.b16 %v471
    %v1718 = vunpack.c.l.b16 %v472
    %v1719 = vunpack.c.h.b16 %v472
    %v1720 = vunpack.c.l.b16 %v473
    %v1721 = vunpack.c.h.b16 %v473
    %v1722 = vunpack.c.l.b16 %v474
    %v1723 = vunpack.c.h.b16 %v474
    %v1724 = vunpack.c.l.b16 %v475
    %v1725 = vunpack.c.h.b16 %v475
    %v1726 = vunpack.c.l.b16 %v476
    %v1727 = vunpack.c.h.b16 %v476
    %v1728 = vunpack.c.l.b16 %v477
    %v1729 = vunpack.c.h.b16 %v477
    %v1730 = vunpack.c.l.b16 %v478
    %v1731 = vunpack.c.h.b16 %v478
    %v1732 = vunpack.c.l.b16 %v479
    %v1733 = vunpack.c.h.b16 %v479
    %v1734 = vunpack.c.l.b16 %v480
    %v1735 = vunpack.c.h.b16 %v480
    %v1736 = vunpack.c.l.b16 %v481
    %v1737 = vunpack.c.h.b16 %v481
    %v1738 = vunpack.c.l.b16 %v482
    %v1739 = vunpack.c.h.b16 %v482
    %v1740 = vunpack.c.l.b16 %v483
    %v1741 = vunpack.c.h.b16 %v483
    %v1742 = vunpack.c.l.b16 %v484
    %v1743 = vunpack.c.h.b16 %v484
    %v1744 = vunpack.c.l.b16 %v485
    %v1745 = vunpack.c.h.b16 %v485
    %v1746 = vunpack.c.l.b16 %v486
    %v1747 = vunpack.c.h.b16 %v486
    %v1748 = vunpack.c.l.b16 %v487
    %v1749 = vunpack.c.h.b16 %v487
    %v1750 = vunpack.c.l.b16 %v488
    %v1751 = vunpack.c.h.b16 %v488
    %v1752 = vunpack.c.l.b16 %v489
    %v1753 = vunpack.c.h.b16 %v489
    %v1754 = vunpack.c.l.b16 %v490
    %v1755 = vunpack.c.h.b16 %v490
    %v1756 = vunpack.c.l.b16 %v491
    %v1757 = vunpack.c.h.b16 %v491
    %v1758 = vunpack.c.l.b16 %v492
    %v1759 = vunpack.c.h.b16 %v492
    %v1760 = vunpack.c.l.b16 %v493
    %v1761 = vunpack.c.h.b16 %v493
    %v1762 = vunpack.c.l.b16 %v494
    %v1763 = vunpack.c.h.b16 %v494
    %v1764 = vunpack.c.l.b16 %v495
    %v1765 = vunpack.c.h.b16 %v495
    %v1766 = vunpack.c.l.b16 %v496
    %v1767 = vunpack.c.h.b16 %v496
    %v1768 = vunpack.c.l.b16 %v497
    %v1769 = vunpack.c.h.b16 %v497
    %v1770 = vunpack.c.l.b16 %v498
    %v1771 = vunpack.c.h.b16 %v498
    %v1772 = vunpack.c.l.b16 %v499
    %v1773 = vunpack.c.h.b16 %v499
    %v1774 = vunpack.c.l.b16 %v500
    %v1775 = vunpack.c.h.b16 %v500
    %v1776 = vunpack.c.l.b16 %v501
    %v1777 = vunpack.c.h.b16 %v501
    %v1778 = vunpack.c.l.b16 %v502
    %v1779 = vunpack.c.h.b16 %v502
    %v1780 = vunpack.c.l.b16 %v503
    %v1781 = vunpack.c.h.b16 %v503
    %v1782 = vunpack.c.l.b16 %v504
    %v1783 = vunpack.c.h.b16 %v504
    %v1784 = vunpack.c.l.b16 %v505
    %v1785 = vunpack.c.h.b16 %v505
    %v1786 = vunpack.c.l.b16 %v506
    %v1787 = vunpack.c.h.b16 %v506
    %v1788 = vunpack.c.l.b16 %v507
    %v1789 = vunpack.c.h.b16 %v507
    %v1790 = vunpack.c.l.b16 %v508
    %v1791 = vunpack.c.h.b16 %v508
    %v1792 = vunpack.c.l.b16 %v509
    %v1793 = vunpack.c.h.b16 %v509
    %v1794 = vunpack.c.l.b16 %v510
    %v1795 = vunpack.c.h.b16 %v510
    %v1796 = vunpack.c.l.b16 %v511
    %v1797 = vunpack.c.h.b16 %v511
    %v1798 = vunpack.c.l.b16 %v512
    %v1799 = vunpack.c.h.b16 %v512
    %v1800 = vunpack.c.l.b16 %v513
    %v1801 = vunpack.c.h.b16 %v513
    %v1802 = vunpack.c.l.b16 %v514
    %v1803 = vunpack.c.h.b16 %v514
    %v1804 = vunpack.c.l.b16 %v515
    %v1805 = vunpack.c.h.b16 %v515
    %v1806 = vunpack.c.l.b16 %v516
    %v1807 = vunpack.c.h.b16 %v516
    %v1808 = vunpack.c.l.b16 %v517
    %v1809 = vunpack.c.h.b16 %v517
    %v1810 = vunpack.c.l.b16 %v518
    %v1811 = vunpack.c.h.b16 %v518
    %v1812 = vunpack.c.l.b16 %v519
    %v1813 = vunpack.c.h.b16 %v519
    %v1814 = vunpack.c.l.b16 %v520
    %v1815 = vunpack.c.h.b16 %v520
    %v1816 = vunpack.c.l.b16 %v521
    %v1817 = vunpack.c.h.b16 %v521
    %v1818 = vunpack.c.l.b16 %v522
    %v1819 = vunpack.c.h.b16 %v522
    %v1820 = vunpack.c.l.b16 %v523
    %v1821 = vunpack.c.h.b16 %v523
    %v1822 = vunpack.c.l.b16 %v524
    %v1823 = vunpack.c.h.b16 %v524
    %v1824 = vunpack.c.l.b16 %v525
    %v1825 = vunpack.c.h.b16 %v525
    %v1826 = vunpack.c.l.b16 %v526
    %v1827 = vunpack.c.h.b16 %v526
    %v1828 = vunpack.c.l.b16 %v527
    %v1829 = vunpack.c.h.b16 %v527
    %v1830 = vunpack.c.l.b16 %v528
    %v1831 = vunpack.c.h.b16 %v528
    %v1832 = vunpack.c.l.b16 %v529
    %v1833 = vunpack.c.h.b16 %v529
    %v1834 = vunpack.c.l.b16 %v530
    %v1835 = vunpack.c.h.b16 %v530
    %v1836 = vunpack.c.l.b16 %v531
    %v1837 = vunpack.c.h.b16 %v531
    %v1838 = vunpack.c.l.b16 %v532
    %v1839 = vunpack.c.h.b16 %v532
    %v1840 = vunpack.c.l.b16 %v533
    %v1841 = vunpack.c.h.b16 %v533
    %v1842 = vunpack.c.l.b16 %v534
    %v1843 = vunpack.c.h.b16 %v534
    %v1844 = vunpack.c.l.b16 %v535
    %v1845 = vunpack.c.h.b16 %v535
    %v1846 = vunpack.c.l.b16 %v536
    %v1847 = vunpack.c.h.b16 %v536
    %v1848 = vunpack.c.l.b16 %v537
    %v1849 = vunpack.c.h.b16 %v537
    %v1850 = vunpack.c.l.b16 %v538
    %v1851 = vunpack.c.h.b16 %v538
    %v1852 = vunpack.c.l.b16 %v539
    %v1853 = vunpack.c.h.b16 %v539
    %v1854 = vunpack.c.l.b16 %v540
    %v1855 = vunpack.c.h.b16 %v540
    %v1856 = vunpack.c.l.b16 %v541
    %v1857 = vunpack.c.h.b16 %v541
    %v1858 = vunpack.c.l.b16 %v542
    %v1859 = vunpack.c.h.b16 %v542
    %v1860 = vunpack.c.l.b16 %v543
    %v1861 = vunpack.c.h.b16 %v543
    %v1862 = vunpack.c.l.b16 %v544
    %v1863 = vunpack.c.h.b16 %v544
    %v1864 = vunpack.c.l.b16 %v545
    %v1865 = vunpack.c.h.b16 %v545
    %v1866 = vunpack.c.l.b16 %v546
    %v1867 = vunpack.c.h.b16 %v546
    %v1868 = vunpack.c.l.b16 %v547
    %v1869 = vunpack.c.h.b16 %v547
    %v1870 = vunpack.c.l.b16 %v548
    %v1871 = vunpack.c.h.b16 %v548
    %v1872 = vunpack.c.l.b16 %v549
    %v1873 = vunpack.c.h.b16 %v549
    %v1874 = vunpack.c.l.b16 %v550
    %v1875 = vunpack.c.h.b16 %v550
    %v1876 = vunpack.c.l.b16 %v551
    %v1877 = vunpack.c.h.b16 %v551
    %v1878 = vunpack.c.l.b16 %v552
    %v1879 = vunpack.c.h.b16 %v552
    %v1880 = vunpack.c.l.b16 %v553
    %v1881 = vunpack.c.h.b16 %v553
    %v1882 = vunpack.c.l.b16 %v554
    %v1883 = vunpack.c.h.b16 %v554
    %v1884 = vunpack.c.l.b16 %v555
    %v1885 = vunpack.c.h.b16 %v555
    %v1886 = vunpack.c.l.b16 %v556
    %v1887 = vunpack.c.h.b16 %v556
    %v1888 = vunpack.c.l.b16 %v557
    %v1889 = vunpack.c.h.b16 %v557
    %v1890 = vunpack.c.l.b16 %v558
    %v1891 = vunpack.c.h.b16 %v558
    %v1892 = vunpack.c.l.b16 %v559
    %v1893 = vunpack.c.h.b16 %v559
    %v1894 = vunpack.c.l.b16 %v560
    %v1895 = vunpack.c.h.b16 %v560
    %v1896 = vunpack.c.l.b16 %v561
    %v1897 = vunpack.c.h.b16 %v561
    %v1898 = vunpack.c.l.b16 %v562
    %v1899 = vunpack.c.h.b16 %v562
    %v1900 = vunpack.c.l.b16 %v563
    %v1901 = vunpack.c.h.b16 %v563
    %v1902 = vunpack.c.l.b16 %v564
    %v1903 = vunpack.c.h.b16 %v564
    %v1904 = vunpack.c.l.b16 %v565
    %v1905 = vunpack.c.h.b16 %v565
    %v1906 = vunpack.c.l.b16 %v566
    %v1907 = vunpack.c.h.b16 %v566
    %v1908 = vunpack.c.l.b16 %v567
    %v1909 = vunpack.c.h.b16 %v567
    %v1910 = vunpack.c.l.b16 %v568
    %v1911 = vunpack.c.h.b16 %v568
    %v1912 = vunpack.c.l.b16 %v569
    %v1913 = vunpack.c.h.b16 %v569
    %v1914 = vunpack.c.l.b16 %v570
    %v1915 = vunpack.c.h.b16 %v570
    %v1916 = vunpack.c.l.b16 %v571
    %v1917 = vunpack.c.h.b16 %v571
    %v1918 = vunpack.c.l.b16 %v572
    %v1919 = vunpack.c.h.b16 %v572
    %v1920 = vunpack.c.l.b16 %v573
    %v1921 = vunpack.c.h.b16 %v573
    %v1922 = vunpack.c.l.b16 %v574
    %v1923 = vunpack.c.h.b16 %v574
    %v1924 = vunpack.c.l.b16 %v575
    %v1925 = vunpack.c.h.b16 %v575
    %v1926 = vunpack.c.l.b16 %v576
    %v1927 = vunpack.c.h.b16 %v576
    %v1928 = vunpack.c.l.b16 %v577
    %v1929 = vunpack.c.h.b16 %v577
    %v1930 = vunpack.c.l.b16 %v578
    %v1931 = vunpack.c.h.b16 %v578
    %v1932 = vunpack.c.l.b16 %v579
    %v1933 = vunpack.c.h.b16 %v579
    %v1934 = vunpack.c.l.b16 %v580
    %v1935 = vunpack.c.h.b16 %v580
    %v1936 = vunpack.c.l.b16 %v581
    %v1937 = vunpack.c.h.b16 %v581
    %v1938 = vunpack.c.l.b16 %v582
    %v1939 = vunpack.c.h.b16 %v582
    %v1940 = vunpack.c.l.b16 %v583
    %v1941 = vunpack.c.h.b16 %v583
    %v1942 = vunpack.c.l.b16 %v584
    %v1943 = vunpack.c.h.b16 %v584
    %v1944 = vunpack.c.l.b16 %v585
    %v1945 = vunpack.c.h.b16 %v585
    %v1946 = vunpack.c.l.b16 %v586
    %v1947 = vunpack.c.h.b16 %v586
    %v1948 = vunpack.c.l.b16 %v587
    %v1949 = vunpack.c.h.b16 %v587
    %v1950 = vunpack.c.l.b16 %v588
    %v1951 = vunpack.c.h.b16 %v588
    %v1952 = vunpack.c.l.b16 %v589
    %v1953 = vunpack.c.h.b16 %v589
    %v1954 = vunpack.c.l.b16 %v590
    %v1955 = vunpack.c.h.b16 %v590
    %v1956 = vunpack.c.l.b16 %v591
    %v1957 = vunpack.c.h.b16 %v591
    %v1958 = vunpack.c.l.b16 %v592
    %v1959 = vunpack.c.h.b16 %v592
    %v1960 = vunpack.c.l.b16 %v593
    %v1961 = vunpack.c.h.b16 %v593
    %v1962 = vunpack.c.l.b16 %v594
    %v1963 = vunpack.c.h.b16 %v594
    %v1964 = vunpack.c.l.b16 %v595
    %v1965 = vunpack.c.h.b16 %v595
    %v1966 = vunpack.c.l.b16 %v596
    %v1967 = vunpack.c.h.b16 %v596
    %v1968 = vunpack.c.l.b16 %v597
    %v1969 = vunpack.c.h.b16 %v597
    %v1970 = vunpack.c.l.b16 %v598
    %v1971 = vunpack.c.h.b16 %v598
    %v1972 = vunpack.c.l.b16 %v599
    %v1973 = vunpack.c.h.b16 %v599
    %v1974 = vunpack.c.l.b16 %v600
    %v1975 = vunpack.c.h.b16 %v600
    %v1976 = vunpack.c.l.b16 %v601
    %v1977 = vunpack.c.h.b16 %v601
    %v1978 = vunpack.c.l.b16 %v602
    %v1979 = vunpack.c.h.b16 %v602
    %v1980 = vunpack.c.l.b16 %v603
    %v1981 = vunpack.c.h.b16 %v603
    %v1982 = vunpack.c.l.b16 %v604
    %v1983 = vunpack.c.h.b16 %v604
    %v1984 = vunpack.c.l.b16 %v605
    %v1985 = vunpack.c.h.b16 %v605
    %v1986 = vunpack.c.l.b16 %v606
    %v1987 = vunpack.c.h.b16 %v606
    %v1988 = vunpack.c.l.b16 %v607
    %v1989 = vunpack.c.h.b16 %v607
    %v1990 = vunpack.c.l.b16 %v608
    %v1991 = vunpack.c.h.b16 %v608
    %v1992 = vunpack.c.l.b16 %v609
    %v1993 = vunpack.c.h.b16 %v609
    %v1994 = vunpack.c.l.b16 %v610
    %v1995 = vunpack.c.h.b16 %v610
    %v1996 = vunpack.c.l.b16 %v611
    %v1997 = vunpack.c.h.b16 %v611
    %v1998 = vunpack.c.l.b16 %v612
    %v1999 = vunpack.c.h.b16 %v612
    %v2000 = vunpack.c.l.b16 %v613
    %v2001 = vunpack.c.h.b16 %v613
    %v2002 = vunpack.c.l.b16 %v614
    %v2003 = vunpack.c.h.b16 %v614
    %v2004 = vunpack.c.l.b16 %v615
    %v2005 = vunpack.c.h.b16 %v615
    %v2006 = vunpack.c.l.b16 %v616
    %v2007 = vunpack.c.h.b16 %v616
    %v2008 = vunpack.c.l.b16 %v617
    %v2009 = vunpack.c.h.b16 %v617
    %v2010 = vunpack.c.l.b16 %v618
    %v2011 = vunpack.c.h.b16 %v618
    %v2012 = vunpack.c.l.b16 %v619
    %v2013 = vunpack.c.h.b16 %v619
    %v2014 = vunpack.c.l.b16 %v620
    %v2015 = vunpack.c.h.b16 %v620
    %v2016 = vunpack.c.l.b16 %v621
    %v2017 = vunpack.c.h.b16 %v621
    %v2018 = vunpack.c.l.b16 %v622
    %v2019 = vunpack.c.h.b16 %v622
    %v2020 = vunpack.c.l.b16 %v623
    %v2021 = vunpack.c.h.b16 %v623
    %v2022 = vunpack.c.l.b16 %v624
    %v2023 = vunpack.c.h.b16 %v624
    %v2024 = vunpack.c.l.b16 %v625
    %v2025 = vunpack.c.h.b16 %v625
    %v2026 = vunpack.c.l.b16 %v626
    %v2027 = vunpack.c.h.b16 %v626
    %v2028 = vunpack.c.l.b16 %v627
    %v2029 = vunpack.c.h.b16 %v627
    %v2030 = vunpack.c.l.b16 %v628
    %v2031 = vunpack.c.h.b16 %v628
    %v2032 = vunpack.c.l.b16 %v629
    %v2033 = vunpack.c.h.b16 %v629
    %v2034 = vunpack.c.l.b16 %v630
    %v2035 = vunpack.c.h.b16 %v630
    %v2036 = vunpack.c.l.b16 %v631
    %v2037 = vunpack.c.h.b16 %v631
    %v2038 = vunpack.c.l.b16 %v632
    %v2039 = vunpack.c.h.b16 %v632
    %v2040 = vunpack.c.l.b16 %v633
    %v2041 = vunpack.c.h.b16 %v633
    %v2042 = vunpack.c.l.b16 %v634
    %v2043 = vunpack.c.h.b16 %v634
    %v2044 = vunpack.c.l.b16 %v635
    %v2045 = vunpack.c.h.b16 %v635
    %v2046 = vunpack.c.l.b16 %v636
    %v2047 = vunpack.c.h.b16 %v636
    %v2048 = vunpack.c.l.b16 %v637
    %v2049 = vunpack.c.h.b16 %v637
    %v2050 = vunpack.c.l.b16 %v638
    %v2051 = vunpack.c.h.b16 %v638
    %v2052 = vunpack.c.l.b16 %v639
    %v2053 = vunpack.c.h.b16 %v639
    %v2054 = vunpack.c.l.b16 %v640
    %v2055 = vunpack.c.h.b16 %v640
    %v2056 = vunpack.c.l.b16 %v641
    %v2057 = vunpack.c.h.b16 %v641
    %v2058 = vunpack.c.l.b16 %v642
    %v2059 = vunpack.c.h.b16 %v642
    %v2060 = vunpack.c.l.b16 %v643
    %v2061 = vunpack.c.h.b16 %v643
    %v2062 = vunpack.c.l.b16 %v644
    %v2063 = vunpack.c.h.b16 %v644
    %v2064 = vunpack.c.l.b16 %v645
    %v2065 = vunpack.c.h.b16 %v645
    %v2066 = vpack.c.b16 %v1130, %v1126
    %v2067 = vpack.c.b16 %v1131, %v1127
    %v2068 = vpack.c.b16 %v1132, %v1128
    %v2069 = vpack.c.b16 %v1133, %v1129
    %v2070 = vpack.c.b16 %v1138, %v1134
    %v2071 = vpack.c.b16 %v1139, %v1135
    %v2072 = vpack.c.b16 %v1140, %v1136
    %v2073 = vpack.c.b16 %v1141, %v1137
    %v2074 = vpack.c.b16 %v1146, %v1142
    %v2075 = vpack.c.b16 %v1147, %v1143
    %v2076 = vpack.c.b16 %v1148, %v1144
    %v2077 = vpack.c.b16 %v1149, %v1145
    %v2078 = vpack.c.b16 %v1154, %v1150
    %v2079 = vpack.c.b16 %v1155, %v1151
    %v2080 = vpack.c.b16 %v1156, %v1152
    %v2081 = vpack.c.b16 %v1157, %v1153
    %v2082 = vpack.c.b16 %v1162, %v1158
    %v2083 = vpack.c.b16 %v1163, %v1159
    %v2084 = vpack.c.b16 %v1164, %v1160
    %v2085 = vpack.c.b16 %v1165, %v1161
    %v2086 = vpack.c.b16 %v1170, %v1166
    %v2087 = vpack.c.b16 %v1171, %v1167
    %v2088 = vpack.c.b16 %v1172, %v1168
    %v2089 = vpack.c.b16 %v1173, %v1169
    %v2090 = vpack.c.b16 %v1178, %v1174
    %v2091 = vpack.c.b16 %v1179, %v1175
    %v2092 = vpack.c.b16 %v1180, %v1176
    %v2093 = vpack.c.b16 %v1181, %v1177
    %v2094 = vpack.c.b16 %v1186, %v1182
    %v2095 = vpack.c.b16 %v1187, %v1183
    %v2096 = vpack.c.b16 %v1188, %v1184
    %v2097 = vpack.c.b16 %v1189, %v1185
    %v2098 = vpack.c.b16 %v1194, %v1190
    %v2099 = vpack.c.b16 %v1195, %v1191
    %v2100 = vpack.c.b16 %v1196, %v1192
    %v2101 = vpack.c.b16 %v1197, %v1193
    %v2102 = vpack.c.b16 %v1202, %v1198
    %v2103 = vpack.c.b16 %v1203, %v1199
    %v2104 = vpack.c.b16 %v1204, %v1200
    %v2105 = vpack.c.b16 %v1205, %v1201
    %v2106 = vpack.c.b16 %v1210, %v1206
    %v2107 = vpack.c.b16 %v1211, %v1207
    %v2108 = vpack.c.b16 %v1212, %v1208
    %v2109 = vpack.c.b16 %v1213, %v1209
    %v2110 = vpack.c.b16 %v1218, %v1214
    %v2111 = vpack.c.b16 %v1219, %v1215
    %v2112 = vpack.c.b16 %v1220, %v1216
    %v2113 = vpack.c.b16 %v1221, %v1217
    %v2114 = vpack.c.b16 %v1226, %v1222
    %v2115 = vpack.c.b16 %v1227, %v1223
    %v2116 = vpack.c.b16 %v1228, %v1224
    %v2117 = vpack.c.b16 %v1229, %v1225
    %v2118 = vpack.c.b16 %v1234, %v1230
    %v2119 = vpack.c.b16 %v1235, %v1231
    %v2120 = vpack.c.b16 %v1236, %v1232
    %v2121 = vpack.c.b16 %v1237, %v1233
    %v2122 = vpack.c.b16 %v1242, %v1238
    %v2123 = vpack.c.b16 %v1243, %v1239
    %v2124 = vpack.c.b16 %v1244, %v1240
    %v2125 = vpack.c.b16 %v1245, %v1241
    %v2126 = vpack.c.b16 %v1250, %v1246
    %v2127 = vpack.c.b16 %v1251, %v1247
    %v2128 = vpack.c.b16 %v1252, %v1248
    %v2129 = vpack.c.b16 %v1253, %v1249
    %v2130 = vpack.c.b16 %v1258, %v1254
    %v2131 = vpack.c.b16 %v1259, %v1255
    %v2132 = vpack.c.b16 %v1260, %v1256
    %v2133 = vpack.c.b16 %v1261, %v1257
    %v2134 = vpack.c.b16 %v1266, %v1262
    %v2135 = vpack.c.b16 %v1267, %v1263
    %v2136 = vpack.c.b16 %v1268, %v1264
    %v2137 = vpack.c.b16 %v1269, %v1265
    %v2138 = vpack.c.b16 %v1274, %v1270
    %v2139 = vpack.c.b16 %v1275, %v1271
    %v2140 = vpack.c.b16 %v1276, %v1272
    %v2141 = vpack.c.b16 %v1277, %v1273
    %v2142 = vpack.c.b16 %v1282, %v1278
    %v2143 = vpack.c.b16 %v1283, %v1279
    %v2144 = vpack.c.b16 %v1284, %v1280
    %v2145 = vpack.c.b16 %v1285, %v1281
    %v2146 = vpack.c.b16 %v1290, %v1286
    %v2147 = vpack.c.b16 %v1291, %v1287
    %v2148 = vpack.c.b16 %v1292, %v1288
    %v2149 = vpack.c.b16 %v1293, %v1289
    %v2150 = vpack.c.b16 %v1298, %v1294
    %v2151 = vpack.c.b16 %v1299, %v1295
    %v2152 = vpack.c.b16 %v1300, %v1296
    %v2153 = vpack.c.b16 %v1301, %v1297
    %v2154 = vpack.c.b16 %v1306, %v1302
    %v2155 = vpack.c.b16 %v1307, %v1303
    %v2156 = vpack.c.b16 %v1308, %v1304
    %v2157 = vpack.c.b16 %v1309, %v1305
    %v2158 = vpack.c.b16 %v1314, %v1310
    %v2159 = vpack.c.b16 %v1315, %v1311
    %v2160 = vpack.c.b16 %v1316, %v1312
    %v2161 = vpack.c.b16 %v1317, %v1313
    %v2162 = vpack.c.b16 %v1322, %v1318
    %v2163 = vpack.c.b16 %v1323, %v1319
    %v2164 = vpack.c.b16 %v1324, %v1320
    %v2165 = vpack.c.b16 %v1325, %v1321
    %v2166 = vpack.c.b16 %v1330, %v1326
    %v2167 = vpack.c.b16 %v1331, %v1327
    %v2168 = vpack.c.b16 %v1332, %v1328
    %v2169 = vpack.c.b16 %v1333, %v1329
    %v2170 = vpack.c.b16 %v1338, %v1334
    %v2171 = vpack.c.b16 %v1339, %v1335
    %v2172 = vpack.c.b16 %v1340, %v1336
    %v2173 = vpack.c.b16 %v1341, %v1337
    %v2174 = vpack.c.b16 %v1346, %v1342
    %v2175 = vpack.c.b16 %v1347, %v1343
    %v2176 = vpack.c.b16 %v1348, %v1344
    %v2177 = vpack.c.b16 %v1349, %v1345
    %v2178 = vpack.c.b16 %v1354, %v1350
    %v2179 = vpack.c.b16 %v1355, %v1351
    %v2180 = vpack.c.b16 %v1356, %v1352
    %v2181 = vpack.c.b16 %v1357, %v1353
    %v2182 = vpack.c.b16 %v1362, %v1358
    %v2183 = vpack.c.b16 %v1363, %v1359
    %v2184 = vpack.c.b16 %v1364, %v1360
    %v2185 = vpack.c.b16 %v1365, %v1361
    %v2186 = vpack.c.b16 %v1370, %v1366
    %v2187 = vpack.c.b16 %v1371, %v1367
    %v2188 = vpack.c.b16 %v1372, %v1368
    %v2189 = vpack.c.b16 %v1373, %v1369
    %v2190 = vpack.c.b16 %v1378, %v1374
    %v2191 = vpack.c.b16 %v1379, %v1375
    %v2192 = vpack.c.b16 %v1380, %v1376
    %v2193 = vpack.c.b16 %v1381, %v1377
    %v2194 = vpack.c.b16 %v1386, %v1382
    %v2195 = vpack.c.b16 %v1387, %v1383
    %v2196 = vpack.c.b16 %v1388, %v1384
    %v2197 = vpack.c.b16 %v1389, %v1385
    %v2198 = vpack.c.b16 %v1394, %v1390
    %v2199 = vpack.c.b16 %v1395, %v1391
    %v2200 = vpack.c.b16 %v1396, %v1392
    %v2201 = vpack.c.b16 %v1397, %v1393
    %v2202 = vpack.c.b16 %v1402, %v1398
    %v2203 = vpack.c.b16 %v1403, %v1399
    %v2204 = vpack.c.b16 %v1404, %v1400
    %v2205 = vpack.c.b16 %v1405, %v1401
    %v2206 = vpack.c.b16 %v1410, %v1406
    %v2207 = vpack.c.b16 %v1411, %v1407
    %v2208 = vpack.c.b16 %v1412, %v1408
    %v2209 = vpack.c.b16 %v1413, %v1409
    %v2210 = vpack.c.b16 %v1418, %v1414
    %v2211 = vpack.c.b16 %v1419, %v1415
    %v2212 = vpack.c.b16 %v1420, %v1416
    %v2213 = vpack.c.b16 %v1421, %v1417
    %v2214 = vpack.c.b16 %v1426, %v1422
    %v2215 = vpack.c.b16 %v1427, %v1423
    %v2216 = vpack.c.b16 %v1428, %v1424
    %v2217 = vpack.c.b16 %v1429, %v1425
    %v2218 = vpack.c.b16 %v1434, %v1430
    %v2219 = vpack.c.b16 %v1435, %v1431
    %v2220 = vpack.c.b16 %v1436, %v1432
    %v2221 = vpack.c.b16 %v1437, %v1433
    %v2222 = vpack.c.b16 %v1442, %v1438
    %v2223 = vpack.c.b16 %v1443, %v1439
    %v2224 = vpack.c.b16 %v1444, %v1440
    %v2225 = vpack.c.b16 %v1445, %v1441
    %v2226 = vpack.c.b16 %v1450, %v1446
    %v2227 = vpack.c.b16 %v1451, %v1447
    %v2228 = vpack.c.b16 %v1452, %v1448
    %v2229 = vpack.c.b16 %v1453, %v1449
    %v2230 = vpack.c.b16 %v1458, %v1454
    %v2231 = vpack.c.b16 %v1459, %v1455
    %v2232 = vpack.c.b16 %v1460, %v1456
    %v2233 = vpack.c.b16 %v1461, %v1457
    %v2234 = vpack.c.b16 %v1466, %v1462
    %v2235 = vpack.c.b16 %v1467, %v1463
    %v2236 = vpack.c.b16 %v1468, %v1464
    %v2237 = vpack.c.b16 %v1469, %v1465
    %v2238 = vpack.c.b16 %v1474, %v1470
    %v2239 = vpack.c.b16 %v1475, %v1471
    %v2240 = vpack.c.b16 %v1476, %v1472
    %v2241 = vpack.c.b16 %v1477, %v1473
    %v2242 = vpack.c.b16 %v1482, %v1478
    %v2243 = vpack.c.b16 %v1483, %v1479
    %v2244 = vpack.c.b16 %v1484, %v1480
    %v2245 = vpack.c.b16 %v1485, %v1481
    %v2246 = vpack.c.b16 %v1490, %v1486
    %v2247 = vpack.c.b16 %v1491, %v1487
    %v2248 = vpack.c.b16 %v1492, %v1488
    %v2249 = vpack.c.b16 %v1493, %v1489
    %v2250 = vpack.c.b16 %v1498, %v1494
    %v2251 = vpack.c.b16 %v1499, %v1495
    %v2252 = vpack.c.b16 %v1500, %v1496
    %v2253 = vpack.c.b16 %v1501, %v1497
    %v2254 = vpack.c.b16 %v1506, %v1502
    %v2255 = vpack.c.b16 %v1507, %v1503
    %v2256 = vpack.c.b16 %v1508, %v1504
    %v2257 = vpack.c.b16 %v1509, %v1505
    %v2258 = vpack.c.b16 %v1514, %v1510
    %v2259 = vpack.c.b16 %v1515, %v1511
    %v2260 = vpack.c.b16 %v1516, %v1512
    %v2261 = vpack.c.b16 %v1517, %v1513
    %v2262 = vpack.c.b16 %v1522, %v1518
    %v2263 = vpack.c.b16 %v1523, %v1519
    %v2264 = vpack.c.b16 %v1524, %v1520
    %v2265 = vpack.c.b16 %v1525, %v1521
    %v2266 = vpack.c.b16 %v1530, %v1526
    %v2267 = vpack.c.b16 %v1531, %v1527
    %v2268 = vpack.c.b16 %v1532, %v1528
    %v2269 = vpack.c.b16 %v1533, %v1529
    %v2270 = vpack.c.b16 %v1538, %v1534
    %v2271 = vpack.c.b16 %v1539, %v1535
    %v2272 = vpack.c.b16 %v1540, %v1536
    %v2273 = vpack.c.b16 %v1541, %v1537
    %v2274 = vpack.c.b16 %v1546, %v1542
    %v2275 = vpack.c.b16 %v1547, %v1543
    %v2276 = vpack.c.b16 %v1548, %v1544
    %v2277 = vpack.c.b16 %v1549, %v1545
    %v2278 = vpack.c.b16 %v1554, %v1550
    %v2279 = vpack.c.b16 %v1555, %v1551
    %v2280 = vpack.c.b16 %v1556, %v1552
    %v2281 = vpack.c.b16 %v1557, %v1553
    %v2282 = vpack.c.b16 %v1562, %v1558
    %v2283 = vpack.c.b16 %v1563, %v1559
    %v2284 = vpack.c.b16 %v1564, %v1560
    %v2285 = vpack.c.b16 %v1565, %v1561
    %v2286 = vpack.c.b16 %v1570, %v1566
    %v2287 = vpack.c.b16 %v1571, %v1567
    %v2288 = vpack.c.b16 %v1572, %v1568
    %v2289 = vpack.c.b16 %v1573, %v1569
    %v2290 = vpack.c.b16 %v1578, %v1574
    %v2291 = vpack.c.b16 %v1579, %v1575
    %v2292 = vpack.c.b16 %v1580, %v1576
    %v2293 = vpack.c.b16 %v1581, %v1577
    %v2294 = vpack.c.b16 %v1586, %v1582
    %v2295 = vpack.c.b16 %v1587, %v1583
    %v2296 = vpack.c.b16 %v1588, %v1584
    %v2297 = vpack.c.b16 %v1589, %v1585
    %v2298 = vpack.c.b16 %v1594, %v1590
    %v2299 = vpack.c.b16 %v1595, %v1591
    %v2300 = vpack.c.b16 %v1596, %v1592
    %v2301 = vpack.c.b16 %v1597, %v1593
    %v2302 = vpack.c.b16 %v1602, %v1598
    %v2303 = vpack.c.b16 %v1603, %v1599
    %v2304 = vpack.c.b16 %v1604, %v1600
    %v2305 = vpack.c.b16 %v1605, %v1601
    %v2306 = vpack.c.b16 %v1610, %v1606
    %v2307 = vpack.c.b16 %v1611, %v1607
    %v2308 = vpack.c.b16 %v1612, %v1608
    %v2309 = vpack.c.b16 %v1613, %v1609
    %v2310 = vpack.c.b16 %v1618, %v1614
    %v2311 = vpack.c.b16 %v1619, %v1615
    %v2312 = vpack.c.b16 %v1620, %v1616
    %v2313 = vpack.c.b16 %v1621, %v1617
    %v2314 = vpack.c.b16 %v1626, %v1622
    %v2315 = vpack.c.b16 %v1627, %v1623
    %v2316 = vpack.c.b16 %v1628, %v1624
    %v2317 = vpack.c.b16 %v1629, %v1625
    %v2318 = vpack.c.b16 %v1634, %v1630
    %v2319 = vpack.c.b16 %v1635, %v1631
    %v2320 = vpack.c.b16 %v1636, %v1632
    %v2321 = vpack.c.b16 %v1637, %v1633
    %v2322 = vpack.c.b16 %v1642, %v1638
    %v2323 = vpack.c.b16 %v1643, %v1639
    %v2324 = vpack.c.b16 %v1644, %v1640
    %v2325 = vpack.c.b16 %v1645, %v1641
    %v2326 = vpack.c.b16 %v1650, %v1646
    %v2327 = vpack.c.b16 %v1651, %v1647
    %v2328 = vpack.c.b16 %v1652, %v1648
    %v2329 = vpack.c.b16 %v1653, %v1649
    %v2330 = vpack.c.b16 %v1658, %v1654
    %v2331 = vpack.c.b16 %v1659, %v1655
    %v2332 = vpack.c.b16 %v1660, %v1656
    %v2333 = vpack.c.b16 %v1661, %v1657
    %v2334 = vpack.c.b16 %v1666, %v1662
    %v2335 = vpack.c.b16 %v1667, %v1663
    %v2336 = vpack.c.b16 %v1668, %v1664
    %v2337 = vpack.c.b16 %v1669, %v1665
    %v2338 = vpack.c.b16 %v1674, %v1670
    %v2339 = vpack.c.b16 %v1675, %v1671
    %v2340 = vpack.c.b16 %v1676, %v1672
    %v2341 = vpack.c.b16 %v1677, %v1673
    %v2342 = vpack.c.b16 %v1682, %v1678
    %v2343 = vpack.c.b16 %v1683, %v1679
    %v2344 = vpack.c.b16 %v1684, %v1680
    %v2345 = vpack.c.b16 %v1685, %v1681
    %v2346 = vpack.c.b16 %v1690, %v1686
    %v2347 = vpack.c.b16 %v1691, %v1687
    %v2348 = vpack.c.b16 %v1692, %v1688
    %v2349 = vpack.c.b16 %v1693, %v1689
    %v2350 = vpack.c.b16 %v1698, %v1694
    %v2351 = vpack.c.b16 %v1699, %v1695
    %v2352 = vpack.c.b16 %v1700, %v1696
    %v2353 = vpack.c.b16 %v1701, %v1697
    %v2354 = vpack.c.b16 %v1706, %v1702
    %v2355 = vpack.c.b16 %v1707, %v1703
    %v2356 = vpack.c.b16 %v1708, %v1704
    %v2357 = vpack.c.b16 %v1709, %v1705
    %v2358 = vpack.c.b16 %v1714, %v1710
    %v2359 = vpack.c.b16 %v1715, %v1711
    %v2360 = vpack.c.b16 %v1716, %v1712
    %v2361 = vpack.c.b16 %v1717, %v1713
    %v2362 = vpack.c.b16 %v1722, %v1718
    %v2363 = vpack.c.b16 %v1723, %v1719
    %v2364 = vpack.c.b16 %v1724, %v1720
    %v2365 = vpack.c.b16 %v1725, %v1721
    %v2366 = vpack.c.b16 %v1730, %v1726
    %v2367 = vpack.c.b16 %v1731, %v1727
    %v2368 = vpack.c.b16 %v1732, %v1728
    %v2369 = vpack.c.b16 %v1733, %v1729
    %v2370 = vpack.c.b16 %v1738, %v1734
    %v2371 = vpack.c.b16 %v1739, %v1735
    %v2372 = vpack.c.b16 %v1740, %v1736
    %v2373 = vpack.c.b16 %v1741, %v1737
    %v2374 = vpack.c.b16 %v1746, %v1742
    %v2375 = vpack.c.b16 %v1747, %v1743
    %v2376 = vpack.c.b16 %v1748, %v1744
    %v2377 = vpack.c.b16 %v1749, %v1745
    %v2378 = vpack.c.b16 %v1754, %v1750
    %v2379 = vpack.c.b16 %v1755, %v1751
    %v2380 = vpack.c.b16 %v1756, %v1752
    %v2381 = vpack.c.b16 %v1757, %v1753
    %v2382 = vpack.c.b16 %v1762, %v1758
    %v2383 = vpack.c.b16 %v1763, %v1759
    %v2384 = vpack.c.b16 %v1764, %v1760
    %v2385 = vpack.c.b16 %v1765, %v1761
    %v2386 = vpack.c.b16 %v1770, %v1766
    %v2387 = vpack.c.b16 %v1771, %v1767
    %v2388 = vpack.c.b16 %v1772, %v1768
    %v2389 = vpack.c.b16 %v1773, %v1769
    %v2390 = vpack.c.b16 %v1778, %v1774
    %v2391 = vpack.c.b16 %v1779, %v1775
    %v2392 = vpack.c.b16 %v1780, %v1776
    %v2393 = vpack.c.b16 %v1781, %v1777
    %v2394 = vpack.c.b16 %v1786, %v1782
    %v2395 = vpack.c.b16 %v1787, %v1783
    %v2396 = vpack.c.b16 %v1788, %v1784
    %v2397 = vpack.c.b16 %v1789, %v1785
    %v2398 = vpack.c.b16 %v1794, %v1790
    %v2399 = vpack.c.b16 %v1795, %v1791
    %v2400 = vpack.c.b16 %v1796, %v1792
    %v2401 = vpack.c.b16 %v1797, %v1793
    %v2402 = vpack.c.b16 %v1802, %v1798
    %v2403 = vpack.c.b16 %v1803, %v1799
    %v2404 = vpack.c.b16 %v1804, %v1800
    %v2405 = vpack.c.b16 %v1805, %v1801
    %v2406 = vpack.c.b16 %v1810, %v1806
    %v2407 = vpack.c.b16 %v1811, %v1807
    %v2408 = vpack.c.b16 %v1812, %v1808
    %v2409 = vpack.c.b16 %v1813, %v1809
    %v2410 = vpack.c.b16 %v1818, %v1814
    %v2411 = vpack.c.b16 %v1819, %v1815
    %v2412 = vpack.c.b16 %v1820, %v1816
    %v2413 = vpack.c.b16 %v1821, %v1817
    %v2414 = vpack.c.b16 %v1826, %v1822
    %v2415 = vpack.c.b16 %v1827, %v1823
    %v2416 = vpack.c.b16 %v1828, %v1824
    %v2417 = vpack.c.b16 %v1829, %v1825
    %v2418 = vpack.c.b16 %v1834, %v1830
    %v2419 = vpack.c.b16 %v1835, %v1831
    %v2420 = vpack.c.b16 %v1836, %v1832
    %v2421 = vpack.c.b16 %v1837, %v1833
    %v2422 = vpack.c.b16 %v1842, %v1838
    %v2423 = vpack.c.b16 %v1843, %v1839
    %v2424 = vpack.c.b16 %v1844, %v1840
    %v2425 = vpack.c.b16 %v1845, %v1841
    %v2426 = vpack.c.b16 %v1850, %v1846
    %v2427 = vpack.c.b16 %v1851, %v1847
    %v2428 = vpack.c.b16 %v1852, %v1848
    %v2429 = vpack.c.b16 %v1853, %v1849
    %v2430 = vpack.c.b16 %v1858, %v1854
    %v2431 = vpack.c.b16 %v1859, %v1855
    %v2432 = vpack.c.b16 %v1860, %v1856
    %v2433 = vpack.c.b16 %v1861, %v1857
    %v2434 = vpack.c.b16 %v1866, %v1862
    %v2435 = vpack.c.b16 %v1867, %v1863
    %v2436 = vpack.c.b16 %v1868, %v1864
    %v2437 = vpack.c.b16 %v1869, %v1865
    %v2438 = vpack.c.b16 %v1874, %v1870
    %v2439 = vpack.c.b16 %v1875, %v1871
    %v2440 = vpack.c.b16 %v1876, %v1872
    %v2441 = vpack.c.b16 %v1877, %v1873
    %v2442 = vpack.c.b16 %v1882, %v1878
    %v2443 = vpack.c.b16 %v1883, %v1879
    %v2444 = vpack.c.b16 %v1884, %v1880
    %v2445 = vpack.c.b16 %v1885, %v1881
    %v2446 = vpack.c.b16 %v1890, %v1886
    %v2447 = vpack.c.b16 %v1891, %v1887
    %v2448 = vpack.c.b16 %v1892, %v1888
    %v2449 = vpack.c.b16 %v1893, %v1889
    %v2450 = vpack.c.b16 %v1898, %v1894
    %v2451 = vpack.c.b16 %v1899, %v1895
    %v2452 = vpack.c.b16 %v1900, %v1896
    %v2453 = vpack.c.b16 %v1901, %v1897
    %v2454 = vpack.c.b16 %v1906, %v1902
    %v2455 = vpack.c.b16 %v1907, %v1903
    %v2456 = vpack.c.b16 %v1908, %v1904
    %v2457 = vpack.c.b16 %v1909, %v1905
    %v2458 = vpack.c.b16 %v1914, %v1910
    %v2459 = vpack.c.b16 %v1915, %v1911
    %v2460 = vpack.c.b16 %v1916, %v1912
    %v2461 = vpack.c.b16 %v1917, %v1913
    %v2462 = vpack.c.b16 %v1922, %v1918
    %v2463 = vpack.c.b16 %v1923, %v1919
    %v2464 = vpack.c.b16 %v1924, %v1920
    %v2465 = vpack.c.b16 %v1925, %v1921
    %v2466 = vpack.c.b16 %v1930, %v1926
    %v2467 = vpack.c.b16 %v1931, %v1927
    %v2468 = vpack.c.b16 %v1932, %v1928
    %v2469 = vpack.c.b16 %v1933, %v1929
    %v2470 = vpack.c.b16 %v1938, %v1934
    %v2471 = vpack.c.b16 %v1939, %v1935
    %v2472 = vpack.c.b16 %v1940, %v1936
    %v2473 = vpack.c.b16 %v1941, %v1937
    %v2474 = vpack.c.b16 %v1946, %v1942
    %v2475 = vpack.c.b16 %v1947, %v1943
    %v2476 = vpack.c.b16 %v1948, %v1944
    %v2477 = vpack.c.b16 %v1949, %v1945
    %v2478 = vpack.c.b16 %v1954, %v1950
    %v2479 = vpack.c.b16 %v1955, %v1951
    %v2480 = vpack.c.b16 %v1956, %v1952
    %v2481 = vpack.c.b16 %v1957, %v1953
    %v2482 = vpack.c.b16 %v1962, %v1958
    %v2483 = vpack.c.b16 %v1963, %v1959
    %v2484 = vpack.c.b16 %v1964, %v1960
    %v2485 = vpack.c.b16 %v1965, %v1961
    %v2486 = vpack.c.b16 %v1970, %v1966
    %v2487 = vpack.c.b16 %v1971, %v1967
    %v2488 = vpack.c.b16 %v1972, %v1968
    %v2489 = vpack.c.b16 %v1973, %v1969
    %v2490 = vpack.c.b16 %v1978, %v1974
    %v2491 = vpack.c.b16 %v1979, %v1975
    %v2492 = vpack.c.b16 %v1980, %v1976
    %v2493 = vpack.c.b16 %v1981, %v1977
    %v2494 = vpack.c.b16 %v1986, %v1982
    %v2495 = vpack.c.b16 %v1987, %v1983
    %v2496 = vpack.c.b16 %v1988, %v1984
    %v2497 = vpack.c.b16 %v1989, %v1985
    %v2498 = vpack.c.b16 %v1994, %v1990
    %v2499 = vpack.c.b16 %v1995, %v1991
    %v2500 = vpack.c.b16 %v1996, %v1992
    %v2501 = vpack.c.b16 %v1997, %v1993
    %v2502 = vpack.c.b16 %v2002, %v1998
    %v2503 = vpack.c.b16 %v2003, %v1999
    %v2504 = vpack.c.b16 %v2004, %v2000
    %v2505 = vpack.c.b16 %v2005, %v2001
    %v2506 = vpack.c.b16 %v2010, %v2006
    %v2507 = vpack.c.b16 %v2011, %v2007
    %v2508 = vpack.c.b16 %v2012, %v2008
    %v2509 = vpack.c.b16 %v2013, %v2009
    %v2510 = vpack.c.b16 %v2018, %v2014
    %v2511 = vpack.c.b16 %v2019, %v2015
    %v2512 = vpack.c.b16 %v2020, %v2016
    %v2513 = vpack.c.b16 %v2021, %v2017
    %v2514 = vpack.c.b16 %v2026, %v2022
    %v2515 = vpack.c.b16 %v2027, %v2023
    %v2516 = vpack.c.b16 %v2028, %v2024
    %v2517 = vpack.c.b16 %v2029, %v2025
    %v2518 = vpack.c.b16 %v2034, %v2030
    %v2519 = vpack.c.b16 %v2035, %v2031
    %v2520 = vpack.c.b16 %v2036, %v2032
    %v2521 = vpack.c.b16 %v2037, %v2033
    %v2522 = vpack.c.b16 %v2042, %v2038
    %v2523 = vpack.c.b16 %v2043, %v2039
    %v2524 = vpack.c.b16 %v2044, %v2040
    %v2525 = vpack.c.b16 %v2045, %v2041
    %v2526 = vpack.c.b16 %v2050, %v2046
    %v2527 = vpack.c.b16 %v2051, %v2047
    %v2528 = vpack.c.b16 %v2052, %v2048
    %v2529 = vpack.c.b16 %v2053, %v2049
    %v2530 = vpack.c.b16 %v2058, %v2054
    %v2531 = vpack.c.b16 %v2059, %v2055
    %v2532 = vpack.c.b16 %v2060, %v2056
    %v2533 = vpack.c.b16 %v2061, %v2057
    %v2534 = vpack.c.b16 %v2062, %v2062
    %v2535 = vpack.c.b16 %v2063, %v2063
    %v2536 = vpack.c.b16 %v2064, %v2064
    %v2537 = vpack.c.b16 %v2065, %v2065
    %vm3006 = vcmask 678912
    %v3008 = vsel %vm3006, %v175, 0
    %vm3010 = vcmask 1040384
    %vm3011 = vcmask 1041408
    %v3012 = vsel %vm3010, 4294967295, 65535
    %v3013 = vsel %vm3011, %v3012, 0
    %v3015 = vand.u32 %v2534, %v3013
    %v3018 = vand.u32 %v2535, %v3013
    %v3021 = vand.u32 %v2536, %v3013
    %v3024 = vand.u32 %v2537, %v3013
    %3026 = vmatpush.bf16.msra.mxu0 %v2094
    %3027 = vmatpush.bf16.msra.mxu0 %v2090
    %3028 = vmatpush.bf16.msra.mxu0 %v2086
    %3029 = vmatpush.bf16.msra.mxu0 %v2082
    %3030 = vmatpush.bf16.msra.mxu0 %v2078
    %3031 = vmatpush.bf16.msra.mxu0 %v2074
    %3032 = vmatpush.bf16.msra.mxu0 %v2070
    %3033 = vmatpush.bf16.msra.mxu0 %v2066
    %3034 = vmatmul.bf16.gmra.mxu0 %v161
    %v3035 = vpop.f32.mrf.mxu0
    %v3036 = vadd.f32 %v648, %v3035
    %v3037 = vpop.f32.mrf.mxu0
    %v3038 = vadd.f32 %v648, %v3037
    %3039 = vdwg.mxu0
    %3040 = vmatpush.bf16.msra.mxu0 %v2126
    %3041 = vmatpush.bf16.msra.mxu0 %v2122
    %3042 = vmatpush.bf16.msra.mxu0 %v2118
    %3043 = vmatpush.bf16.msra.mxu0 %v2114
    %3044 = vmatpush.bf16.msra.mxu0 %v2110
    %3045 = vmatpush.bf16.msra.mxu0 %v2106
    %3046 = vmatpush.bf16.msra.mxu0 %v2102
    %3047 = vmatpush.bf16.msra.mxu0 %v2098
    %3048 = vmatmul.bf16.gmra.mxu0 %v162
    %v3049 = vpop.f32.mrf.mxu0
    %v3050 = vadd.f32 %v3036, %v3049
    %v3051 = vpop.f32.mrf.mxu0
    %v3052 = vadd.f32 %v3038, %v3051
    %3053 = vdwg.mxu0
    %3054 = vmatpush.bf16.msra.mxu0 %v2158
    %3055 = vmatpush.bf16.msra.mxu0 %v2154
    %3056 = vmatpush.bf16.msra.mxu0 %v2150
    %3057 = vmatpush.bf16.msra.mxu0 %v2146
    %3058 = vmatpush.bf16.msra.mxu0 %v2142
    %3059 = vmatpush.bf16.msra.mxu0 %v2138
    %3060 = vmatpush.bf16.msra.mxu0 %v2134
    %3061 = vmatpush.bf16.msra.mxu0 %v2130
    %3062 = vmatmul.bf16.gmra.mxu0 %v163
    %v3063 = vpop.f32.mrf.mxu0
    %v3064 = vadd.f32 %v3050, %v3063
    %v3065 = vpop.f32.mrf.mxu0
    %v3066 = vadd.f32 %v3052, %v3065
    %3067 = vdwg.mxu0
    %3068 = vmatpush.bf16.msra.mxu0 %v2190
    %3069 = vmatpush.bf16.msra.mxu0 %v2186
    %3070 = vmatpush.bf16.msra.mxu0 %v2182
    %3071 = vmatpush.bf16.msra.mxu0 %v2178
    %3072 = vmatpush.bf16.msra.mxu0 %v2174
    %3073 = vmatpush.bf16.msra.mxu0 %v2170
    %3074 = vmatpush.bf16.msra.mxu0 %v2166
    %3075 = vmatpush.bf16.msra.mxu0 %v2162
    %3076 = vmatmul.bf16.gmra.mxu0 %v164
    %v3077 = vpop.f32.mrf.mxu0
    %v3078 = vadd.f32 %v3064, %v3077
    %v3079 = vpop.f32.mrf.mxu0
    %v3080 = vadd.f32 %v3066, %v3079
    %3081 = vdwg.mxu0
    %3082 = vmatpush.bf16.msra.mxu0 %v2222
    %3083 = vmatpush.bf16.msra.mxu0 %v2218
    %3084 = vmatpush.bf16.msra.mxu0 %v2214
    %3085 = vmatpush.bf16.msra.mxu0 %v2210
    %3086 = vmatpush.bf16.msra.mxu0 %v2206
    %3087 = vmatpush.bf16.msra.mxu0 %v2202
    %3088 = vmatpush.bf16.msra.mxu0 %v2198
    %3089 = vmatpush.bf16.msra.mxu0 %v2194
    %3090 = vmatmul.bf16.gmra.mxu0 %v165
    %v3091 = vpop.f32.mrf.mxu0
    %v3092 = vadd.f32 %v3078, %v3091
    %v3093 = vpop.f32.mrf.mxu0
    %v3094 = vadd.f32 %v3080, %v3093
    %3095 = vdwg.mxu0
    %3096 = vmatpush.bf16.msra.mxu0 %v2254
    %3097 = vmatpush.bf16.msra.mxu0 %v2250
    %3098 = vmatpush.bf16.msra.mxu0 %v2246
    %3099 = vmatpush.bf16.msra.mxu0 %v2242
    %3100 = vmatpush.bf16.msra.mxu0 %v2238
    %3101 = vmatpush.bf16.msra.mxu0 %v2234
    %3102 = vmatpush.bf16.msra.mxu0 %v2230
    %3103 = vmatpush.bf16.msra.mxu0 %v2226
    %3104 = vmatmul.bf16.gmra.mxu0 %v166
    %v3105 = vpop.f32.mrf.mxu0
    %v3106 = vadd.f32 %v3092, %v3105
    %v3107 = vpop.f32.mrf.mxu0
    %v3108 = vadd.f32 %v3094, %v3107
    %3109 = vdwg.mxu0
    %3110 = vmatpush.bf16.msra.mxu0 %v2286
    %3111 = vmatpush.bf16.msra.mxu0 %v2282
    %3112 = vmatpush.bf16.msra.mxu0 %v2278
    %3113 = vmatpush.bf16.msra.mxu0 %v2274
    %3114 = vmatpush.bf16.msra.mxu0 %v2270
    %3115 = vmatpush.bf16.msra.mxu0 %v2266
    %3116 = vmatpush.bf16.msra.mxu0 %v2262
    %3117 = vmatpush.bf16.msra.mxu0 %v2258
    %3118 = vmatmul.bf16.gmra.mxu0 %v167
    %v3119 = vpop.f32.mrf.mxu0
    %v3120 = vadd.f32 %v3106, %v3119
    %v3121 = vpop.f32.mrf.mxu0
    %v3122 = vadd.f32 %v3108, %v3121
    %3123 = vdwg.mxu0
    %3124 = vmatpush.bf16.msra.mxu0 %v2318
    %3125 = vmatpush.bf16.msra.mxu0 %v2314
    %3126 = vmatpush.bf16.msra.mxu0 %v2310
    %3127 = vmatpush.bf16.msra.mxu0 %v2306
    %3128 = vmatpush.bf16.msra.mxu0 %v2302
    %3129 = vmatpush.bf16.msra.mxu0 %v2298
    %3130 = vmatpush.bf16.msra.mxu0 %v2294
    %3131 = vmatpush.bf16.msra.mxu0 %v2290
    %3132 = vmatmul.bf16.gmra.mxu0 %v168
    %v3133 = vpop.f32.mrf.mxu0
    %v3134 = vadd.f32 %v3120, %v3133
    %v3135 = vpop.f32.mrf.mxu0
    %v3136 = vadd.f32 %v3122, %v3135
    %3137 = vdwg.mxu0
    %3138 = vmatpush.bf16.msra.mxu0 %v2350
    %3139 = vmatpush.bf16.msra.mxu0 %v2346
    %3140 = vmatpush.bf16.msra.mxu0 %v2342
    %3141 = vmatpush.bf16.msra.mxu0 %v2338
    %3142 = vmatpush.bf16.msra.mxu0 %v2334
    %3143 = vmatpush.bf16.msra.mxu0 %v2330
    %3144 = vmatpush.bf16.msra.mxu0 %v2326
    %3145 = vmatpush.bf16.msra.mxu0 %v2322
    %3146 = vmatmul.bf16.gmra.mxu0 %v169
    %v3147 = vpop.f32.mrf.mxu0
    %v3148 = vadd.f32 %v3134, %v3147
    %v3149 = vpop.f32.mrf.mxu0
    %v3150 = vadd.f32 %v3136, %v3149
    %3151 = vdwg.mxu0
    %3152 = vmatpush.bf16.msra.mxu0 %v2382
    %3153 = vmatpush.bf16.msra.mxu0 %v2378
    %3154 = vmatpush.bf16.msra.mxu0 %v2374
    %3155 = vmatpush.bf16.msra.mxu0 %v2370
    %3156 = vmatpush.bf16.msra.mxu0 %v2366
    %3157 = vmatpush.bf16.msra.mxu0 %v2362
    %3158 = vmatpush.bf16.msra.mxu0 %v2358
    %3159 = vmatpush.bf16.msra.mxu0 %v2354
    %3160 = vmatmul.bf16.gmra.mxu0 %v170
    %v3161 = vpop.f32.mrf.mxu0
    %v3162 = vadd.f32 %v3148, %v3161
    %v3163 = vpop.f32.mrf.mxu0
    %v3164 = vadd.f32 %v3150, %v3163
    %3165 = vdwg.mxu0
    %3166 = vmatpush.bf16.msra.mxu0 %v2414
    %3167 = vmatpush.bf16.msra.mxu0 %v2410
    %3168 = vmatpush.bf16.msra.mxu0 %v2406
    %3169 = vmatpush.bf16.msra.mxu0 %v2402
    %3170 = vmatpush.bf16.msra.mxu0 %v2398
    %3171 = vmatpush.bf16.msra.mxu0 %v2394
    %3172 = vmatpush.bf16.msra.mxu0 %v2390
    %3173 = vmatpush.bf16.msra.mxu0 %v2386
    %3174 = vmatmul.bf16.gmra.mxu0 %v171
    %v3175 = vpop.f32.mrf.mxu0
    %v3176 = vadd.f32 %v3162, %v3175
    %v3177 = vpop.f32.mrf.mxu0
    %v3178 = vadd.f32 %v3164, %v3177
    %3179 = vdwg.mxu0
    %3180 = vmatpush.bf16.msra.mxu0 %v2446
    %3181 = vmatpush.bf16.msra.mxu0 %v2442
    %3182 = vmatpush.bf16.msra.mxu0 %v2438
    %3183 = vmatpush.bf16.msra.mxu0 %v2434
    %3184 = vmatpush.bf16.msra.mxu0 %v2430
    %3185 = vmatpush.bf16.msra.mxu0 %v2426
    %3186 = vmatpush.bf16.msra.mxu0 %v2422
    %3187 = vmatpush.bf16.msra.mxu0 %v2418
    %3188 = vmatmul.bf16.gmra.mxu0 %v172
    %v3189 = vpop.f32.mrf.mxu0
    %v3190 = vadd.f32 %v3176, %v3189
    %v3191 = vpop.f32.mrf.mxu0
    %v3192 = vadd.f32 %v3178, %v3191
    %3193 = vdwg.mxu0
    %3194 = vmatpush.bf16.msra.mxu0 %v2478
    %3195 = vmatpush.bf16.msra.mxu0 %v2474
    %3196 = vmatpush.bf16.msra.mxu0 %v2470
    %3197 = vmatpush.bf16.msra.mxu0 %v2466
    %3198 = vmatpush.bf16.msra.mxu0 %v2462
    %3199 = vmatpush.bf16.msra.mxu0 %v2458
    %3200 = vmatpush.bf16.msra.mxu0 %v2454
    %3201 = vmatpush.bf16.msra.mxu0 %v2450
    %3202 = vmatmul.bf16.gmra.mxu0 %v173
    %v3203 = vpop.f32.mrf.mxu0
    %v3204 = vadd.f32 %v3190, %v3203
    %v3205 = vpop.f32.mrf.mxu0
    %v3206 = vadd.f32 %v3192, %v3205
    %3207 = vdwg.mxu0
    %3208 = vmatpush.bf16.msra.mxu0 %v2510
    %3209 = vmatpush.bf16.msra.mxu0 %v2506
    %3210 = vmatpush.bf16.msra.mxu0 %v2502
    %3211 = vmatpush.bf16.msra.mxu0 %v2498
    %3212 = vmatpush.bf16.msra.mxu0 %v2494
    %3213 = vmatpush.bf16.msra.mxu0 %v2490
    %3214 = vmatpush.bf16.msra.mxu0 %v2486
    %3215 = vmatpush.bf16.msra.mxu0 %v2482
    %3216 = vmatmul.bf16.gmra.mxu0 %v174
    %v3217 = vpop.f32.mrf.mxu0
    %v3218 = vadd.f32 %v3204, %v3217
    %v3219 = vpop.f32.mrf.mxu0
    %v3220 = vadd.f32 %v3206, %v3219
    %3221 = vdwg.mxu0
    %3222 = vmatpush.bf16.msra.mxu0 0
    %3223 = vmatpush.bf16.msra.mxu0 0
    %3224 = vmatpush.bf16.msra.mxu0 %v3015
    %3225 = vmatpush.bf16.msra.mxu0 %v2530
    %3226 = vmatpush.bf16.msra.mxu0 %v2526
    %3227 = vmatpush.bf16.msra.mxu0 %v2522
    %3228 = vmatpush.bf16.msra.mxu0 %v2518
    %3229 = vmatpush.bf16.msra.mxu0 %v2514
    %3230 = vmatmul.bf16.gmra.mxu0 %v3008
    %v3231 = vpop.f32.mrf.mxu0
    %v3232 = vadd.f32 %v3218, %v3231
    %v3233 = vpop.f32.mrf.mxu0
    %v3234 = vadd.f32 %v3220, %v3233
    %3235 = vdwg.mxu0
    %3236 = vmatpush.bf16.msra.mxu0 %v2095
    %3237 = vmatpush.bf16.msra.mxu0 %v2091
    %3238 = vmatpush.bf16.msra.mxu0 %v2087
    %3239 = vmatpush.bf16.msra.mxu0 %v2083
    %3240 = vmatpush.bf16.msra.mxu0 %v2079
    %3241 = vmatpush.bf16.msra.mxu0 %v2075
    %3242 = vmatpush.bf16.msra.mxu0 %v2071
    %3243 = vmatpush.bf16.msra.mxu0 %v2067
    %3244 = vmatmul.bf16.gmra.mxu0 %v161
    %v3245 = vpop.f32.mrf.mxu0
    %v3246 = vadd.f32 %v649, %v3245
    %v3247 = vpop.f32.mrf.mxu0
    %v3248 = vadd.f32 %v649, %v3247
    %3249 = vdwg.mxu0
    %3250 = vmatpush.bf16.msra.mxu0 %v2127
    %3251 = vmatpush.bf16.msra.mxu0 %v2123
    %3252 = vmatpush.bf16.msra.mxu0 %v2119
    %3253 = vmatpush.bf16.msra.mxu0 %v2115
    %3254 = vmatpush.bf16.msra.mxu0 %v2111
    %3255 = vmatpush.bf16.msra.mxu0 %v2107
    %3256 = vmatpush.bf16.msra.mxu0 %v2103
    %3257 = vmatpush.bf16.msra.mxu0 %v2099
    %3258 = vmatmul.bf16.gmra.mxu0 %v162
    %v3259 = vpop.f32.mrf.mxu0
    %v3260 = vadd.f32 %v3246, %v3259
    %v3261 = vpop.f32.mrf.mxu0
    %v3262 = vadd.f32 %v3248, %v3261
    %3263 = vdwg.mxu0
    %3264 = vmatpush.bf16.msra.mxu0 %v2159
    %3265 = vmatpush.bf16.msra.mxu0 %v2155
    %3266 = vmatpush.bf16.msra.mxu0 %v2151
    %3267 = vmatpush.bf16.msra.mxu0 %v2147
    %3268 = vmatpush.bf16.msra.mxu0 %v2143
    %3269 = vmatpush.bf16.msra.mxu0 %v2139
    %3270 = vmatpush.bf16.msra.mxu0 %v2135
    %3271 = vmatpush.bf16.msra.mxu0 %v2131
    %3272 = vmatmul.bf16.gmra.mxu0 %v163
    %v3273 = vpop.f32.mrf.mxu0
    %v3274 = vadd.f32 %v3260, %v3273
    %v3275 = vpop.f32.mrf.mxu0
    %v3276 = vadd.f32 %v3262, %v3275
    %3277 = vdwg.mxu0
    %3278 = vmatpush.bf16.msra.mxu0 %v2191
    %3279 = vmatpush.bf16.msra.mxu0 %v2187
    %3280 = vmatpush.bf16.msra.mxu0 %v2183
    %3281 = vmatpush.bf16.msra.mxu0 %v2179
    %3282 = vmatpush.bf16.msra.mxu0 %v2175
    %3283 = vmatpush.bf16.msra.mxu0 %v2171
    %3284 = vmatpush.bf16.msra.mxu0 %v2167
    %3285 = vmatpush.bf16.msra.mxu0 %v2163
    %3286 = vmatmul.bf16.gmra.mxu0 %v164
    %v3287 = vpop.f32.mrf.mxu0
    %v3288 = vadd.f32 %v3274, %v3287
    %v3289 = vpop.f32.mrf.mxu0
    %v3290 = vadd.f32 %v3276, %v3289
    %3291 = vdwg.mxu0
    %3292 = vmatpush.bf16.msra.mxu0 %v2223
    %3293 = vmatpush.bf16.msra.mxu0 %v2219
    %3294 = vmatpush.bf16.msra.mxu0 %v2215
    %3295 = vmatpush.bf16.msra.mxu0 %v2211
    %3296 = vmatpush.bf16.msra.mxu0 %v2207
    %3297 = vmatpush.bf16.msra.mxu0 %v2203
    %3298 = vmatpush.bf16.msra.mxu0 %v2199
    %3299 = vmatpush.bf16.msra.mxu0 %v2195
    %3300 = vmatmul.bf16.gmra.mxu0 %v165
    %v3301 = vpop.f32.mrf.mxu0
    %v3302 = vadd.f32 %v3288, %v3301
    %v3303 = vpop.f32.mrf.mxu0
    %v3304 = vadd.f32 %v3290, %v3303
    %3305 = vdwg.mxu0
    %3306 = vmatpush.bf16.msra.mxu0 %v2255
    %3307 = vmatpush.bf16.msra.mxu0 %v2251
    %3308 = vmatpush.bf16.msra.mxu0 %v2247
    %3309 = vmatpush.bf16.msra.mxu0 %v2243
    %3310 = vmatpush.bf16.msra.mxu0 %v2239
    %3311 = vmatpush.bf16.msra.mxu0 %v2235
    %3312 = vmatpush.bf16.msra.mxu0 %v2231
    %3313 = vmatpush.bf16.msra.mxu0 %v2227
    %3314 = vmatmul.bf16.gmra.mxu0 %v166
    %v3315 = vpop.f32.mrf.mxu0
    %v3316 = vadd.f32 %v3302, %v3315
    %v3317 = vpop.f32.mrf.mxu0
    %v3318 = vadd.f32 %v3304, %v3317
    %3319 = vdwg.mxu0
    %3320 = vmatpush.bf16.msra.mxu0 %v2287
    %3321 = vmatpush.bf16.msra.mxu0 %v2283
    %3322 = vmatpush.bf16.msra.mxu0 %v2279
    %3323 = vmatpush.bf16.msra.mxu0 %v2275
    %3324 = vmatpush.bf16.msra.mxu0 %v2271
    %3325 = vmatpush.bf16.msra.mxu0 %v2267
    %3326 = vmatpush.bf16.msra.mxu0 %v2263
    %3327 = vmatpush.bf16.msra.mxu0 %v2259
    %3328 = vmatmul.bf16.gmra.mxu0 %v167
    %v3329 = vpop.f32.mrf.mxu0
    %v3330 = vadd.f32 %v3316, %v3329
    %v3331 = vpop.f32.mrf.mxu0
    %v3332 = vadd.f32 %v3318, %v3331
    %3333 = vdwg.mxu0
    %3334 = vmatpush.bf16.msra.mxu0 %v2319
    %3335 = vmatpush.bf16.msra.mxu0 %v2315
    %3336 = vmatpush.bf16.msra.mxu0 %v2311
    %3337 = vmatpush.bf16.msra.mxu0 %v2307
    %3338 = vmatpush.bf16.msra.mxu0 %v2303
    %3339 = vmatpush.bf16.msra.mxu0 %v2299
    %3340 = vmatpush.bf16.msra.mxu0 %v2295
    %3341 = vmatpush.bf16.msra.mxu0 %v2291
    %3342 = vmatmul.bf16.gmra.mxu0 %v168
    %v3343 = vpop.f32.mrf.mxu0
    %v3344 = vadd.f32 %v3330, %v3343
    %v3345 = vpop.f32.mrf.mxu0
    %v3346 = vadd.f32 %v3332, %v3345
    %3347 = vdwg.mxu0
    %3348 = vmatpush.bf16.msra.mxu0 %v2351
    %3349 = vmatpush.bf16.msra.mxu0 %v2347
    %3350 = vmatpush.bf16.msra.mxu0 %v2343
    %3351 = vmatpush.bf16.msra.mxu0 %v2339
    %3352 = vmatpush.bf16.msra.mxu0 %v2335
    %3353 = vmatpush.bf16.msra.mxu0 %v2331
    %3354 = vmatpush.bf16.msra.mxu0 %v2327
    %3355 = vmatpush.bf16.msra.mxu0 %v2323
    %3356 = vmatmul.bf16.gmra.mxu0 %v169
    %v3357 = vpop.f32.mrf.mxu0
    %v3358 = vadd.f32 %v3344, %v3357
    %v3359 = vpop.f32.mrf.mxu0
    %v3360 = vadd.f32 %v3346, %v3359
    %3361 = vdwg.mxu0
    %3362 = vmatpush.bf16.msra.mxu0 %v2383
    %3363 = vmatpush.bf16.msra.mxu0 %v2379
    %3364 = vmatpush.bf16.msra.mxu0 %v2375
    %3365 = vmatpush.bf16.msra.mxu0 %v2371
    %3366 = vmatpush.bf16.msra.mxu0 %v2367
    %3367 = vmatpush.bf16.msra.mxu0 %v2363
    %3368 = vmatpush.bf16.msra.mxu0 %v2359
    %3369 = vmatpush.bf16.msra.mxu0 %v2355
    %3370 = vmatmul.bf16.gmra.mxu0 %v170
    %v3371 = vpop.f32.mrf.mxu0
    %v3372 = vadd.f32 %v3358, %v3371
    %v3373 = vpop.f32.mrf.mxu0
    %v3374 = vadd.f32 %v3360, %v3373
    %3375 = vdwg.mxu0
    %3376 = vmatpush.bf16.msra.mxu0 %v2415
    %3377 = vmatpush.bf16.msra.mxu0 %v2411
    %3378 = vmatpush.bf16.msra.mxu0 %v2407
    %3379 = vmatpush.bf16.msra.mxu0 %v2403
    %3380 = vmatpush.bf16.msra.mxu0 %v2399
    %3381 = vmatpush.bf16.msra.mxu0 %v2395
    %3382 = vmatpush.bf16.msra.mxu0 %v2391
    %3383 = vmatpush.bf16.msra.mxu0 %v2387
    %3384 = vmatmul.bf16.gmra.mxu0 %v171
    %v3385 = vpop.f32.mrf.mxu0
    %v3386 = vadd.f32 %v3372, %v3385
    %v3387 = vpop.f32.mrf.mxu0
    %v3388 = vadd.f32 %v3374, %v3387
    %3389 = vdwg.mxu0
    %3390 = vmatpush.bf16.msra.mxu0 %v2447
    %3391 = vmatpush.bf16.msra.mxu0 %v2443
    %3392 = vmatpush.bf16.msra.mxu0 %v2439
    %3393 = vmatpush.bf16.msra.mxu0 %v2435
    %3394 = vmatpush.bf16.msra.mxu0 %v2431
    %3395 = vmatpush.bf16.msra.mxu0 %v2427
    %3396 = vmatpush.bf16.msra.mxu0 %v2423
    %3397 = vmatpush.bf16.msra.mxu0 %v2419
    %3398 = vmatmul.bf16.gmra.mxu0 %v172
    %v3399 = vpop.f32.mrf.mxu0
    %v3400 = vadd.f32 %v3386, %v3399
    %v3401 = vpop.f32.mrf.mxu0
    %v3402 = vadd.f32 %v3388, %v3401
    %3403 = vdwg.mxu0
    %3404 = vmatpush.bf16.msra.mxu0 %v2479
    %3405 = vmatpush.bf16.msra.mxu0 %v2475
    %3406 = vmatpush.bf16.msra.mxu0 %v2471
    %3407 = vmatpush.bf16.msra.mxu0 %v2467
    %3408 = vmatpush.bf16.msra.mxu0 %v2463
    %3409 = vmatpush.bf16.msra.mxu0 %v2459
    %3410 = vmatpush.bf16.msra.mxu0 %v2455
    %3411 = vmatpush.bf16.msra.mxu0 %v2451
    %3412 = vmatmul.bf16.gmra.mxu0 %v173
    %v3413 = vpop.f32.mrf.mxu0
    %v3414 = vadd.f32 %v3400, %v3413
    %v3415 = vpop.f32.mrf.mxu0
    %v3416 = vadd.f32 %v3402, %v3415
    %3417 = vdwg.mxu0
    %3418 = vmatpush.bf16.msra.mxu0 %v2511
    %3419 = vmatpush.bf16.msra.mxu0 %v2507
    %3420 = vmatpush.bf16.msra.mxu0 %v2503
    %3421 = vmatpush.bf16.msra.mxu0 %v2499
    %3422 = vmatpush.bf16.msra.mxu0 %v2495
    %3423 = vmatpush.bf16.msra.mxu0 %v2491
    %3424 = vmatpush.bf16.msra.mxu0 %v2487
    %3425 = vmatpush.bf16.msra.mxu0 %v2483
    %3426 = vmatmul.bf16.gmra.mxu0 %v174
    %v3427 = vpop.f32.mrf.mxu0
    %v3428 = vadd.f32 %v3414, %v3427
    %v3429 = vpop.f32.mrf.mxu0
    %v3430 = vadd.f32 %v3416, %v3429
    %3431 = vdwg.mxu0
    %3432 = vmatpush.bf16.msra.mxu0 0
    %3433 = vmatpush.bf16.msra.mxu0 0
    %3434 = vmatpush.bf16.msra.mxu0 %v3018
    %3435 = vmatpush.bf16.msra.mxu0 %v2531
    %3436 = vmatpush.bf16.msra.mxu0 %v2527
    %3437 = vmatpush.bf16.msra.mxu0 %v2523
    %3438 = vmatpush.bf16.msra.mxu0 %v2519
    %3439 = vmatpush.bf16.msra.mxu0 %v2515
    %3440 = vmatmul.bf16.gmra.mxu0 %v3008
    %v3441 = vpop.f32.mrf.mxu0
    %v3442 = vadd.f32 %v3428, %v3441
    %v3443 = vpop.f32.mrf.mxu0
    %v3444 = vadd.f32 %v3430, %v3443
    %3445 = vdwg.mxu0
    %3446 = vmatpush.bf16.msra.mxu0 %v2096
    %3447 = vmatpush.bf16.msra.mxu0 %v2092
    %3448 = vmatpush.bf16.msra.mxu0 %v2088
    %3449 = vmatpush.bf16.msra.mxu0 %v2084
    %3450 = vmatpush.bf16.msra.mxu0 %v2080
    %3451 = vmatpush.bf16.msra.mxu0 %v2076
    %3452 = vmatpush.bf16.msra.mxu0 %v2072
    %3453 = vmatpush.bf16.msra.mxu0 %v2068
    %3454 = vmatmul.bf16.gmra.mxu0 %v161
    %v3455 = vpop.f32.mrf.mxu0
    %v3456 = vadd.f32 %v650, %v3455
    %v3457 = vpop.f32.mrf.mxu0
    %v3458 = vadd.f32 %v650, %v3457
    %3459 = vdwg.mxu0
    %3460 = vmatpush.bf16.msra.mxu0 %v2128
    %3461 = vmatpush.bf16.msra.mxu0 %v2124
    %3462 = vmatpush.bf16.msra.mxu0 %v2120
    %3463 = vmatpush.bf16.msra.mxu0 %v2116
    %3464 = vmatpush.bf16.msra.mxu0 %v2112
    %3465 = vmatpush.bf16.msra.mxu0 %v2108
    %3466 = vmatpush.bf16.msra.mxu0 %v2104
    %3467 = vmatpush.bf16.msra.mxu0 %v2100
    %3468 = vmatmul.bf16.gmra.mxu0 %v162
    %v3469 = vpop.f32.mrf.mxu0
    %v3470 = vadd.f32 %v3456, %v3469
    %v3471 = vpop.f32.mrf.mxu0
    %v3472 = vadd.f32 %v3458, %v3471
    %3473 = vdwg.mxu0
    %3474 = vmatpush.bf16.msra.mxu0 %v2160
    %3475 = vmatpush.bf16.msra.mxu0 %v2156
    %3476 = vmatpush.bf16.msra.mxu0 %v2152
    %3477 = vmatpush.bf16.msra.mxu0 %v2148
    %3478 = vmatpush.bf16.msra.mxu0 %v2144
    %3479 = vmatpush.bf16.msra.mxu0 %v2140
    %3480 = vmatpush.bf16.msra.mxu0 %v2136
    %3481 = vmatpush.bf16.msra.mxu0 %v2132
    %3482 = vmatmul.bf16.gmra.mxu0 %v163
    %v3483 = vpop.f32.mrf.mxu0
    %v3484 = vadd.f32 %v3470, %v3483
    %v3485 = vpop.f32.mrf.mxu0
    %v3486 = vadd.f32 %v3472, %v3485
    %3487 = vdwg.mxu0
    %3488 = vmatpush.bf16.msra.mxu0 %v2192
    %3489 = vmatpush.bf16.msra.mxu0 %v2188
    %3490 = vmatpush.bf16.msra.mxu0 %v2184
    %3491 = vmatpush.bf16.msra.mxu0 %v2180
    %3492 = vmatpush.bf16.msra.mxu0 %v2176
    %3493 = vmatpush.bf16.msra.mxu0 %v2172
    %3494 = vmatpush.bf16.msra.mxu0 %v2168
    %3495 = vmatpush.bf16.msra.mxu0 %v2164
    %3496 = vmatmul.bf16.gmra.mxu0 %v164
    %v3497 = vpop.f32.mrf.mxu0
    %v3498 = vadd.f32 %v3484, %v3497
    %v3499 = vpop.f32.mrf.mxu0
    %v3500 = vadd.f32 %v3486, %v3499
    %3501 = vdwg.mxu0
    %3502 = vmatpush.bf16.msra.mxu0 %v2224
    %3503 = vmatpush.bf16.msra.mxu0 %v2220
    %3504 = vmatpush.bf16.msra.mxu0 %v2216
    %3505 = vmatpush.bf16.msra.mxu0 %v2212
    %3506 = vmatpush.bf16.msra.mxu0 %v2208
    %3507 = vmatpush.bf16.msra.mxu0 %v2204
    %3508 = vmatpush.bf16.msra.mxu0 %v2200
    %3509 = vmatpush.bf16.msra.mxu0 %v2196
    %3510 = vmatmul.bf16.gmra.mxu0 %v165
    %v3511 = vpop.f32.mrf.mxu0
    %v3512 = vadd.f32 %v3498, %v3511
    %v3513 = vpop.f32.mrf.mxu0
    %v3514 = vadd.f32 %v3500, %v3513
    %3515 = vdwg.mxu0
    %3516 = vmatpush.bf16.msra.mxu0 %v2256
    %3517 = vmatpush.bf16.msra.mxu0 %v2252
    %3518 = vmatpush.bf16.msra.mxu0 %v2248
    %3519 = vmatpush.bf16.msra.mxu0 %v2244
    %3520 = vmatpush.bf16.msra.mxu0 %v2240
    %3521 = vmatpush.bf16.msra.mxu0 %v2236
    %3522 = vmatpush.bf16.msra.mxu0 %v2232
    %3523 = vmatpush.bf16.msra.mxu0 %v2228
    %3524 = vmatmul.bf16.gmra.mxu0 %v166
    %v3525 = vpop.f32.mrf.mxu0
    %v3526 = vadd.f32 %v3512, %v3525
    %v3527 = vpop.f32.mrf.mxu0
    %v3528 = vadd.f32 %v3514, %v3527
    %3529 = vdwg.mxu0
    %3530 = vmatpush.bf16.msra.mxu0 %v2288
    %3531 = vmatpush.bf16.msra.mxu0 %v2284
    %3532 = vmatpush.bf16.msra.mxu0 %v2280
    %3533 = vmatpush.bf16.msra.mxu0 %v2276
    %3534 = vmatpush.bf16.msra.mxu0 %v2272
    %3535 = vmatpush.bf16.msra.mxu0 %v2268
    %3536 = vmatpush.bf16.msra.mxu0 %v2264
    %3537 = vmatpush.bf16.msra.mxu0 %v2260
    %3538 = vmatmul.bf16.gmra.mxu0 %v167
    %v3539 = vpop.f32.mrf.mxu0
    %v3540 = vadd.f32 %v3526, %v3539
    %v3541 = vpop.f32.mrf.mxu0
    %v3542 = vadd.f32 %v3528, %v3541
    %3543 = vdwg.mxu0
    %3544 = vmatpush.bf16.msra.mxu0 %v2320
    %3545 = vmatpush.bf16.msra.mxu0 %v2316
    %3546 = vmatpush.bf16.msra.mxu0 %v2312
    %3547 = vmatpush.bf16.msra.mxu0 %v2308
    %3548 = vmatpush.bf16.msra.mxu0 %v2304
    %3549 = vmatpush.bf16.msra.mxu0 %v2300
    %3550 = vmatpush.bf16.msra.mxu0 %v2296
    %3551 = vmatpush.bf16.msra.mxu0 %v2292
    %3552 = vmatmul.bf16.gmra.mxu0 %v168
    %v3553 = vpop.f32.mrf.mxu0
    %v3554 = vadd.f32 %v3540, %v3553
    %v3555 = vpop.f32.mrf.mxu0
    %v3556 = vadd.f32 %v3542, %v3555
    %3557 = vdwg.mxu0
    %3558 = vmatpush.bf16.msra.mxu0 %v2352
    %3559 = vmatpush.bf16.msra.mxu0 %v2348
    %3560 = vmatpush.bf16.msra.mxu0 %v2344
    %3561 = vmatpush.bf16.msra.mxu0 %v2340
    %3562 = vmatpush.bf16.msra.mxu0 %v2336
    %3563 = vmatpush.bf16.msra.mxu0 %v2332
    %3564 = vmatpush.bf16.msra.mxu0 %v2328
    %3565 = vmatpush.bf16.msra.mxu0 %v2324
    %3566 = vmatmul.bf16.gmra.mxu0 %v169
    %v3567 = vpop.f32.mrf.mxu0
    %v3568 = vadd.f32 %v3554, %v3567
    %v3569 = vpop.f32.mrf.mxu0
    %v3570 = vadd.f32 %v3556, %v3569
    %3571 = vdwg.mxu0
    %3572 = vmatpush.bf16.msra.mxu0 %v2384
    %3573 = vmatpush.bf16.msra.mxu0 %v2380
    %3574 = vmatpush.bf16.msra.mxu0 %v2376
    %3575 = vmatpush.bf16.msra.mxu0 %v2372
    %3576 = vmatpush.bf16.msra.mxu0 %v2368
    %3577 = vmatpush.bf16.msra.mxu0 %v2364
    %3578 = vmatpush.bf16.msra.mxu0 %v2360
    %3579 = vmatpush.bf16.msra.mxu0 %v2356
    %3580 = vmatmul.bf16.gmra.mxu0 %v170
    %v3581 = vpop.f32.mrf.mxu0
    %v3582 = vadd.f32 %v3568, %v3581
    %v3583 = vpop.f32.mrf.mxu0
    %v3584 = vadd.f32 %v3570, %v3583
    %3585 = vdwg.mxu0
    %3586 = vmatpush.bf16.msra.mxu0 %v2416
    %3587 = vmatpush.bf16.msra.mxu0 %v2412
    %3588 = vmatpush.bf16.msra.mxu0 %v2408
    %3589 = vmatpush.bf16.msra.mxu0 %v2404
    %3590 = vmatpush.bf16.msra.mxu0 %v2400
    %3591 = vmatpush.bf16.msra.mxu0 %v2396
    %3592 = vmatpush.bf16.msra.mxu0 %v2392
    %3593 = vmatpush.bf16.msra.mxu0 %v2388
    %3594 = vmatmul.bf16.gmra.mxu0 %v171
    %v3595 = vpop.f32.mrf.mxu0
    %v3596 = vadd.f32 %v3582, %v3595
    %v3597 = vpop.f32.mrf.mxu0
    %v3598 = vadd.f32 %v3584, %v3597
    %3599 = vdwg.mxu0
    %3600 = vmatpush.bf16.msra.mxu0 %v2448
    %3601 = vmatpush.bf16.msra.mxu0 %v2444
    %3602 = vmatpush.bf16.msra.mxu0 %v2440
    %3603 = vmatpush.bf16.msra.mxu0 %v2436
    %3604 = vmatpush.bf16.msra.mxu0 %v2432
    %3605 = vmatpush.bf16.msra.mxu0 %v2428
    %3606 = vmatpush.bf16.msra.mxu0 %v2424
    %3607 = vmatpush.bf16.msra.mxu0 %v2420
    %3608 = vmatmul.bf16.gmra.mxu0 %v172
    %v3609 = vpop.f32.mrf.mxu0
    %v3610 = vadd.f32 %v3596, %v3609
    %v3611 = vpop.f32.mrf.mxu0
    %v3612 = vadd.f32 %v3598, %v3611
    %3613 = vdwg.mxu0
    %3614 = vmatpush.bf16.msra.mxu0 %v2480
    %3615 = vmatpush.bf16.msra.mxu0 %v2476
    %3616 = vmatpush.bf16.msra.mxu0 %v2472
    %3617 = vmatpush.bf16.msra.mxu0 %v2468
    %3618 = vmatpush.bf16.msra.mxu0 %v2464
    %3619 = vmatpush.bf16.msra.mxu0 %v2460
    %3620 = vmatpush.bf16.msra.mxu0 %v2456
    %3621 = vmatpush.bf16.msra.mxu0 %v2452
    %3622 = vmatmul.bf16.gmra.mxu0 %v173
    %v3623 = vpop.f32.mrf.mxu0
    %v3624 = vadd.f32 %v3610, %v3623
    %v3625 = vpop.f32.mrf.mxu0
    %v3626 = vadd.f32 %v3612, %v3625
    %3627 = vdwg.mxu0
    %3628 = vmatpush.bf16.msra.mxu0 %v2512
    %3629 = vmatpush.bf16.msra.mxu0 %v2508
    %3630 = vmatpush.bf16.msra.mxu0 %v2504
    %3631 = vmatpush.bf16.msra.mxu0 %v2500
    %3632 = vmatpush.bf16.msra.mxu0 %v2496
    %3633 = vmatpush.bf16.msra.mxu0 %v2492
    %3634 = vmatpush.bf16.msra.mxu0 %v2488
    %3635 = vmatpush.bf16.msra.mxu0 %v2484
    %3636 = vmatmul.bf16.gmra.mxu0 %v174
    %v3637 = vpop.f32.mrf.mxu0
    %v3638 = vadd.f32 %v3624, %v3637
    %v3639 = vpop.f32.mrf.mxu0
    %v3640 = vadd.f32 %v3626, %v3639
    %3641 = vdwg.mxu0
    %3642 = vmatpush.bf16.msra.mxu0 0
    %3643 = vmatpush.bf16.msra.mxu0 0
    %3644 = vmatpush.bf16.msra.mxu0 %v3021
    %3645 = vmatpush.bf16.msra.mxu0 %v2532
    %3646 = vmatpush.bf16.msra.mxu0 %v2528
    %3647 = vmatpush.bf16.msra.mxu0 %v2524
    %3648 = vmatpush.bf16.msra.mxu0 %v2520
    %3649 = vmatpush.bf16.msra.mxu0 %v2516
    %3650 = vmatmul.bf16.gmra.mxu0 %v3008
    %v3651 = vpop.f32.mrf.mxu0
    %v3652 = vadd.f32 %v3638, %v3651
    %v3653 = vpop.f32.mrf.mxu0
    %v3654 = vadd.f32 %v3640, %v3653
    %3655 = vdwg.mxu0
    %3656 = vmatpush.bf16.msra.mxu0 %v2097
    %3657 = vmatpush.bf16.msra.mxu0 %v2093
    %3658 = vmatpush.bf16.msra.mxu0 %v2089
    %3659 = vmatpush.bf16.msra.mxu0 %v2085
    %3660 = vmatpush.bf16.msra.mxu0 %v2081
    %3661 = vmatpush.bf16.msra.mxu0 %v2077
    %3662 = vmatpush.bf16.msra.mxu0 %v2073
    %3663 = vmatpush.bf16.msra.mxu0 %v2069
    %3664 = vmatmul.bf16.gmra.mxu0 %v161
    %v3665 = vpop.f32.mrf.mxu0
    %v3666 = vadd.f32 %v651, %v3665
    %v3667 = vpop.f32.mrf.mxu0
    %v3668 = vadd.f32 %v651, %v3667
    %3669 = vdwg.mxu0
    %3670 = vmatpush.bf16.msra.mxu0 %v2129
    %3671 = vmatpush.bf16.msra.mxu0 %v2125
    %3672 = vmatpush.bf16.msra.mxu0 %v2121
    %3673 = vmatpush.bf16.msra.mxu0 %v2117
    %3674 = vmatpush.bf16.msra.mxu0 %v2113
    %3675 = vmatpush.bf16.msra.mxu0 %v2109
    %3676 = vmatpush.bf16.msra.mxu0 %v2105
    %3677 = vmatpush.bf16.msra.mxu0 %v2101
    %3678 = vmatmul.bf16.gmra.mxu0 %v162
    %v3679 = vpop.f32.mrf.mxu0
    %v3680 = vadd.f32 %v3666, %v3679
    %v3681 = vpop.f32.mrf.mxu0
    %v3682 = vadd.f32 %v3668, %v3681
    %3683 = vdwg.mxu0
    %3684 = vmatpush.bf16.msra.mxu0 %v2161
    %3685 = vmatpush.bf16.msra.mxu0 %v2157
    %3686 = vmatpush.bf16.msra.mxu0 %v2153
    %3687 = vmatpush.bf16.msra.mxu0 %v2149
    %3688 = vmatpush.bf16.msra.mxu0 %v2145
    %3689 = vmatpush.bf16.msra.mxu0 %v2141
    %3690 = vmatpush.bf16.msra.mxu0 %v2137
    %3691 = vmatpush.bf16.msra.mxu0 %v2133
    %3692 = vmatmul.bf16.gmra.mxu0 %v163
    %v3693 = vpop.f32.mrf.mxu0
    %v3694 = vadd.f32 %v3680, %v3693
    %v3695 = vpop.f32.mrf.mxu0
    %v3696 = vadd.f32 %v3682, %v3695
    %3697 = vdwg.mxu0
    %3698 = vmatpush.bf16.msra.mxu0 %v2193
    %3699 = vmatpush.bf16.msra.mxu0 %v2189
    %3700 = vmatpush.bf16.msra.mxu0 %v2185
    %3701 = vmatpush.bf16.msra.mxu0 %v2181
    %3702 = vmatpush.bf16.msra.mxu0 %v2177
    %3703 = vmatpush.bf16.msra.mxu0 %v2173
    %3704 = vmatpush.bf16.msra.mxu0 %v2169
    %3705 = vmatpush.bf16.msra.mxu0 %v2165
    %3706 = vmatmul.bf16.gmra.mxu0 %v164
    %v3707 = vpop.f32.mrf.mxu0
    %v3708 = vadd.f32 %v3694, %v3707
    %v3709 = vpop.f32.mrf.mxu0
    %v3710 = vadd.f32 %v3696, %v3709
    %3711 = vdwg.mxu0
    %3712 = vmatpush.bf16.msra.mxu0 %v2225
    %3713 = vmatpush.bf16.msra.mxu0 %v2221
    %3714 = vmatpush.bf16.msra.mxu0 %v2217
    %3715 = vmatpush.bf16.msra.mxu0 %v2213
    %3716 = vmatpush.bf16.msra.mxu0 %v2209
    %3717 = vmatpush.bf16.msra.mxu0 %v2205
    %3718 = vmatpush.bf16.msra.mxu0 %v2201
    %3719 = vmatpush.bf16.msra.mxu0 %v2197
    %3720 = vmatmul.bf16.gmra.mxu0 %v165
    %v3721 = vpop.f32.mrf.mxu0
    %v3722 = vadd.f32 %v3708, %v3721
    %v3723 = vpop.f32.mrf.mxu0
    %v3724 = vadd.f32 %v3710, %v3723
    %3725 = vdwg.mxu0
    %3726 = vmatpush.bf16.msra.mxu0 %v2257
    %3727 = vmatpush.bf16.msra.mxu0 %v2253
    %3728 = vmatpush.bf16.msra.mxu0 %v2249
    %3729 = vmatpush.bf16.msra.mxu0 %v2245
    %3730 = vmatpush.bf16.msra.mxu0 %v2241
    %3731 = vmatpush.bf16.msra.mxu0 %v2237
    %3732 = vmatpush.bf16.msra.mxu0 %v2233
    %3733 = vmatpush.bf16.msra.mxu0 %v2229
    %3734 = vmatmul.bf16.gmra.mxu0 %v166
    %v3735 = vpop.f32.mrf.mxu0
    %v3736 = vadd.f32 %v3722, %v3735
    %v3737 = vpop.f32.mrf.mxu0
    %v3738 = vadd.f32 %v3724, %v3737
    %3739 = vdwg.mxu0
    %3740 = vmatpush.bf16.msra.mxu0 %v2289
    %3741 = vmatpush.bf16.msra.mxu0 %v2285
    %3742 = vmatpush.bf16.msra.mxu0 %v2281
    %3743 = vmatpush.bf16.msra.mxu0 %v2277
    %3744 = vmatpush.bf16.msra.mxu0 %v2273
    %3745 = vmatpush.bf16.msra.mxu0 %v2269
    %3746 = vmatpush.bf16.msra.mxu0 %v2265
    %3747 = vmatpush.bf16.msra.mxu0 %v2261
    %3748 = vmatmul.bf16.gmra.mxu0 %v167
    %v3749 = vpop.f32.mrf.mxu0
    %v3750 = vadd.f32 %v3736, %v3749
    %v3751 = vpop.f32.mrf.mxu0
    %v3752 = vadd.f32 %v3738, %v3751
    %3753 = vdwg.mxu0
    %3754 = vmatpush.bf16.msra.mxu0 %v2321
    %3755 = vmatpush.bf16.msra.mxu0 %v2317
    %3756 = vmatpush.bf16.msra.mxu0 %v2313
    %3757 = vmatpush.bf16.msra.mxu0 %v2309
    %3758 = vmatpush.bf16.msra.mxu0 %v2305
    %3759 = vmatpush.bf16.msra.mxu0 %v2301
    %3760 = vmatpush.bf16.msra.mxu0 %v2297
    %3761 = vmatpush.bf16.msra.mxu0 %v2293
    %3762 = vmatmul.bf16.gmra.mxu0 %v168
    %v3763 = vpop.f32.mrf.mxu0
    %v3764 = vadd.f32 %v3750, %v3763
    %v3765 = vpop.f32.mrf.mxu0
    %v3766 = vadd.f32 %v3752, %v3765
    %3767 = vdwg.mxu0
    %3768 = vmatpush.bf16.msra.mxu0 %v2353
    %3769 = vmatpush.bf16.msra.mxu0 %v2349
    %3770 = vmatpush.bf16.msra.mxu0 %v2345
    %3771 = vmatpush.bf16.msra.mxu0 %v2341
    %3772 = vmatpush.bf16.msra.mxu0 %v2337
    %3773 = vmatpush.bf16.msra.mxu0 %v2333
    %3774 = vmatpush.bf16.msra.mxu0 %v2329
    %3775 = vmatpush.bf16.msra.mxu0 %v2325
    %3776 = vmatmul.bf16.gmra.mxu0 %v169
    %v3777 = vpop.f32.mrf.mxu0
    %v3778 = vadd.f32 %v3764, %v3777
    %v3779 = vpop.f32.mrf.mxu0
    %v3780 = vadd.f32 %v3766, %v3779
    %3781 = vdwg.mxu0
    %3782 = vmatpush.bf16.msra.mxu0 %v2385
    %3783 = vmatpush.bf16.msra.mxu0 %v2381
    %3784 = vmatpush.bf16.msra.mxu0 %v2377
    %3785 = vmatpush.bf16.msra.mxu0 %v2373
    %3786 = vmatpush.bf16.msra.mxu0 %v2369
    %3787 = vmatpush.bf16.msra.mxu0 %v2365
    %3788 = vmatpush.bf16.msra.mxu0 %v2361
    %3789 = vmatpush.bf16.msra.mxu0 %v2357
    %3790 = vmatmul.bf16.gmra.mxu0 %v170
    %v3791 = vpop.f32.mrf.mxu0
    %v3792 = vadd.f32 %v3778, %v3791
    %v3793 = vpop.f32.mrf.mxu0
    %v3794 = vadd.f32 %v3780, %v3793
    %3795 = vdwg.mxu0
    %3796 = vmatpush.bf16.msra.mxu0 %v2417
    %3797 = vmatpush.bf16.msra.mxu0 %v2413
    %3798 = vmatpush.bf16.msra.mxu0 %v2409
    %3799 = vmatpush.bf16.msra.mxu0 %v2405
    %3800 = vmatpush.bf16.msra.mxu0 %v2401
    %3801 = vmatpush.bf16.msra.mxu0 %v2397
    %3802 = vmatpush.bf16.msra.mxu0 %v2393
    %3803 = vmatpush.bf16.msra.mxu0 %v2389
    %3804 = vmatmul.bf16.gmra.mxu0 %v171
    %v3805 = vpop.f32.mrf.mxu0
    %v3806 = vadd.f32 %v3792, %v3805
    %v3807 = vpop.f32.mrf.mxu0
    %v3808 = vadd.f32 %v3794, %v3807
    %3809 = vdwg.mxu0
    %3810 = vmatpush.bf16.msra.mxu0 %v2449
    %3811 = vmatpush.bf16.msra.mxu0 %v2445
    %3812 = vmatpush.bf16.msra.mxu0 %v2441
    %3813 = vmatpush.bf16.msra.mxu0 %v2437
    %3814 = vmatpush.bf16.msra.mxu0 %v2433
    %3815 = vmatpush.bf16.msra.mxu0 %v2429
    %3816 = vmatpush.bf16.msra.mxu0 %v2425
    %3817 = vmatpush.bf16.msra.mxu0 %v2421
    %3818 = vmatmul.bf16.gmra.mxu0 %v172
    %v3819 = vpop.f32.mrf.mxu0
    %v3820 = vadd.f32 %v3806, %v3819
    %v3821 = vpop.f32.mrf.mxu0
    %v3822 = vadd.f32 %v3808, %v3821
    %3823 = vdwg.mxu0
    %3824 = vmatpush.bf16.msra.mxu0 %v2481
    %3825 = vmatpush.bf16.msra.mxu0 %v2477
    %3826 = vmatpush.bf16.msra.mxu0 %v2473
    %3827 = vmatpush.bf16.msra.mxu0 %v2469
    %3828 = vmatpush.bf16.msra.mxu0 %v2465
    %3829 = vmatpush.bf16.msra.mxu0 %v2461
    %3830 = vmatpush.bf16.msra.mxu0 %v2457
    %3831 = vmatpush.bf16.msra.mxu0 %v2453
    %3832 = vmatmul.bf16.gmra.mxu0 %v173
    %v3833 = vpop.f32.mrf.mxu0
    %v3834 = vadd.f32 %v3820, %v3833
    %v3835 = vpop.f32.mrf.mxu0
    %v3836 = vadd.f32 %v3822, %v3835
    %3837 = vdwg.mxu0
    %3838 = vmatpush.bf16.msra.mxu0 %v2513
    %3839 = vmatpush.bf16.msra.mxu0 %v2509
    %3840 = vmatpush.bf16.msra.mxu0 %v2505
    %3841 = vmatpush.bf16.msra.mxu0 %v2501
    %3842 = vmatpush.bf16.msra.mxu0 %v2497
    %3843 = vmatpush.bf16.msra.mxu0 %v2493
    %3844 = vmatpush.bf16.msra.mxu0 %v2489
    %3845 = vmatpush.bf16.msra.mxu0 %v2485
    %3846 = vmatmul.bf16.gmra.mxu0 %v174
    %v3847 = vpop.f32.mrf.mxu0
    %v3848 = vadd.f32 %v3834, %v3847
    %v3849 = vpop.f32.mrf.mxu0
    %v3850 = vadd.f32 %v3836, %v3849
    %3851 = vdwg.mxu0
    %3852 = vmatpush.bf16.msra.mxu0 0
    %3853 = vmatpush.bf16.msra.mxu0 0
    %3854 = vmatpush.bf16.msra.mxu0 %v3024
    %3855 = vmatpush.bf16.msra.mxu0 %v2533
    %3856 = vmatpush.bf16.msra.mxu0 %v2529
    %3857 = vmatpush.bf16.msra.mxu0 %v2525
    %3858 = vmatpush.bf16.msra.mxu0 %v2521
    %3859 = vmatpush.bf16.msra.mxu0 %v2517
    %3860 = vmatmul.bf16.gmra.mxu0 %v3008
    %v3861 = vpop.f32.mrf.mxu0
    %v3862 = vadd.f32 %v3848, %v3861
    %v3863 = vpop.f32.mrf.mxu0
    %v3864 = vadd.f32 %v3850, %v3863
    %3865 = vdwg.mxu0
    %v3866 = vmul.f32 %v3232, 0.2
    %v3867 = vmul.f32 %v3442, 0.2
    %v3868 = vmul.f32 %v3652, 0.2
    %v3869 = vmul.f32 %v3862, 0.2
    %v3870 = vmul.f32 %v3234, 0.2
    %v3871 = vmul.f32 %v3444, 0.2
    %v3872 = vmul.f32 %v3654, 0.2
    %v3873 = vmul.f32 %v3864, 0.2
    %v3874 = vmax.f32 %v3232, %v3866
    %v3875 = vmax.f32 %v3442, %v3867
    %v3876 = vmax.f32 %v3652, %v3868
    %v3877 = vmax.f32 %v3862, %v3869
    %v3878 = vmax.f32 %v3234, %v3870
    %v3879 = vmax.f32 %v3444, %v3871
    %v3880 = vmax.f32 %v3654, %v3872
    %v3881 = vmax.f32 %v3864, %v3873
    %v3882 = vpack.c.bf16 %v3878, %v3874
    %v3883 = vpack.c.bf16 %v3879, %v3875
    %v3884 = vpack.c.bf16 %v3880, %v3876
    %v3885 = vpack.c.bf16 %v3881, %v3877
    %v3886 = vld [vmem:[#allocation8] sm:$0xff]
    %v3887 = vld [vmem:[#allocation8 + $0x8] sm:$0xff]
    %v3888 = vld [vmem:[#allocation8 + $0x10] sm:$0xff]
    %v3889 = vld [vmem:[#allocation8 + $0x18] sm:$0xff]
    %v3890 = vld [vmem:[#allocation8 + $0x20] sm:$0xff]
    %v3891 = vld [vmem:[#allocation8 + $0x28] sm:$0xff]
    %v3892 = vld [vmem:[#allocation8 + $0x30] sm:$0xff]
    %v3893 = vld [vmem:[#allocation8 + $0x38] sm:$0xff]
    %v3894 = vld [vmem:[#allocation8 + $0x40] sm:$0xff]
    %v3895 = vld [vmem:[#allocation8 + $0x48] sm:$0xff]
    %v3896 = vld [vmem:[#allocation8 + $0x50] sm:$0xff]
    %v3897 = vld [vmem:[#allocation8 + $0x58] sm:$0xff]
    %v3898 = vld [vmem:[#allocation8 + $0x60] sm:$0xff]
    %v3899 = vld [vmem:[#allocation8 + $0x68] sm:$0xff]
    %v3900 = vld [vmem:[#allocation8 + $0x70] sm:$0xff]
    %v3901 = vld [vmem:[#allocation8 + $0x78] sm:$0xff]
    %v3902 = vld [vmem:[#allocation8 + $0x80] sm:$0xff]
    %v3903 = vld [vmem:[#allocation8 + $0x88] sm:$0xff]
    %v3904 = vld [vmem:[#allocation8 + $0x90] sm:$0xff]
    %v3905 = vld [vmem:[#allocation8 + $0x98] sm:$0xff]
    %v3906 = vld [vmem:[#allocation8 + $0xa0] sm:$0xff]
    %v3907 = vld [vmem:[#allocation8 + $0xa8] sm:$0xff]
    %v3908 = vld [vmem:[#allocation8 + $0xb0] sm:$0xff]
    %v3909 = vld [vmem:[#allocation8 + $0xb8] sm:$0xff]
    %v3910 = vld [vmem:[#allocation8 + $0xc0] sm:$0xff]
    %v3911 = vld [vmem:[#allocation8 + $0xc8] sm:$0xff]
    %v3912 = vld [vmem:[#allocation8 + $0xd0] sm:$0xff]
    %v3913 = vld [vmem:[#allocation8 + $0xd8] sm:$0xff]
    %v3914 = vld [vmem:[#allocation8 + $0xe0] sm:$0xff]
    %v3915 = vld [vmem:[#allocation8 + $0xe8] sm:$0xff]
    %v3916 = vld [vmem:[#allocation8 + $0xf0] sm:$0xff]
    %v3917 = vld [vmem:[#allocation8 + $0xf8] sm:$0xff]
    %v3918 = vld [vmem:[#allocation8 + $0x100] sm:$0xff]
    %v3919 = vld [vmem:[#allocation8 + $0x108] sm:$0xff]
    %v3920 = vld [vmem:[#allocation8 + $0x110] sm:$0xff]
    %v3921 = vld [vmem:[#allocation8 + $0x118] sm:$0xff]
    %v3922 = vld [vmem:[#allocation8 + $0x120] sm:$0xff]
    %v3923 = vld [vmem:[#allocation8 + $0x128] sm:$0xff]
    %v3924 = vld [vmem:[#allocation8 + $0x130] sm:$0xff]
    %v3925 = vld [vmem:[#allocation8 + $0x138] sm:$0xff]
    %v3926 = vld [vmem:[#allocation8 + $0x140] sm:$0xff]
    %v3927 = vld [vmem:[#allocation8 + $0x148] sm:$0xff]
    %v3928 = vld [vmem:[#allocation8 + $0x150] sm:$0xff]
    %v3929 = vld [vmem:[#allocation8 + $0x158] sm:$0xff]
    %v3930 = vld [vmem:[#allocation8 + $0x160] sm:$0xff]
    %v3931 = vld [vmem:[#allocation8 + $0x168] sm:$0xff]
    %v3932 = vld [vmem:[#allocation8 + $0x170] sm:$0xff]
    %v3933 = vld [vmem:[#allocation8 + $0x178] sm:$0xff]
    %v3934 = vld [vmem:[#allocation8 + $0x180] sm:$0xff]
    %v3935 = vld [vmem:[#allocation8 + $0x188] sm:$0xff]
    %v3936 = vld [vmem:[#allocation8 + $0x190] sm:$0xff]
    %v3937 = vld [vmem:[#allocation8 + $0x198] sm:$0xff]
    %v3938 = vld [vmem:[#allocation8 + $0x1a0] sm:$0xff]
    %v3939 = vld [vmem:[#allocation8 + $0x1a8] sm:$0xff]
    %v3940 = vld [vmem:[#allocation8 + $0x1b0] sm:$0xff]
    %v3941 = vld [vmem:[#allocation8 + $0x1b8] sm:$0xff]
    %v3942 = vld [vmem:[#allocation8 + $0x1c0] sm:$0xff]
    %v3943 = vld [vmem:[#allocation8 + $0x1c8] sm:$0xff]
    %v3944 = vld [vmem:[#allocation8 + $0x1d0] sm:$0xff]
    %v3945 = vld [vmem:[#allocation8 + $0x1d8] sm:$0xff]
    %v3946 = vld [vmem:[#allocation8 + $0x1e0] sm:$0xff]
    %v3947 = vld [vmem:[#allocation8 + $0x1e8] sm:$0xff]
    %v3948 = vld [vmem:[#allocation8 + $0x1f0] sm:$0xff]
    %v3949 = vld [vmem:[#allocation8 + $0x1f8] sm:$0xff]
    %v3950 = vld [vmem:[#allocation10] sm:$0x3]
    %v3952 = vperm.slane %v3950, 0
    %v3953 = vperm.slane %v3950, 1
    %v4020 = vunpack.c.l.b16 %v3886
    %v4021 = vunpack.c.h.b16 %v3886
    %v4022 = vunpack.c.l.b16 %v3887
    %v4023 = vunpack.c.h.b16 %v3887
    %v4024 = vunpack.c.l.b16 %v3888
    %v4025 = vunpack.c.h.b16 %v3888
    %v4026 = vunpack.c.l.b16 %v3889
    %v4027 = vunpack.c.h.b16 %v3889
    %v4028 = vunpack.c.l.b16 %v3890
    %v4029 = vunpack.c.h.b16 %v3890
    %v4030 = vunpack.c.l.b16 %v3891
    %v4031 = vunpack.c.h.b16 %v3891
    %v4032 = vunpack.c.l.b16 %v3892
    %v4033 = vunpack.c.h.b16 %v3892
    %v4034 = vunpack.c.l.b16 %v3893
    %v4035 = vunpack.c.h.b16 %v3893
    %v4036 = vunpack.c.l.b16 %v3894
    %v4037 = vunpack.c.h.b16 %v3894
    %v4038 = vunpack.c.l.b16 %v3895
    %v4039 = vunpack.c.h.b16 %v3895
    %v4040 = vunpack.c.l.b16 %v3896
    %v4041 = vunpack.c.h.b16 %v3896
    %v4042 = vunpack.c.l.b16 %v3897
    %v4043 = vunpack.c.h.b16 %v3897
    %v4044 = vunpack.c.l.b16 %v3898
    %v4045 = vunpack.c.h.b16 %v3898
    %v4046 = vunpack.c.l.b16 %v3899
    %v4047 = vunpack.c.h.b16 %v3899
    %v4048 = vunpack.c.l.b16 %v3900
    %v4049 = vunpack.c.h.b16 %v3900
    %v4050 = vunpack.c.l.b16 %v3901
    %v4051 = vunpack.c.h.b16 %v3901
    %v4052 = vunpack.c.l.b16 %v3902
    %v4053 = vunpack.c.h.b16 %v3902
    %v4054 = vunpack.c.l.b16 %v3903
    %v4055 = vunpack.c.h.b16 %v3903
    %v4056 = vunpack.c.l.b16 %v3904
    %v4057 = vunpack.c.h.b16 %v3904
    %v4058 = vunpack.c.l.b16 %v3905
    %v4059 = vunpack.c.h.b16 %v3905
    %v4060 = vunpack.c.l.b16 %v3906
    %v4061 = vunpack.c.h.b16 %v3906
    %v4062 = vunpack.c.l.b16 %v3907
    %v4063 = vunpack.c.h.b16 %v3907
    %v4064 = vunpack.c.l.b16 %v3908
    %v4065 = vunpack.c.h.b16 %v3908
    %v4066 = vunpack.c.l.b16 %v3909
    %v4067 = vunpack.c.h.b16 %v3909
    %v4068 = vunpack.c.l.b16 %v3910
    %v4069 = vunpack.c.h.b16 %v3910
    %v4070 = vunpack.c.l.b16 %v3911
    %v4071 = vunpack.c.h.b16 %v3911
    %v4072 = vunpack.c.l.b16 %v3912
    %v4073 = vunpack.c.h.b16 %v3912
    %v4074 = vunpack.c.l.b16 %v3913
    %v4075 = vunpack.c.h.b16 %v3913
    %v4076 = vunpack.c.l.b16 %v3914
    %v4077 = vunpack.c.h.b16 %v3914
    %v4078 = vunpack.c.l.b16 %v3915
    %v4079 = vunpack.c.h.b16 %v3915
    %v4080 = vunpack.c.l.b16 %v3916
    %v4081 = vunpack.c.h.b16 %v3916
    %v4082 = vunpack.c.l.b16 %v3917
    %v4083 = vunpack.c.h.b16 %v3917
    %v4084 = vunpack.c.l.b16 %v3918
    %v4085 = vunpack.c.h.b16 %v3918
    %v4086 = vunpack.c.l.b16 %v3919
    %v4087 = vunpack.c.h.b16 %v3919
    %v4088 = vunpack.c.l.b16 %v3920
    %v4089 = vunpack.c.h.b16 %v3920
    %v4090 = vunpack.c.l.b16 %v3921
    %v4091 = vunpack.c.h.b16 %v3921
    %v4092 = vunpack.c.l.b16 %v3922
    %v4093 = vunpack.c.h.b16 %v3922
    %v4094 = vunpack.c.l.b16 %v3923
    %v4095 = vunpack.c.h.b16 %v3923
    %v4096 = vunpack.c.l.b16 %v3924
    %v4097 = vunpack.c.h.b16 %v3924
    %v4098 = vunpack.c.l.b16 %v3925
    %v4099 = vunpack.c.h.b16 %v3925
    %v4100 = vunpack.c.l.b16 %v3926
    %v4101 = vunpack.c.h.b16 %v3926
    %v4102 = vunpack.c.l.b16 %v3927
    %v4103 = vunpack.c.h.b16 %v3927
    %v4104 = vunpack.c.l.b16 %v3928
    %v4105 = vunpack.c.h.b16 %v3928
    %v4106 = vunpack.c.l.b16 %v3929
    %v4107 = vunpack.c.h.b16 %v3929
    %v4108 = vunpack.c.l.b16 %v3930
    %v4109 = vunpack.c.h.b16 %v3930
    %v4110 = vunpack.c.l.b16 %v3931
    %v4111 = vunpack.c.h.b16 %v3931
    %v4112 = vunpack.c.l.b16 %v3932
    %v4113 = vunpack.c.h.b16 %v3932
    %v4114 = vunpack.c.l.b16 %v3933
    %v4115 = vunpack.c.h.b16 %v3933
    %v4116 = vunpack.c.l.b16 %v3934
    %v4117 = vunpack.c.h.b16 %v3934
    %v4118 = vunpack.c.l.b16 %v3935
    %v4119 = vunpack.c.h.b16 %v3935
    %v4120 = vunpack.c.l.b16 %v3936
    %v4121 = vunpack.c.h.b16 %v3936
    %v4122 = vunpack.c.l.b16 %v3937
    %v4123 = vunpack.c.h.b16 %v3937
    %v4124 = vunpack.c.l.b16 %v3938
    %v4125 = vunpack.c.h.b16 %v3938
    %v4126 = vunpack.c.l.b16 %v3939
    %v4127 = vunpack.c.h.b16 %v3939
    %v4128 = vunpack.c.l.b16 %v3940
    %v4129 = vunpack.c.h.b16 %v3940
    %v4130 = vunpack.c.l.b16 %v3941
    %v4131 = vunpack.c.h.b16 %v3941
    %v4132 = vunpack.c.l.b16 %v3942
    %v4133 = vunpack.c.h.b16 %v3942
    %v4134 = vunpack.c.l.b16 %v3943
    %v4135 = vunpack.c.h.b16 %v3943
    %v4136 = vunpack.c.l.b16 %v3944
    %v4137 = vunpack.c.h.b16 %v3944
    %v4138 = vunpack.c.l.b16 %v3945
    %v4139 = vunpack.c.h.b16 %v3945
    %v4140 = vunpack.c.l.b16 %v3946
    %v4141 = vunpack.c.h.b16 %v3946
    %v4142 = vunpack.c.l.b16 %v3947
    %v4143 = vunpack.c.h.b16 %v3947
    %v4144 = vunpack.c.l.b16 %v3948
    %v4145 = vunpack.c.h.b16 %v3948
    %v4146 = vunpack.c.l.b16 %v3949
    %v4147 = vunpack.c.h.b16 %v3949
    %v4148 = vpack.c.b16 %v4022, %v4020
    %v4149 = vpack.c.b16 %v4023, %v4021
    %v4150 = vpack.c.b16 %v4026, %v4024
    %v4151 = vpack.c.b16 %v4027, %v4025
    %v4152 = vpack.c.b16 %v4030, %v4028
    %v4153 = vpack.c.b16 %v4031, %v4029
    %v4154 = vpack.c.b16 %v4034, %v4032
    %v4155 = vpack.c.b16 %v4035, %v4033
    %v4156 = vpack.c.b16 %v4038, %v4036
    %v4157 = vpack.c.b16 %v4039, %v4037
    %v4158 = vpack.c.b16 %v4042, %v4040
    %v4159 = vpack.c.b16 %v4043, %v4041
    %v4160 = vpack.c.b16 %v4046, %v4044
    %v4161 = vpack.c.b16 %v4047, %v4045
    %v4162 = vpack.c.b16 %v4050, %v4048
    %v4163 = vpack.c.b16 %v4051, %v4049
    %v4164 = vpack.c.b16 %v4054, %v4052
    %v4165 = vpack.c.b16 %v4055, %v4053
    %v4166 = vpack.c.b16 %v4058, %v4056
    %v4167 = vpack.c.b16 %v4059, %v4057
    %v4168 = vpack.c.b16 %v4062, %v4060
    %v4169 = vpack.c.b16 %v4063, %v4061
    %v4170 = vpack.c.b16 %v4066, %v4064
    %v4171 = vpack.c.b16 %v4067, %v4065
    %v4172 = vpack.c.b16 %v4070, %v4068
    %v4173 = vpack.c.b16 %v4071, %v4069
    %v4174 = vpack.c.b16 %v4074, %v4072
    %v4175 = vpack.c.b16 %v4075, %v4073
    %v4176 = vpack.c.b16 %v4078, %v4076
    %v4177 = vpack.c.b16 %v4079, %v4077
    %v4178 = vpack.c.b16 %v4082, %v4080
    %v4179 = vpack.c.b16 %v4083, %v4081
    %v4180 = vpack.c.b16 %v4086, %v4084
    %v4181 = vpack.c.b16 %v4087, %v4085
    %v4182 = vpack.c.b16 %v4090, %v4088
    %v4183 = vpack.c.b16 %v4091, %v4089
    %v4184 = vpack.c.b16 %v4094, %v4092
    %v4185 = vpack.c.b16 %v4095, %v4093
    %v4186 = vpack.c.b16 %v4098, %v4096
    %v4187 = vpack.c.b16 %v4099, %v4097
    %v4188 = vpack.c.b16 %v4102, %v4100
    %v4189 = vpack.c.b16 %v4103, %v4101
    %v4190 = vpack.c.b16 %v4106, %v4104
    %v4191 = vpack.c.b16 %v4107, %v4105
    %v4192 = vpack.c.b16 %v4110, %v4108
    %v4193 = vpack.c.b16 %v4111, %v4109
    %v4194 = vpack.c.b16 %v4114, %v4112
    %v4195 = vpack.c.b16 %v4115, %v4113
    %v4196 = vpack.c.b16 %v4118, %v4116
    %v4197 = vpack.c.b16 %v4119, %v4117
    %v4198 = vpack.c.b16 %v4122, %v4120
    %v4199 = vpack.c.b16 %v4123, %v4121
    %v4200 = vpack.c.b16 %v4126, %v4124
    %v4201 = vpack.c.b16 %v4127, %v4125
    %v4202 = vpack.c.b16 %v4130, %v4128
    %v4203 = vpack.c.b16 %v4131, %v4129
    %v4204 = vpack.c.b16 %v4134, %v4132
    %v4205 = vpack.c.b16 %v4135, %v4133
    %v4206 = vpack.c.b16 %v4138, %v4136
    %v4207 = vpack.c.b16 %v4139, %v4137
    %v4208 = vpack.c.b16 %v4142, %v4140
    %v4209 = vpack.c.b16 %v4143, %v4141
    %v4210 = vpack.c.b16 %v4146, %v4144
    %v4211 = vpack.c.b16 %v4147, %v4145
    %4276 = vmatpush.bf16.msra.mxu0 %v4162
    %4277 = vmatpush.bf16.msra.mxu0 %v4160
    %4278 = vmatpush.bf16.msra.mxu0 %v4158
    %4279 = vmatpush.bf16.msra.mxu0 %v4156
    %4280 = vmatpush.bf16.msra.mxu0 %v4154
    %4281 = vmatpush.bf16.msra.mxu0 %v4152
    %4282 = vmatpush.bf16.msra.mxu0 %v4150
    %4283 = vmatpush.bf16.msra.mxu0 %v4148
    %4284 = vmatmul.bf16.gmra.mxu0 %v3882
    %v4285 = vpop.f32.mrf.mxu0
    %v4286 = vadd.f32 %v3952, %v4285
    %v4287 = vpop.f32.mrf.mxu0
    %v4288 = vadd.f32 %v3952, %v4287
    %4289 = vdwg.mxu0
    %4290 = vmatpush.bf16.msra.mxu0 %v4178
    %4291 = vmatpush.bf16.msra.mxu0 %v4176
    %4292 = vmatpush.bf16.msra.mxu0 %v4174
    %4293 = vmatpush.bf16.msra.mxu0 %v4172
    %4294 = vmatpush.bf16.msra.mxu0 %v4170
    %4295 = vmatpush.bf16.msra.mxu0 %v4168
    %4296 = vmatpush.bf16.msra.mxu0 %v4166
    %4297 = vmatpush.bf16.msra.mxu0 %v4164
    %4298 = vmatmul.bf16.gmra.mxu0 %v3883
    %v4299 = vpop.f32.mrf.mxu0
    %v4300 = vadd.f32 %v4286, %v4299
    %v4301 = vpop.f32.mrf.mxu0
    %v4302 = vadd.f32 %v4288, %v4301
    %4303 = vdwg.mxu0
    %4304 = vmatpush.bf16.msra.mxu0 %v4194
    %4305 = vmatpush.bf16.msra.mxu0 %v4192
    %4306 = vmatpush.bf16.msra.mxu0 %v4190
    %4307 = vmatpush.bf16.msra.mxu0 %v4188
    %4308 = vmatpush.bf16.msra.mxu0 %v4186
    %4309 = vmatpush.bf16.msra.mxu0 %v4184
    %4310 = vmatpush.bf16.msra.mxu0 %v4182
    %4311 = vmatpush.bf16.msra.mxu0 %v4180
    %4312 = vmatmul.bf16.gmra.mxu0 %v3884
    %v4313 = vpop.f32.mrf.mxu0
    %v4314 = vadd.f32 %v4300, %v4313
    %v4315 = vpop.f32.mrf.mxu0
    %v4316 = vadd.f32 %v4302, %v4315
    %4317 = vdwg.mxu0
    %4318 = vmatpush.bf16.msra.mxu0 %v4210
    %4319 = vmatpush.bf16.msra.mxu0 %v4208
    %4320 = vmatpush.bf16.msra.mxu0 %v4206
    %4321 = vmatpush.bf16.msra.mxu0 %v4204
    %4322 = vmatpush.bf16.msra.mxu0 %v4202
    %4323 = vmatpush.bf16.msra.mxu0 %v4200
    %4324 = vmatpush.bf16.msra.mxu0 %v4198
    %4325 = vmatpush.bf16.msra.mxu0 %v4196
    %4326 = vmatmul.bf16.gmra.mxu0 %v3885
    %v4327 = vpop.f32.mrf.mxu0
    %v4328 = vadd.f32 %v4314, %v4327
    %v4329 = vpop.f32.mrf.mxu0
    %v4330 = vadd.f32 %v4316, %v4329
    %4331 = vdwg.mxu0
    %4332 = vmatpush.bf16.msra.mxu0 %v4163
    %4333 = vmatpush.bf16.msra.mxu0 %v4161
    %4334 = vmatpush.bf16.msra.mxu0 %v4159
    %4335 = vmatpush.bf16.msra.mxu0 %v4157
    %4336 = vmatpush.bf16.msra.mxu0 %v4155
    %4337 = vmatpush.bf16.msra.mxu0 %v4153
    %4338 = vmatpush.bf16.msra.mxu0 %v4151
    %4339 = vmatpush.bf16.msra.mxu0 %v4149
    %4340 = vmatmul.bf16.gmra.mxu0 %v3882
    %v4341 = vpop.f32.mrf.mxu0
    %v4342 = vadd.f32 %v3953, %v4341
    %v4343 = vpop.f32.mrf.mxu0
    %v4344 = vadd.f32 %v3953, %v4343
    %4345 = vdwg.mxu0
    %4346 = vmatpush.bf16.msra.mxu0 %v4179
    %4347 = vmatpush.bf16.msra.mxu0 %v4177
    %4348 = vmatpush.bf16.msra.mxu0 %v4175
    %4349 = vmatpush.bf16.msra.mxu0 %v4173
    %4350 = vmatpush.bf16.msra.mxu0 %v4171
    %4351 = vmatpush.bf16.msra.mxu0 %v4169
    %4352 = vmatpush.bf16.msra.mxu0 %v4167
    %4353 = vmatpush.bf16.msra.mxu0 %v4165
    %4354 = vmatmul.bf16.gmra.mxu0 %v3883
    %v4355 = vpop.f32.mrf.mxu0
    %v4356 = vadd.f32 %v4342, %v4355
    %v4357 = vpop.f32.mrf.mxu0
    %v4358 = vadd.f32 %v4344, %v4357
    %4359 = vdwg.mxu0
    %4360 = vmatpush.bf16.msra.mxu0 %v4195
    %4361 = vmatpush.bf16.msra.mxu0 %v4193
    %4362 = vmatpush.bf16.msra.mxu0 %v4191
    %4363 = vmatpush.bf16.msra.mxu0 %v4189
    %4364 = vmatpush.bf16.msra.mxu0 %v4187
    %4365 = vmatpush.bf16.msra.mxu0 %v4185
    %4366 = vmatpush.bf16.msra.mxu0 %v4183
    %4367 = vmatpush.bf16.msra.mxu0 %v4181
    %4368 = vmatmul.bf16.gmra.mxu0 %v3884
    %v4369 = vpop.f32.mrf.mxu0
    %v4370 = vadd.f32 %v4356, %v4369
    %v4371 = vpop.f32.mrf.mxu0
    %v4372 = vadd.f32 %v4358, %v4371
    %4373 = vdwg.mxu0
    %4374 = vmatpush.bf16.msra.mxu0 %v4211
    %4375 = vmatpush.bf16.msra.mxu0 %v4209
    %4376 = vmatpush.bf16.msra.mxu0 %v4207
    %4377 = vmatpush.bf16.msra.mxu0 %v4205
    %4378 = vmatpush.bf16.msra.mxu0 %v4203
    %4379 = vmatpush.bf16.msra.mxu0 %v4201
    %4380 = vmatpush.bf16.msra.mxu0 %v4199
    %4381 = vmatpush.bf16.msra.mxu0 %v4197
    %4382 = vmatmul.bf16.gmra.mxu0 %v3885
    %v4383 = vpop.f32.mrf.mxu0
    %v4384 = vadd.f32 %v4370, %v4383
    %v4385 = vpop.f32.mrf.mxu0
    %v4386 = vadd.f32 %v4372, %v4385
    %4387 = vdwg.mxu0
    %v4388 = vmul.f32 %v4328, 0.2
    %v4389 = vmul.f32 %v4384, 0.2
    %v4390 = vmul.f32 %v4330, 0.2
    %v4391 = vmul.f32 %v4386, 0.2
    %v4392 = vmax.f32 %v4328, %v4388
    %v4393 = vmax.f32 %v4384, %v4389
    %v4394 = vmax.f32 %v4330, %v4390
    %v4395 = vmax.f32 %v4386, %v4391
    %v4396 = vpack.c.bf16 %v4394, %v4392
    %v4397 = vpack.c.bf16 %v4395, %v4393
    %v4398 = vld [vmem:[#allocation11] sm:$0xf]
    %v4399 = vld [vmem:[#allocation11 + $0x4] sm:$0xf]
    %v4400 = vld [vmem:[#allocation11 + $0x8] sm:$0xf]
    %v4401 = vld [vmem:[#allocation11 + $0xc] sm:$0xf]
    %v4402 = vld [vmem:[#allocation11 + $0x10] sm:$0xf]
    %v4403 = vld [vmem:[#allocation11 + $0x14] sm:$0xf]
    %v4404 = vld [vmem:[#allocation11 + $0x18] sm:$0xf]
    %v4405 = vld [vmem:[#allocation11 + $0x1c] sm:$0xf]
    %v4406 = vld [vmem:[#allocation11 + $0x20] sm:$0xf]
    %v4407 = vld [vmem:[#allocation11 + $0x24] sm:$0xf]
    %v4408 = vld [vmem:[#allocation11 + $0x28] sm:$0xf]
    %v4409 = vld [vmem:[#allocation11 + $0x2c] sm:$0xf]
    %v4410 = vld [vmem:[#allocation11 + $0x30] sm:$0xf]
    %v4411 = vld [vmem:[#allocation11 + $0x34] sm:$0xf]
    %v4412 = vld [vmem:[#allocation11 + $0x38] sm:$0xf]
    %v4413 = vld [vmem:[#allocation11 + $0x3c] sm:$0xf]
    %v4414 = vld [vmem:[#allocation11 + $0x40] sm:$0xf]
    %v4415 = vld [vmem:[#allocation11 + $0x44] sm:$0xf]
    %v4416 = vld [vmem:[#allocation11 + $0x48] sm:$0xf]
    %v4417 = vld [vmem:[#allocation11 + $0x4c] sm:$0xf]
    %v4418 = vld [vmem:[#allocation11 + $0x50] sm:$0xf]
    %v4419 = vld [vmem:[#allocation11 + $0x54] sm:$0xf]
    %v4420 = vld [vmem:[#allocation11 + $0x58] sm:$0xf]
    %v4421 = vld [vmem:[#allocation11 + $0x5c] sm:$0xf]
    %v4422 = vld [vmem:[#allocation11 + $0x60] sm:$0xf]
    %v4423 = vld [vmem:[#allocation11 + $0x64] sm:$0xf]
    %v4424 = vld [vmem:[#allocation11 + $0x68] sm:$0xf]
    %v4425 = vld [vmem:[#allocation11 + $0x6c] sm:$0xf]
    %v4426 = vld [vmem:[#allocation11 + $0x70] sm:$0xf]
    %v4427 = vld [vmem:[#allocation11 + $0x74] sm:$0xf]
    %v4428 = vld [vmem:[#allocation11 + $0x78] sm:$0xf]
    %v4429 = vld [vmem:[#allocation11 + $0x7c] sm:$0xf]
    %v4430 = vld [vmem:[#allocation13] sm:$0x1]
    %v4432 = vperm.slane %v4430, 0
    %v4466 = vunpack.c.l.b16 %v4398
    %v4467 = vunpack.c.l.b16 %v4399
    %v4468 = vunpack.c.l.b16 %v4400
    %v4469 = vunpack.c.l.b16 %v4401
    %v4470 = vunpack.c.l.b16 %v4402
    %v4471 = vunpack.c.l.b16 %v4403
    %v4472 = vunpack.c.l.b16 %v4404
    %v4473 = vunpack.c.l.b16 %v4405
    %v4474 = vunpack.c.l.b16 %v4406
    %v4475 = vunpack.c.l.b16 %v4407
    %v4476 = vunpack.c.l.b16 %v4408
    %v4477 = vunpack.c.l.b16 %v4409
    %v4478 = vunpack.c.l.b16 %v4410
    %v4479 = vunpack.c.l.b16 %v4411
    %v4480 = vunpack.c.l.b16 %v4412
    %v4481 = vunpack.c.l.b16 %v4413
    %v4482 = vunpack.c.l.b16 %v4414
    %v4483 = vunpack.c.l.b16 %v4415
    %v4484 = vunpack.c.l.b16 %v4416
    %v4485 = vunpack.c.l.b16 %v4417
    %v4486 = vunpack.c.l.b16 %v4418
    %v4487 = vunpack.c.l.b16 %v4419
    %v4488 = vunpack.c.l.b16 %v4420
    %v4489 = vunpack.c.l.b16 %v4421
    %v4490 = vunpack.c.l.b16 %v4422
    %v4491 = vunpack.c.l.b16 %v4423
    %v4492 = vunpack.c.l.b16 %v4424
    %v4493 = vunpack.c.l.b16 %v4425
    %v4494 = vunpack.c.l.b16 %v4426
    %v4495 = vunpack.c.l.b16 %v4427
    %v4496 = vunpack.c.l.b16 %v4428
    %v4497 = vunpack.c.l.b16 %v4429
    %v4498 = vpack.c.b16 %v4467, %v4466
    %v4499 = vpack.c.b16 %v4469, %v4468
    %v4500 = vpack.c.b16 %v4471, %v4470
    %v4501 = vpack.c.b16 %v4473, %v4472
    %v4502 = vpack.c.b16 %v4475, %v4474
    %v4503 = vpack.c.b16 %v4477, %v4476
    %v4504 = vpack.c.b16 %v4479, %v4478
    %v4505 = vpack.c.b16 %v4481, %v4480
    %v4506 = vpack.c.b16 %v4483, %v4482
    %v4507 = vpack.c.b16 %v4485, %v4484
    %v4508 = vpack.c.b16 %v4487, %v4486
    %v4509 = vpack.c.b16 %v4489, %v4488
    %v4510 = vpack.c.b16 %v4491, %v4490
    %v4511 = vpack.c.b16 %v4493, %v4492
    %v4512 = vpack.c.b16 %v4495, %v4494
    %v4513 = vpack.c.b16 %v4497, %v4496
    %4530 = vmatpush.bf16.msra.mxu0 %v4505
    %4531 = vmatpush.bf16.msra.mxu0 %v4504
    %4532 = vmatpush.bf16.msra.mxu0 %v4503
    %4533 = vmatpush.bf16.msra.mxu0 %v4502
    %4534 = vmatpush.bf16.msra.mxu0 %v4501
    %4535 = vmatpush.bf16.msra.mxu0 %v4500
    %4536 = vmatpush.bf16.msra.mxu0 %v4499
    %4537 = vmatpush.bf16.msra.mxu0 %v4498
    %4538 = vmatmul.bf16.gmra.mxu0 %v4396
    %v4539 = vpop.f32.mrf.mxu0
    %v4540 = vadd.f32 %v4432, %v4539
    %v4541 = vpop.f32.mrf.mxu0
    %v4542 = vadd.f32 %v4432, %v4541
    %4543 = vdwg.mxu0
    %4544 = vmatpush.bf16.msra.mxu0 %v4513
    %4545 = vmatpush.bf16.msra.mxu0 %v4512
    %4546 = vmatpush.bf16.msra.mxu0 %v4511
    %4547 = vmatpush.bf16.msra.mxu0 %v4510
    %4548 = vmatpush.bf16.msra.mxu0 %v4509
    %4549 = vmatpush.bf16.msra.mxu0 %v4508
    %4550 = vmatpush.bf16.msra.mxu0 %v4507
    %4551 = vmatpush.bf16.msra.mxu0 %v4506
    %4552 = vmatmul.bf16.gmra.mxu0 %v4397
    %v4553 = vpop.f32.mrf.mxu0
    %v4554 = vadd.f32 %v4540, %v4553
    %v4555 = vpop.f32.mrf.mxu0
    %v4556 = vadd.f32 %v4542, %v4555
    %4557 = vdwg.mxu0
    %v4558 = vpack.c.bf16 %v4554, %v4554
    %v4559 = vpack.c.bf16 %v4556, %v4556
    %4560 = vst [vmem:[#allocation14] sm:$0xf] %v4558
    %4561 = vst [vmem:[#allocation14 + $0x4] sm:$0xf] %v4559
    // Predicated region
    $region58: #{tpu_custom_call.1} parent=1 // pred_check
      _
    $region59: #{tpu_custom_call.1} parent=1 // pred_check_branch
      %4563 = sbr.rel (0) target = $region61
    $region60: #{tpu_custom_call.1} parent=1 // pred_region
      %4565 = vsyncadd [#allocation4], 0
      %s4566 = sshll.u32 [#allocation14], 4
      %s4567 = int_to_ptr.vmem [resolvable:$true] %s4566
      %s4568 = sshll.u32 %s7, 4
      %s4569 = int_to_ptr.hbm [resolvable:$true] %s4568
      %4574 = dma.vmem_to_hbm [thread:$0]  %s4567, 128, %s4569, [#allocation4], 64, 64, 4
    $region61: #{tpu_custom_call.1} parent=1 // pred_fallthru
      _
    // Predicated region
    $region62: #{tpu_custom_call.1} parent=1 // pred_check
      _
    $region63: #{tpu_custom_call.1} parent=1 // pred_check_branch
      %4576 = sbr.rel (0) target = $region65
    $region64: #{tpu_custom_call.1} parent=1 // pred_region
      %4578 = dma.done [#allocation4], 128
    $region65: #{tpu_custom_call.1} parent=1 // pred_fallthru
      _
    %4579 = vsyncpa [#allocation3], 1
    %4580 = vsyncpa [#allocation6], 1
    %4581 = vsyncpa [#allocation9], 1
    %4582 = vsyncpa [#allocation12], 1
    %4583 = vsyncpa [#allocation4], 1

</llo_original>
